<compile_context>
chip_gen: v7x
topology: tpu7x:2x2x1
jax: 0.10.0
libtpu: 0.0.40
codegen_flags: <defaults>
</compile_context>

<pallas_src>
import jax
import jax.numpy as jnp
from jax.experimental import pallas as pl
from jax.experimental.pallas import tpu as pltpu

IN_FEATURES = 4 * 4 * 512   # 8192
HIDDEN = 256
OUT_FEATURES = 1
TM_MAX = 256                # batch rows per grid step (review: 256-512)


def catdog_mlp_kernel(x_ref, w1_ref, b1_ref, w2_ref, b2_ref, o_ref):
    # Cast x to bf16 on the VPU (in-kernel) so the layer-1 matmul runs the
    # bf16 MXU path; accumulation stays f32. Avoids any wrapper-side cast op.
    x = x_ref[...].astype(jnp.bfloat16)
    h = jnp.dot(x, w1_ref[...], preferred_element_type=jnp.float32)
    h = jnp.maximum(h + b1_ref[...], 0.0)          # bias + ReLU in f32
    # Dropout(0.5): identity at inference/eval time (no-op here).
    # Layer 2 (N=1): VPU multiply + lane reduction instead of a 1-lane matmul.
    z = jnp.sum(h * w2_ref[...], axis=-1, keepdims=True) + b2_ref[...]
    # Exact sigmoid: exp on the EUP; the extra precise divide is free here and
    # guarantees outputs in [0, 1].
    o_ref[...] = 1.0 / (1.0 + jnp.exp(-z))


def prepare_params(w1, b1, w2, b2):
    """One-time parameter preparation (call ONCE, outside the per-forward path).

    Stores w1 in bf16 (halves the dominant HBM stream) and lays out the small
    vectors as f32 rows for broadcasting inside the kernel.
    """
    return (
        w1.astype(jnp.bfloat16),                           # (8192, 256) bf16
        b1.reshape(1, HIDDEN).astype(jnp.float32),         # (1, 256)
        w2.reshape(1, HIDDEN).astype(jnp.float32),         # (256, 1) -> (1, 256)
        b2.reshape(1, OUT_FEATURES).astype(jnp.float32),   # (1, 1)
    )


def catdog_forward(x_nchw, prepared_params):
    """x_nchw: (B, 512, 4, 4) float32. Returns (B, 1) float32 in [0, 1]."""
    w1_bf16, b1_row, w2_row, b2_11 = prepared_params
    B = x_nchw.shape[0]
    # nn.Flatten on NCHW: (B, C, H, W) -> (B, C*H*W); row-major == PyTorch order.
    # Pure metadata reshape -- no wrapper-side casts or copies on the hot path.
    x_flat = x_nchw.reshape(B, IN_FEATURES)

    tm = B if B <= TM_MAX else TM_MAX
    grid = (pl.cdiv(B, tm),)
    # Note: if B % tm != 0 the padded rows of the last tile compute garbage,
    # but Pallas masks the partial output write, so results stay correct.

    cost = pl.CostEstimate(
        flops=2 * B * IN_FEATURES * HIDDEN + 2 * B * HIDDEN,
        transcendentals=B,
        bytes_accessed=(
            x_flat.size * 4                  # f32 x stream
            + w1_bf16.size * 2               # bf16 resident weight (read once)
            + (b1_row.size + w2_row.size + b2_11.size) * 4
            + B * OUT_FEATURES * 4
        ),
    )

    resident = pl.Buffered(1)  # constant index_map -> single-buffer, save VMEM

    return pl.pallas_call(
        catdog_mlp_kernel,
        out_shape=jax.ShapeDtypeStruct((B, OUT_FEATURES), jnp.float32),
        grid_spec=pltpu.PrefetchScalarGridSpec(
            num_scalar_prefetch=0,
            grid=grid,
            in_specs=[
                # x: f32, tiled over batch (double-buffered by default).
                pl.BlockSpec((tm, IN_FEATURES), lambda i: (i, 0)),
                # w1: constant block index -> loaded once, stays resident in
                # VMEM across batch tiles; single-buffered.
                pl.BlockSpec((IN_FEATURES, HIDDEN), lambda i: (0, 0),
                             pipeline_mode=resident),
                pl.BlockSpec((1, HIDDEN), lambda i: (0, 0),
                             pipeline_mode=resident),        # b1
                pl.BlockSpec((1, HIDDEN), lambda i: (0, 0),
                             pipeline_mode=resident),        # w2 (row)
                pl.BlockSpec((1, OUT_FEATURES), lambda i: (0, 0),
                             pipeline_mode=resident),        # b2
            ],
            # NOTE(perf review): a lane-dense (1, B) output would avoid masked
            # vst.msk stores but needs an in-kernel XLU transpose of the
            # (tm, 1) result; skipped since the store is a few bytes per tile.
            out_specs=pl.BlockSpec((tm, OUT_FEATURES), lambda i: (i, 0)),
        ),
        compiler_params=pltpu.CompilerParams(
            # Batch tiles are independent. With tm >= 256 the grid only has
            # >1 step when B > 256, where per-tile x traffic (>= 8 MiB) already
            # dominates the 4 MiB w1 stream, so 2-TC sharding on v7x is a win
            # (and at small B the grid is size 1, so nothing is duplicated).
            dimension_semantics=("parallel",),
            # ~20 MiB actually needed at tm=256 (16 MiB x double-buffer +
            # 4 MiB single-buffered w1); 40 MiB leaves headroom and still fits
            # v7x's 64 MiB physical VMEM.
            vmem_limit_bytes=40 << 20,
        ),
        cost_estimate=cost,
    )(x_flat, w1_bf16, b1_row, w2_row, b2_11)


def init_params(key):
    """Deterministic f32 parameter init matching the PyTorch layer shapes."""
    k1, k2, k3, k4 = jax.random.split(key, 4)
    lim1 = 1.0 / jnp.sqrt(float(IN_FEATURES))
    lim2 = 1.0 / jnp.sqrt(float(HIDDEN))
    w1 = jax.random.uniform(k1, (IN_FEATURES, HIDDEN), jnp.float32, -lim1, lim1)
    b1 = jax.random.uniform(k2, (HIDDEN,), jnp.float32, -lim1, lim1)
    w2 = jax.random.uniform(k3, (HIDDEN, OUT_FEATURES), jnp.float32, -lim2, lim2)
    b2 = jax.random.uniform(k4, (OUT_FEATURES,), jnp.float32, -lim2, lim2)
    return w1, b1, w2, b2


if __name__ == "__main__":
    key = jax.random.PRNGKey(0)
    k_x, k_p = jax.random.split(key)

    # Input consistent with the module: Flatten expects 4*4*512 features,
    # i.e. NCHW input of shape (B, 512, 4, 4). Small batch of 2.
    B = 2
    x = jax.random.normal(k_x, (B, 512, 4, 4), dtype=jnp.float32)
    w1, b1, w2, b2 = init_params(k_p)

    # One-time weight preparation (bf16 w1) -- not part of the per-call path.
    prepared = prepare_params(w1, b1, w2, b2)
    prepared = jax.block_until_ready(prepared)

    out = catdog_forward(x, prepared)
    out = jax.block_until_ready(out)

    # Pure-JAX f32 reference (eval-mode forward; dropout is identity).
    x_flat = x.reshape(B, IN_FEATURES)
    h_ref = jnp.maximum(x_flat @ w1 + b1, 0.0)
    ref = jax.nn.sigmoid(h_ref @ w2 + b2)

    assert out.shape == (B, OUT_FEATURES), out.shape
    # Exact sigmoid -> true probabilities, no approximation slack needed.
    assert bool(jnp.all((out >= 0.0) & (out <= 1.0)))
    # Accuracy vs f32 reference (bf16 first layer => small logit differences).
    assert bool(jnp.all(jnp.abs(out - ref) < 2e-2)), float(jnp.max(jnp.abs(out - ref)))

    print("KERNEL_OK")
</pallas_src>

<mosaic_0001>
module attributes {stable_mosaic.version = 11 : i64} {
  func.func @catdog_mlp_kernel(%arg0: i32, %arg1: memref<2x8192xf32, #tpu.memory_space<vmem>>, %arg2: memref<8192x256xbf16, #tpu.memory_space<vmem>>, %arg3: memref<1x256xf32, #tpu.memory_space<vmem>>, %arg4: memref<1x256xf32, #tpu.memory_space<vmem>>, %arg5: memref<1x1xf32, #tpu.memory_space<vmem>>, %arg6: memref<2x1xf32, #tpu.memory_space<vmem>>) attributes {dimension_semantics = [#tpu.dimension_semantics<parallel>], iteration_bounds = array<i64: 1>, scalar_prefetch = 0 : i64, scratch_operands = 0 : i64, tpu.core_type = #tpu.core_type<tc>, window_params = [{transform_indices = @transform_0, window_bounds = array<i64: 2, 8192>}, {pipeline_mode = #tpu.pipeline_mode<synchronous>, transform_indices = @transform_1, window_bounds = array<i64: 8192, 256>}, {pipeline_mode = #tpu.pipeline_mode<synchronous>, transform_indices = @transform_2, window_bounds = array<i64: 1, 256>}, {pipeline_mode = #tpu.pipeline_mode<synchronous>, transform_indices = @transform_3, window_bounds = array<i64: 1, 256>}, {pipeline_mode = #tpu.pipeline_mode<synchronous>, transform_indices = @transform_4, window_bounds = array<i64: 1, 1>}, {transform_indices = @transform_5, window_bounds = array<i64: 2, 1>}]} {
    %c0 = arith.constant 0 : index
    %c0_0 = arith.constant 0 : index
    %0 = vector.load %arg1[%c0, %c0_0] : memref<2x8192xf32, #tpu.memory_space<vmem>>, vector<2x8192xf32>
    %1 = arith.truncf %0 : vector<2x8192xf32> to vector<2x8192xbf16>
    %c0_1 = arith.constant 0 : index
    %c0_2 = arith.constant 0 : index
    %2 = vector.load %arg2[%c0_1, %c0_2] : memref<8192x256xbf16, #tpu.memory_space<vmem>>, vector<8192x256xbf16>
    %cst = arith.constant dense<0.000000e+00> : vector<2x256xf32>
    %3 = tpu.matmul %1, %2, %cst {dimension_numbers = #tpu.dot_dimension_numbers<[1], [0], [0], [1], [0, 0, 1, 1], [], []>} : vector<2x8192xbf16>, vector<8192x256xbf16>, vector<2x256xf32> -> vector<2x256xf32>
    %c0_3 = arith.constant 0 : index
    %c0_4 = arith.constant 0 : index
    %4 = vector.load %arg3[%c0_3, %c0_4] : memref<1x256xf32, #tpu.memory_space<vmem>>, vector<1x256xf32>
    %5 = vector.broadcast %4 : vector<1x256xf32> to vector<2x256xf32>
    %6 = arith.addf %3, %5 : vector<2x256xf32>
    %cst_5 = arith.constant 0.000000e+00 : f32
    %7 = vector.broadcast %cst_5 : f32 to vector<2x256xf32>
    %8 = arith.maximumf %6, %7 : vector<2x256xf32>
    %c0_6 = arith.constant 0 : index
    %c0_7 = arith.constant 0 : index
    %9 = vector.load %arg4[%c0_6, %c0_7] : memref<1x256xf32, #tpu.memory_space<vmem>>, vector<1x256xf32>
    %10 = vector.broadcast %9 : vector<1x256xf32> to vector<2x256xf32>
    %11 = arith.mulf %8, %10 : vector<2x256xf32>
    %cst_8 = arith.constant dense<0.000000e+00> : vector<2xf32>
    %12 = vector.multi_reduction <add>, %11, %cst_8 [1] : vector<2x256xf32> to vector<2xf32>
    %13 = vector.shape_cast %12 : vector<2xf32> to vector<2x1xf32>
    %c0_9 = arith.constant 0 : index
    %c0_10 = arith.constant 0 : index
    %14 = vector.load %arg5[%c0_9, %c0_10] : memref<1x1xf32, #tpu.memory_space<vmem>>, vector<1x1xf32>
    %15 = vector.broadcast %14 : vector<1x1xf32> to vector<2x1xf32>
    %16 = arith.addf %13, %15 : vector<2x1xf32>
    %cst_11 = arith.constant 0.000000e+00 : f32
    %17 = vector.broadcast %cst_11 : f32 to vector<2x1xf32>
    %18 = arith.subf %17, %16 : vector<2x1xf32>
    %19 = math.exp %18 : vector<2x1xf32>
    %cst_12 = arith.constant 1.000000e+00 : f32
    %20 = vector.broadcast %cst_12 : f32 to vector<2x1xf32>
    %21 = arith.addf %20, %19 : vector<2x1xf32>
    %cst_13 = arith.constant 1.000000e+00 : f32
    %22 = vector.broadcast %cst_13 : f32 to vector<2x1xf32>
    %23 = arith.divf %22, %21 : vector<2x1xf32>
    %c0_14 = arith.constant 0 : index
    %c0_15 = arith.constant 0 : index
    %24 = vector.load %arg6[%c0_14, %c0_15] : memref<2x1xf32, #tpu.memory_space<vmem>>, vector<2x1xf32>
    tpu.vector_store %arg6[%c0_14, %c0_15], %23 {strides = array<i32>} : memref<2x1xf32, #tpu.memory_space<vmem>>, vector<2x1xf32>,
    return
  }
  func.func @transform_0(%arg0: i32) -> (i32, i32) {
    %c0_i32 = arith.constant 0 : i32
    %c0_i32_0 = arith.constant 0 : i32
    return %arg0, %c0_i32 : i32, i32
  }
  func.func @transform_1(%arg0: i32) -> (i32, i32) {
    %c0_i32 = arith.constant 0 : i32
    %c0_i32_0 = arith.constant 0 : i32
    %c0_i32_1 = arith.constant 0 : i32
    return %c0_i32, %c0_i32_0 : i32, i32
  }
  func.func @transform_2(%arg0: i32) -> (i32, i32) {
    %c0_i32 = arith.constant 0 : i32
    %c0_i32_0 = arith.constant 0 : i32
    %c0_i32_1 = arith.constant 0 : i32
    return %c0_i32, %c0_i32_0 : i32, i32
  }
  func.func @transform_3(%arg0: i32) -> (i32, i32) {
    %c0_i32 = arith.constant 0 : i32
    %c0_i32_0 = arith.constant 0 : i32
    %c0_i32_1 = arith.constant 0 : i32
    return %c0_i32, %c0_i32_0 : i32, i32
  }
  func.func @transform_4(%arg0: i32) -> (i32, i32) {
    %c0_i32 = arith.constant 0 : i32
    %c0_i32_0 = arith.constant 0 : i32
    %c0_i32_1 = arith.constant 0 : i32
    return %c0_i32, %c0_i32_0 : i32, i32
  }
  func.func @transform_5(%arg0: i32) -> (i32, i32) {
    %c0_i32 = arith.constant 0 : i32
    %c0_i32_0 = arith.constant 0 : i32
    return %arg0, %c0_i32 : i32, i32
  }
}

</mosaic_0001>

<llo_original>
// kernel: tpu_custom_call.1
$region0: #{tpu_custom_call.1}
  #allocation0 [shape = 'u32[]', space=smem, size = 0x4, offset = 0x4, fixed_abs, tag = 'smem constant byte address 0x4 - core index']
  #allocation1 [shape = 'u32[144,128]{1,0:T(1,128)}', space=vmem, size = 0x12000, scoped, tag = 'internal scratch']
  #allocation2 [shape = 'f32[1,1]{1,0:T(1,128)S(1)}', space=vmem, size = 0x200, scoped, tag = 'scoped memory for tpu_custom_call.1']
  %s0 = inlined_call_operand.hbm [shape: f32[2,8192], index: 0, kind: input, shape index: {}]
  %s1 = inlined_call_operand.hbm [shape: bf16[8192,256], index: 1, kind: input, shape index: {}]
  %s2 = inlined_call_operand.hbm [shape: f32[1,256], index: 2, kind: input, shape index: {}]
  %s3 = inlined_call_operand.hbm [shape: f32[1,256], index: 3, kind: input, shape index: {}]
  %s4 = inlined_call_operand.<no memory space> [shape: f32[1,1], index: 4, kind: input, shape index: {}]
  %s5 = inlined_call_operand.vmem [shape: f32[2,1], index: 5, kind: output, shape index: {}]
  %s6 = sld [smem:[#allocation0]]
  $region46: #{tpu_custom_call.1} parent=0
    _
  %s8 = ssub.s32 1, %s6
  %s9 = scalar_select 0, %s8, %s6
  %v10 = vstv %s4
  %11 = vst [vmem:[#allocation2] sm:$0x1] %v10
  $region1: #{tpu_custom_call.1} parent=0
    #allocation3 [shape = 'u8[65536]{0}', space=vmem, size = 0x10000, scoped, tag = 'input window, operand 0, single buffered']
    #allocation4 [shape = 's32[1]{0}', space=sflag, size = 0x4, scoped, tag = 'scoped memory for tpu_custom_call.1']
    #allocation5 [shape = 'u8[4194304]{0}', space=vmem, size = 0x400000, scoped, tag = 'input window, operand 1, single buffered']
    #allocation6 [shape = 's32[1]{0}', space=sflag, size = 0x4, scoped, tag = 'scoped memory for tpu_custom_call.1']
    #allocation7 [shape = 'u8[1024]{0}', space=vmem, size = 0x400, scoped, tag = 'input window, operand 2, single buffered']
    #allocation8 [shape = 'u8[1024]{0}', space=vmem, size = 0x400, scoped, tag = 'input window, operand 3, single buffered']
    #allocation9 [shape = 's32[1]{0}', space=sflag, size = 0x4, scoped, tag = 'scoped memory for tpu_custom_call.1']
    %12 = vsyncpa [#allocation4], 0
    %13 = vsyncpa [#allocation6], 0
    %14 = vsyncpa [#allocation9], 0
    // Predicated region
    $region2: #{tpu_custom_call.1} parent=1 // pred_check
      _
    $region3: #{tpu_custom_call.1} parent=1 // pred_check_branch
      %16 = sbr.rel (0) target = $region5
    $region4: #{tpu_custom_call.1} parent=1 // pred_region
      %s18 = ssub.s32 2048, 2048
      %19 = vsyncadd [#allocation4], %s18
      %s21 = sshll.u32 [#allocation3], 4
      %s22 = int_to_ptr.vmem [resolvable:$true] %s21
      %24 = dma.hbm_to_vmem [thread:$0]  %s0, 2048, %s22, [#allocation4]
    $region5: #{tpu_custom_call.1} parent=1 // pred_fallthru
      _
    // Predicated region
    $region6: #{tpu_custom_call.1} parent=1 // pred_check
      _
    $region7: #{tpu_custom_call.1} parent=1 // pred_check_branch
      %26 = sbr.rel (0) target = $region9
    $region8: #{tpu_custom_call.1} parent=1 // pred_region
      %s28 = ssub.s32 131072, 131072
      %29 = vsyncadd [#allocation6], %s28
      %s30 = sshll.u32 [#allocation5], 4
      %s31 = int_to_ptr.vmem [resolvable:$true] %s30
      %36 = dma.hbm_to_vmem [thread:$0]  %s1, 131072, %s31, [#allocation6], 128, 128, 8
    $region9: #{tpu_custom_call.1} parent=1 // pred_fallthru
      _
    // Predicated region
    $region10: #{tpu_custom_call.1} parent=1 // pred_check
      _
    $region11: #{tpu_custom_call.1} parent=1 // pred_check_branch
      %38 = sbr.rel (0) target = $region13
    $region12: #{tpu_custom_call.1} parent=1 // pred_region
      %s40 = ssub.s32 32, 32
      %41 = vsyncadd [#allocation6], %s40
      %s43 = sshll.u32 [#allocation7], 4
      %s44 = int_to_ptr.vmem [resolvable:$true] %s43
      %46 = dma.hbm_to_vmem [thread:$0]  %s2, 32, %s44, [#allocation6]
    $region13: #{tpu_custom_call.1} parent=1 // pred_fallthru
      _
    // Predicated region
    $region14: #{tpu_custom_call.1} parent=1 // pred_check
      _
    $region15: #{tpu_custom_call.1} parent=1 // pred_check_branch
      %48 = sbr.rel (0) target = $region17
    $region16: #{tpu_custom_call.1} parent=1 // pred_region
      %s50 = ssub.s32 32, 32
      %51 = vsyncadd [#allocation9], %s50
      %s53 = sshll.u32 [#allocation8], 4
      %s54 = int_to_ptr.vmem [resolvable:$true] %s53
      %56 = dma.hbm_to_vmem [thread:$0]  %s3, 32, %s54, [#allocation9]
    $region17: #{tpu_custom_call.1} parent=1 // pred_fallthru
      _
    // Predicated region
    $region18: #{tpu_custom_call.1} parent=1 // pred_check
      _
    $region19: #{tpu_custom_call.1} parent=1 // pred_check_branch
      %58 = sbr.rel (0) target = $region21
    $region20: #{tpu_custom_call.1} parent=1 // pred_region
      _
    $region21: #{tpu_custom_call.1} parent=1 // pred_fallthru
      _
    // Predicated region
    $region22: #{tpu_custom_call.1} parent=1 // pred_check
      _
    $region23: #{tpu_custom_call.1} parent=1 // pred_check_branch
      %60 = sbr.rel (0) target = $region25
    $region24: #{tpu_custom_call.1} parent=1 // pred_region
      %61 = dma.done [#allocation4], 2048
    $region25: #{tpu_custom_call.1} parent=1 // pred_fallthru
      _
    // Predicated region
    $region26: #{tpu_custom_call.1} parent=1 // pred_check
      _
    $region27: #{tpu_custom_call.1} parent=1 // pred_check_branch
      %63 = sbr.rel (0) target = $region29
    $region28: #{tpu_custom_call.1} parent=1 // pred_region
      %64 = dma.done [#allocation6], 131072
    $region29: #{tpu_custom_call.1} parent=1 // pred_fallthru
      _
    // Predicated region
    $region30: #{tpu_custom_call.1} parent=1 // pred_check
      _
    $region31: #{tpu_custom_call.1} parent=1 // pred_check_branch
      %66 = sbr.rel (0) target = $region33
    $region32: #{tpu_custom_call.1} parent=1 // pred_region
      %67 = dma.done [#allocation6], 32
    $region33: #{tpu_custom_call.1} parent=1 // pred_fallthru
      _
    // Predicated region
    $region34: #{tpu_custom_call.1} parent=1 // pred_check
      _
    $region35: #{tpu_custom_call.1} parent=1 // pred_check_branch
      %69 = sbr.rel (0) target = $region37
    $region36: #{tpu_custom_call.1} parent=1 // pred_region
      %70 = dma.done [#allocation9], 32
    $region37: #{tpu_custom_call.1} parent=1 // pred_fallthru
      _
    %v71 = vld [vmem:[#allocation3] sm:$0xff]
    %v72 = vld [vmem:[#allocation3 + $0x8] sm:$0xff]
    %v73 = vld [vmem:[#allocation3 + $0x10] sm:$0xff]
    %v74 = vld [vmem:[#allocation3 + $0x18] sm:$0xff]
    %v75 = vld [vmem:[#allocation3 + $0x20] sm:$0xff]
    %v76 = vld [vmem:[#allocation3 + $0x28] sm:$0xff]
    %v77 = vld [vmem:[#allocation3 + $0x30] sm:$0xff]
    %v78 = vld [vmem:[#allocation3 + $0x38] sm:$0xff]
    %v79 = vld [vmem:[#allocation3 + $0x40] sm:$0xff]
    %v80 = vld [vmem:[#allocation3 + $0x48] sm:$0xff]
    %v81 = vld [vmem:[#allocation3 + $0x50] sm:$0xff]
    %v82 = vld [vmem:[#allocation3 + $0x58] sm:$0xff]
    %v83 = vld [vmem:[#allocation3 + $0x60] sm:$0xff]
    %v84 = vld [vmem:[#allocation3 + $0x68] sm:$0xff]
    %v85 = vld [vmem:[#allocation3 + $0x70] sm:$0xff]
    %v86 = vld [vmem:[#allocation3 + $0x78] sm:$0xff]
    %v103 = vcombine.high %v71, %v71
    %v105 = vunpack.c.l.s4 1983009808
    %v106 = vunpack.c.0.s8 %v105
    %v107 = vlaneseq
    %v108 = vshrl.u32 %v107, 7
    %v109 = vsub.s32 %v106, %v108
    %v110 = vrot.slane %v71, %v109
    %v112 = vunpack.c.l.s4 1983009808
    %v113 = vunpack.c.0.s8 %v112
    %v114 = vlaneseq
    %v115 = vshrl.u32 %v114, 7
    %v116 = vsub.s32 %v113, %v115
    %v117 = vrot.slane %v103, %v116
    %v118 = vcombine.high %v110, %v110
    %v119 = vcombine.high %v117, %v117
    %v120 = vcombine.high %v72, %v72
    %v122 = vunpack.c.l.s4 1983009808
    %v123 = vunpack.c.0.s8 %v122
    %v124 = vlaneseq
    %v125 = vshrl.u32 %v124, 7
    %v126 = vsub.s32 %v123, %v125
    %v127 = vrot.slane %v72, %v126
    %v129 = vunpack.c.l.s4 1983009808
    %v130 = vunpack.c.0.s8 %v129
    %v131 = vlaneseq
    %v132 = vshrl.u32 %v131, 7
    %v133 = vsub.s32 %v130, %v132
    %v134 = vrot.slane %v120, %v133
    %v135 = vcombine.high %v127, %v127
    %v136 = vcombine.high %v134, %v134
    %v137 = vcombine.high %v73, %v73
    %v139 = vunpack.c.l.s4 1983009808
    %v140 = vunpack.c.0.s8 %v139
    %v141 = vlaneseq
    %v142 = vshrl.u32 %v141, 7
    %v143 = vsub.s32 %v140, %v142
    %v144 = vrot.slane %v73, %v143
    %v146 = vunpack.c.l.s4 1983009808
    %v147 = vunpack.c.0.s8 %v146
    %v148 = vlaneseq
    %v149 = vshrl.u32 %v148, 7
    %v150 = vsub.s32 %v147, %v149
    %v151 = vrot.slane %v137, %v150
    %v152 = vcombine.high %v144, %v144
    %v153 = vcombine.high %v151, %v151
    %v154 = vcombine.high %v74, %v74
    %v156 = vunpack.c.l.s4 1983009808
    %v157 = vunpack.c.0.s8 %v156
    %v158 = vlaneseq
    %v159 = vshrl.u32 %v158, 7
    %v160 = vsub.s32 %v157, %v159
    %v161 = vrot.slane %v74, %v160
    %v163 = vunpack.c.l.s4 1983009808
    %v164 = vunpack.c.0.s8 %v163
    %v165 = vlaneseq
    %v166 = vshrl.u32 %v165, 7
    %v167 = vsub.s32 %v164, %v166
    %v168 = vrot.slane %v154, %v167
    %v169 = vcombine.high %v161, %v161
    %v170 = vcombine.high %v168, %v168
    %v171 = vcombine.high %v75, %v75
    %v173 = vunpack.c.l.s4 1983009808
    %v174 = vunpack.c.0.s8 %v173
    %v175 = vlaneseq
    %v176 = vshrl.u32 %v175, 7
    %v177 = vsub.s32 %v174, %v176
    %v178 = vrot.slane %v75, %v177
    %v180 = vunpack.c.l.s4 1983009808
    %v181 = vunpack.c.0.s8 %v180
    %v182 = vlaneseq
    %v183 = vshrl.u32 %v182, 7
    %v184 = vsub.s32 %v181, %v183
    %v185 = vrot.slane %v171, %v184
    %v186 = vcombine.high %v178, %v178
    %v187 = vcombine.high %v185, %v185
    %v188 = vcombine.high %v76, %v76
    %v190 = vunpack.c.l.s4 1983009808
    %v191 = vunpack.c.0.s8 %v190
    %v192 = vlaneseq
    %v193 = vshrl.u32 %v192, 7
    %v194 = vsub.s32 %v191, %v193
    %v195 = vrot.slane %v76, %v194
    %v197 = vunpack.c.l.s4 1983009808
    %v198 = vunpack.c.0.s8 %v197
    %v199 = vlaneseq
    %v200 = vshrl.u32 %v199, 7
    %v201 = vsub.s32 %v198, %v200
    %v202 = vrot.slane %v188, %v201
    %v203 = vcombine.high %v195, %v195
    %v204 = vcombine.high %v202, %v202
    %v205 = vcombine.high %v77, %v77
    %v207 = vunpack.c.l.s4 1983009808
    %v208 = vunpack.c.0.s8 %v207
    %v209 = vlaneseq
    %v210 = vshrl.u32 %v209, 7
    %v211 = vsub.s32 %v208, %v210
    %v212 = vrot.slane %v77, %v211
    %v214 = vunpack.c.l.s4 1983009808
    %v215 = vunpack.c.0.s8 %v214
    %v216 = vlaneseq
    %v217 = vshrl.u32 %v216, 7
    %v218 = vsub.s32 %v215, %v217
    %v219 = vrot.slane %v205, %v218
    %v220 = vcombine.high %v212, %v212
    %v221 = vcombine.high %v219, %v219
    %v222 = vcombine.high %v78, %v78
    %v224 = vunpack.c.l.s4 1983009808
    %v225 = vunpack.c.0.s8 %v224
    %v226 = vlaneseq
    %v227 = vshrl.u32 %v226, 7
    %v228 = vsub.s32 %v225, %v227
    %v229 = vrot.slane %v78, %v228
    %v231 = vunpack.c.l.s4 1983009808
    %v232 = vunpack.c.0.s8 %v231
    %v233 = vlaneseq
    %v234 = vshrl.u32 %v233, 7
    %v235 = vsub.s32 %v232, %v234
    %v236 = vrot.slane %v222, %v235
    %v237 = vcombine.high %v229, %v229
    %v238 = vcombine.high %v236, %v236
    %v239 = vcombine.high %v79, %v79
    %v241 = vunpack.c.l.s4 1983009808
    %v242 = vunpack.c.0.s8 %v241
    %v243 = vlaneseq
    %v244 = vshrl.u32 %v243, 7
    %v245 = vsub.s32 %v242, %v244
    %v246 = vrot.slane %v79, %v245
    %v248 = vunpack.c.l.s4 1983009808
    %v249 = vunpack.c.0.s8 %v248
    %v250 = vlaneseq
    %v251 = vshrl.u32 %v250, 7
    %v252 = vsub.s32 %v249, %v251
    %v253 = vrot.slane %v239, %v252
    %v254 = vcombine.high %v246, %v246
    %v255 = vcombine.high %v253, %v253
    %v256 = vcombine.high %v80, %v80
    %v258 = vunpack.c.l.s4 1983009808
    %v259 = vunpack.c.0.s8 %v258
    %v260 = vlaneseq
    %v261 = vshrl.u32 %v260, 7
    %v262 = vsub.s32 %v259, %v261
    %v263 = vrot.slane %v80, %v262
    %v265 = vunpack.c.l.s4 1983009808
    %v266 = vunpack.c.0.s8 %v265
    %v267 = vlaneseq
    %v268 = vshrl.u32 %v267, 7
    %v269 = vsub.s32 %v266, %v268
    %v270 = vrot.slane %v256, %v269
    %v271 = vcombine.high %v263, %v263
    %v272 = vcombine.high %v270, %v270
    %v273 = vcombine.high %v81, %v81
    %v275 = vunpack.c.l.s4 1983009808
    %v276 = vunpack.c.0.s8 %v275
    %v277 = vlaneseq
    %v278 = vshrl.u32 %v277, 7
    %v279 = vsub.s32 %v276, %v278
    %v280 = vrot.slane %v81, %v279
    %v282 = vunpack.c.l.s4 1983009808
    %v283 = vunpack.c.0.s8 %v282
    %v284 = vlaneseq
    %v285 = vshrl.u32 %v284, 7
    %v286 = vsub.s32 %v283, %v285
    %v287 = vrot.slane %v273, %v286
    %v288 = vcombine.high %v280, %v280
    %v289 = vcombine.high %v287, %v287
    %v290 = vcombine.high %v82, %v82
    %v292 = vunpack.c.l.s4 1983009808
    %v293 = vunpack.c.0.s8 %v292
    %v294 = vlaneseq
    %v295 = vshrl.u32 %v294, 7
    %v296 = vsub.s32 %v293, %v295
    %v297 = vrot.slane %v82, %v296
    %v299 = vunpack.c.l.s4 1983009808
    %v300 = vunpack.c.0.s8 %v299
    %v301 = vlaneseq
    %v302 = vshrl.u32 %v301, 7
    %v303 = vsub.s32 %v300, %v302
    %v304 = vrot.slane %v290, %v303
    %v305 = vcombine.high %v297, %v297
    %v306 = vcombine.high %v304, %v304
    %v307 = vcombine.high %v83, %v83
    %v309 = vunpack.c.l.s4 1983009808
    %v310 = vunpack.c.0.s8 %v309
    %v311 = vlaneseq
    %v312 = vshrl.u32 %v311, 7
    %v313 = vsub.s32 %v310, %v312
    %v314 = vrot.slane %v83, %v313
    %v316 = vunpack.c.l.s4 1983009808
    %v317 = vunpack.c.0.s8 %v316
    %v318 = vlaneseq
    %v319 = vshrl.u32 %v318, 7
    %v320 = vsub.s32 %v317, %v319
    %v321 = vrot.slane %v307, %v320
    %v322 = vcombine.high %v314, %v314
    %v323 = vcombine.high %v321, %v321
    %v324 = vcombine.high %v84, %v84
    %v326 = vunpack.c.l.s4 1983009808
    %v327 = vunpack.c.0.s8 %v326
    %v328 = vlaneseq
    %v329 = vshrl.u32 %v328, 7
    %v330 = vsub.s32 %v327, %v329
    %v331 = vrot.slane %v84, %v330
    %v333 = vunpack.c.l.s4 1983009808
    %v334 = vunpack.c.0.s8 %v333
    %v335 = vlaneseq
    %v336 = vshrl.u32 %v335, 7
    %v337 = vsub.s32 %v334, %v336
    %v338 = vrot.slane %v324, %v337
    %v339 = vcombine.high %v331, %v331
    %v340 = vcombine.high %v338, %v338
    %v341 = vcombine.high %v85, %v85
    %v343 = vunpack.c.l.s4 1983009808
    %v344 = vunpack.c.0.s8 %v343
    %v345 = vlaneseq
    %v346 = vshrl.u32 %v345, 7
    %v347 = vsub.s32 %v344, %v346
    %v348 = vrot.slane %v85, %v347
    %v350 = vunpack.c.l.s4 1983009808
    %v351 = vunpack.c.0.s8 %v350
    %v352 = vlaneseq
    %v353 = vshrl.u32 %v352, 7
    %v354 = vsub.s32 %v351, %v353
    %v355 = vrot.slane %v341, %v354
    %v356 = vcombine.high %v348, %v348
    %v357 = vcombine.high %v355, %v355
    %v358 = vcombine.high %v86, %v86
    %v360 = vunpack.c.l.s4 1983009808
    %v361 = vunpack.c.0.s8 %v360
    %v362 = vlaneseq
    %v363 = vshrl.u32 %v362, 7
    %v364 = vsub.s32 %v361, %v363
    %v365 = vrot.slane %v86, %v364
    %v367 = vunpack.c.l.s4 1983009808
    %v368 = vunpack.c.0.s8 %v367
    %v369 = vlaneseq
    %v370 = vshrl.u32 %v369, 7
    %v371 = vsub.s32 %v368, %v370
    %v372 = vrot.slane %v358, %v371
    %v373 = vcombine.high %v365, %v365
    %v374 = vcombine.high %v372, %v372
    %v439 = vpack.c.bf16 %v110, %v110
    %v440 = vpack.c.bf16 %v118, %v118
    %v441 = vpack.c.bf16 %v117, %v117
    %v442 = vpack.c.bf16 %v119, %v119
    %v443 = vpack.c.bf16 %v127, %v127
    %v444 = vpack.c.bf16 %v135, %v135
    %v445 = vpack.c.bf16 %v134, %v134
    %v446 = vpack.c.bf16 %v136, %v136
    %v447 = vpack.c.bf16 %v144, %v144
    %v448 = vpack.c.bf16 %v152, %v152
    %v449 = vpack.c.bf16 %v151, %v151
    %v450 = vpack.c.bf16 %v153, %v153
    %v451 = vpack.c.bf16 %v161, %v161
    %v452 = vpack.c.bf16 %v169, %v169
    %v453 = vpack.c.bf16 %v168, %v168
    %v454 = vpack.c.bf16 %v170, %v170
    %v455 = vpack.c.bf16 %v178, %v178
    %v456 = vpack.c.bf16 %v186, %v186
    %v457 = vpack.c.bf16 %v185, %v185
    %v458 = vpack.c.bf16 %v187, %v187
    %v459 = vpack.c.bf16 %v195, %v195
    %v460 = vpack.c.bf16 %v203, %v203
    %v461 = vpack.c.bf16 %v202, %v202
    %v462 = vpack.c.bf16 %v204, %v204
    %v463 = vpack.c.bf16 %v212, %v212
    %v464 = vpack.c.bf16 %v220, %v220
    %v465 = vpack.c.bf16 %v219, %v219
    %v466 = vpack.c.bf16 %v221, %v221
    %v467 = vpack.c.bf16 %v229, %v229
    %v468 = vpack.c.bf16 %v237, %v237
    %v469 = vpack.c.bf16 %v236, %v236
    %v470 = vpack.c.bf16 %v238, %v238
    %v471 = vpack.c.bf16 %v246, %v246
    %v472 = vpack.c.bf16 %v254, %v254
    %v473 = vpack.c.bf16 %v253, %v253
    %v474 = vpack.c.bf16 %v255, %v255
    %v475 = vpack.c.bf16 %v263, %v263
    %v476 = vpack.c.bf16 %v271, %v271
    %v477 = vpack.c.bf16 %v270, %v270
    %v478 = vpack.c.bf16 %v272, %v272
    %v479 = vpack.c.bf16 %v280, %v280
    %v480 = vpack.c.bf16 %v288, %v288
    %v481 = vpack.c.bf16 %v287, %v287
    %v482 = vpack.c.bf16 %v289, %v289
    %v483 = vpack.c.bf16 %v297, %v297
    %v484 = vpack.c.bf16 %v305, %v305
    %v485 = vpack.c.bf16 %v304, %v304
    %v486 = vpack.c.bf16 %v306, %v306
    %v487 = vpack.c.bf16 %v314, %v314
    %v488 = vpack.c.bf16 %v322, %v322
    %v489 = vpack.c.bf16 %v321, %v321
    %v490 = vpack.c.bf16 %v323, %v323
    %v491 = vpack.c.bf16 %v331, %v331
    %v492 = vpack.c.bf16 %v339, %v339
    %v493 = vpack.c.bf16 %v338, %v338
    %v494 = vpack.c.bf16 %v340, %v340
    %v495 = vpack.c.bf16 %v348, %v348
    %v496 = vpack.c.bf16 %v356, %v356
    %v497 = vpack.c.bf16 %v355, %v355
    %v498 = vpack.c.bf16 %v357, %v357
    %v499 = vpack.c.bf16 %v365, %v365
    %v500 = vpack.c.bf16 %v373, %v373
    %v501 = vpack.c.bf16 %v372, %v372
    %v502 = vpack.c.bf16 %v374, %v374
    %v503 = vld [vmem:[#allocation5] sm:$0xff]
    %v504 = vld [vmem:[#allocation5 + $0x8] sm:$0xff]
    %v505 = vld [vmem:[#allocation5 + $0x10] sm:$0xff]
    %v506 = vld [vmem:[#allocation5 + $0x18] sm:$0xff]
    %v507 = vld [vmem:[#allocation5 + $0x20] sm:$0xff]
    %v508 = vld [vmem:[#allocation5 + $0x28] sm:$0xff]
    %v509 = vld [vmem:[#allocation5 + $0x30] sm:$0xff]
    %v510 = vld [vmem:[#allocation5 + $0x38] sm:$0xff]
    %v511 = vld [vmem:[#allocation5 + $0x40] sm:$0xff]
    %v512 = vld [vmem:[#allocation5 + $0x48] sm:$0xff]
    %v513 = vld [vmem:[#allocation5 + $0x50] sm:$0xff]
    %v514 = vld [vmem:[#allocation5 + $0x58] sm:$0xff]
    %v515 = vld [vmem:[#allocation5 + $0x60] sm:$0xff]
    %v516 = vld [vmem:[#allocation5 + $0x68] sm:$0xff]
    %v517 = vld [vmem:[#allocation5 + $0x70] sm:$0xff]
    %v518 = vld [vmem:[#allocation5 + $0x78] sm:$0xff]
    %v519 = vld [vmem:[#allocation5 + $0x80] sm:$0xff]
    %v520 = vld [vmem:[#allocation5 + $0x88] sm:$0xff]
    %v521 = vld [vmem:[#allocation5 + $0x90] sm:$0xff]
    %v522 = vld [vmem:[#allocation5 + $0x98] sm:$0xff]
    %v523 = vld [vmem:[#allocation5 + $0xa0] sm:$0xff]
    %v524 = vld [vmem:[#allocation5 + $0xa8] sm:$0xff]
    %v525 = vld [vmem:[#allocation5 + $0xb0] sm:$0xff]
    %v526 = vld [vmem:[#allocation5 + $0xb8] sm:$0xff]
    %v527 = vld [vmem:[#allocation5 + $0xc0] sm:$0xff]
    %v528 = vld [vmem:[#allocation5 + $0xc8] sm:$0xff]
    %v529 = vld [vmem:[#allocation5 + $0xd0] sm:$0xff]
    %v530 = vld [vmem:[#allocation5 + $0xd8] sm:$0xff]
    %v531 = vld [vmem:[#allocation5 + $0xe0] sm:$0xff]
    %v532 = vld [vmem:[#allocation5 + $0xe8] sm:$0xff]
    %v533 = vld [vmem:[#allocation5 + $0xf0] sm:$0xff]
    %v534 = vld [vmem:[#allocation5 + $0xf8] sm:$0xff]
    %v535 = vld [vmem:[#allocation5 + $0x100] sm:$0xff]
    %v536 = vld [vmem:[#allocation5 + $0x108] sm:$0xff]
    %v537 = vld [vmem:[#allocation5 + $0x110] sm:$0xff]
    %v538 = vld [vmem:[#allocation5 + $0x118] sm:$0xff]
    %v539 = vld [vmem:[#allocation5 + $0x120] sm:$0xff]
    %v540 = vld [vmem:[#allocation5 + $0x128] sm:$0xff]
    %v541 = vld [vmem:[#allocation5 + $0x130] sm:$0xff]
    %v542 = vld [vmem:[#allocation5 + $0x138] sm:$0xff]
    %v543 = vld [vmem:[#allocation5 + $0x140] sm:$0xff]
    %v544 = vld [vmem:[#allocation5 + $0x148] sm:$0xff]
    %v545 = vld [vmem:[#allocation5 + $0x150] sm:$0xff]
    %v546 = vld [vmem:[#allocation5 + $0x158] sm:$0xff]
    %v547 = vld [vmem:[#allocation5 + $0x160] sm:$0xff]
    %v548 = vld [vmem:[#allocation5 + $0x168] sm:$0xff]
    %v549 = vld [vmem:[#allocation5 + $0x170] sm:$0xff]
    %v550 = vld [vmem:[#allocation5 + $0x178] sm:$0xff]
    %v551 = vld [vmem:[#allocation5 + $0x180] sm:$0xff]
    %v552 = vld [vmem:[#allocation5 + $0x188] sm:$0xff]
    %v553 = vld [vmem:[#allocation5 + $0x190] sm:$0xff]
    %v554 = vld [vmem:[#allocation5 + $0x198] sm:$0xff]
    %v555 = vld [vmem:[#allocation5 + $0x1a0] sm:$0xff]
    %v556 = vld [vmem:[#allocation5 + $0x1a8] sm:$0xff]
    %v557 = vld [vmem:[#allocation5 + $0x1b0] sm:$0xff]
    %v558 = vld [vmem:[#allocation5 + $0x1b8] sm:$0xff]
    %v559 = vld [vmem:[#allocation5 + $0x1c0] sm:$0xff]
    %v560 = vld [vmem:[#allocation5 + $0x1c8] sm:$0xff]
    %v561 = vld [vmem:[#allocation5 + $0x1d0] sm:$0xff]
    %v562 = vld [vmem:[#allocation5 + $0x1d8] sm:$0xff]
    %v563 = vld [vmem:[#allocation5 + $0x1e0] sm:$0xff]
    %v564 = vld [vmem:[#allocation5 + $0x1e8] sm:$0xff]
    %v565 = vld [vmem:[#allocation5 + $0x1f0] sm:$0xff]
    %v566 = vld [vmem:[#allocation5 + $0x1f8] sm:$0xff]
    %v567 = vld [vmem:[#allocation5 + $0x200] sm:$0xff]
    %v568 = vld [vmem:[#allocation5 + $0x208] sm:$0xff]
    %v569 = vld [vmem:[#allocation5 + $0x210] sm:$0xff]
    %v570 = vld [vmem:[#allocation5 + $0x218] sm:$0xff]
    %v571 = vld [vmem:[#allocation5 + $0x220] sm:$0xff]
    %v572 = vld [vmem:[#allocation5 + $0x228] sm:$0xff]
    %v573 = vld [vmem:[#allocation5 + $0x230] sm:$0xff]
    %v574 = vld [vmem:[#allocation5 + $0x238] sm:$0xff]
    %v575 = vld [vmem:[#allocation5 + $0x240] sm:$0xff]
    %v576 = vld [vmem:[#allocation5 + $0x248] sm:$0xff]
    %v577 = vld [vmem:[#allocation5 + $0x250] sm:$0xff]
    %v578 = vld [vmem:[#allocation5 + $0x258] sm:$0xff]
    %v579 = vld [vmem:[#allocation5 + $0x260] sm:$0xff]
    %v580 = vld [vmem:[#allocation5 + $0x268] sm:$0xff]
    %v581 = vld [vmem:[#allocation5 + $0x270] sm:$0xff]
    %v582 = vld [vmem:[#allocation5 + $0x278] sm:$0xff]
    %v583 = vld [vmem:[#allocation5 + $0x280] sm:$0xff]
    %v584 = vld [vmem:[#allocation5 + $0x288] sm:$0xff]
    %v585 = vld [vmem:[#allocation5 + $0x290] sm:$0xff]
    %v586 = vld [vmem:[#allocation5 + $0x298] sm:$0xff]
    %v587 = vld [vmem:[#allocation5 + $0x2a0] sm:$0xff]
    %v588 = vld [vmem:[#allocation5 + $0x2a8] sm:$0xff]
    %v589 = vld [vmem:[#allocation5 + $0x2b0] sm:$0xff]
    %v590 = vld [vmem:[#allocation5 + $0x2b8] sm:$0xff]
    %v591 = vld [vmem:[#allocation5 + $0x2c0] sm:$0xff]
    %v592 = vld [vmem:[#allocation5 + $0x2c8] sm:$0xff]
    %v593 = vld [vmem:[#allocation5 + $0x2d0] sm:$0xff]
    %v594 = vld [vmem:[#allocation5 + $0x2d8] sm:$0xff]
    %v595 = vld [vmem:[#allocation5 + $0x2e0] sm:$0xff]
    %v596 = vld [vmem:[#allocation5 + $0x2e8] sm:$0xff]
    %v597 = vld [vmem:[#allocation5 + $0x2f0] sm:$0xff]
    %v598 = vld [vmem:[#allocation5 + $0x2f8] sm:$0xff]
    %v599 = vld [vmem:[#allocation5 + $0x300] sm:$0xff]
    %v600 = vld [vmem:[#allocation5 + $0x308] sm:$0xff]
    %v601 = vld [vmem:[#allocation5 + $0x310] sm:$0xff]
    %v602 = vld [vmem:[#allocation5 + $0x318] sm:$0xff]
    %v603 = vld [vmem:[#allocation5 + $0x320] sm:$0xff]
    %v604 = vld [vmem:[#allocation5 + $0x328] sm:$0xff]
    %v605 = vld [vmem:[#allocation5 + $0x330] sm:$0xff]
    %v606 = vld [vmem:[#allocation5 + $0x338] sm:$0xff]
    %v607 = vld [vmem:[#allocation5 + $0x340] sm:$0xff]
    %v608 = vld [vmem:[#allocation5 + $0x348] sm:$0xff]
    %v609 = vld [vmem:[#allocation5 + $0x350] sm:$0xff]
    %v610 = vld [vmem:[#allocation5 + $0x358] sm:$0xff]
    %v611 = vld [vmem:[#allocation5 + $0x360] sm:$0xff]
    %v612 = vld [vmem:[#allocation5 + $0x368] sm:$0xff]
    %v613 = vld [vmem:[#allocation5 + $0x370] sm:$0xff]
    %v614 = vld [vmem:[#allocation5 + $0x378] sm:$0xff]
    %v615 = vld [vmem:[#allocation5 + $0x380] sm:$0xff]
    %v616 = vld [vmem:[#allocation5 + $0x388] sm:$0xff]
    %v617 = vld [vmem:[#allocation5 + $0x390] sm:$0xff]
    %v618 = vld [vmem:[#allocation5 + $0x398] sm:$0xff]
    %v619 = vld [vmem:[#allocation5 + $0x3a0] sm:$0xff]
    %v620 = vld [vmem:[#allocation5 + $0x3a8] sm:$0xff]
    %v621 = vld [vmem:[#allocation5 + $0x3b0] sm:$0xff]
    %v622 = vld [vmem:[#allocation5 + $0x3b8] sm:$0xff]
    %v623 = vld [vmem:[#allocation5 + $0x3c0] sm:$0xff]
    %v624 = vld [vmem:[#allocation5 + $0x3c8] sm:$0xff]
    %v625 = vld [vmem:[#allocation5 + $0x3d0] sm:$0xff]
    %v626 = vld [vmem:[#allocation5 + $0x3d8] sm:$0xff]
    %v627 = vld [vmem:[#allocation5 + $0x3e0] sm:$0xff]
    %v628 = vld [vmem:[#allocation5 + $0x3e8] sm:$0xff]
    %v629 = vld [vmem:[#allocation5 + $0x3f0] sm:$0xff]
    %v630 = vld [vmem:[#allocation5 + $0x3f8] sm:$0xff]
    %v631 = vld [vmem:[#allocation5 + $0x400] sm:$0xff]
    %v632 = vld [vmem:[#allocation5 + $0x408] sm:$0xff]
    %v633 = vld [vmem:[#allocation5 + $0x410] sm:$0xff]
    %v634 = vld [vmem:[#allocation5 + $0x418] sm:$0xff]
    %v635 = vld [vmem:[#allocation5 + $0x420] sm:$0xff]
    %v636 = vld [vmem:[#allocation5 + $0x428] sm:$0xff]
    %v637 = vld [vmem:[#allocation5 + $0x430] sm:$0xff]
    %v638 = vld [vmem:[#allocation5 + $0x438] sm:$0xff]
    %v639 = vld [vmem:[#allocation5 + $0x440] sm:$0xff]
    %v640 = vld [vmem:[#allocation5 + $0x448] sm:$0xff]
    %v641 = vld [vmem:[#allocation5 + $0x450] sm:$0xff]
    %v642 = vld [vmem:[#allocation5 + $0x458] sm:$0xff]
    %v643 = vld [vmem:[#allocation5 + $0x460] sm:$0xff]
    %v644 = vld [vmem:[#allocation5 + $0x468] sm:$0xff]
    %v645 = vld [vmem:[#allocation5 + $0x470] sm:$0xff]
    %v646 = vld [vmem:[#allocation5 + $0x478] sm:$0xff]
    %v647 = vld [vmem:[#allocation5 + $0x480] sm:$0xff]
    %v648 = vld [vmem:[#allocation5 + $0x488] sm:$0xff]
    %v649 = vld [vmem:[#allocation5 + $0x490] sm:$0xff]
    %v650 = vld [vmem:[#allocation5 + $0x498] sm:$0xff]
    %v651 = vld [vmem:[#allocation5 + $0x4a0] sm:$0xff]
    %v652 = vld [vmem:[#allocation5 + $0x4a8] sm:$0xff]
    %v653 = vld [vmem:[#allocation5 + $0x4b0] sm:$0xff]
    %v654 = vld [vmem:[#allocation5 + $0x4b8] sm:$0xff]
    %v655 = vld [vmem:[#allocation5 + $0x4c0] sm:$0xff]
    %v656 = vld [vmem:[#allocation5 + $0x4c8] sm:$0xff]
    %v657 = vld [vmem:[#allocation5 + $0x4d0] sm:$0xff]
    %v658 = vld [vmem:[#allocation5 + $0x4d8] sm:$0xff]
    %v659 = vld [vmem:[#allocation5 + $0x4e0] sm:$0xff]
    %v660 = vld [vmem:[#allocation5 + $0x4e8] sm:$0xff]
    %v661 = vld [vmem:[#allocation5 + $0x4f0] sm:$0xff]
    %v662 = vld [vmem:[#allocation5 + $0x4f8] sm:$0xff]
    %v663 = vld [vmem:[#allocation5 + $0x500] sm:$0xff]
    %v664 = vld [vmem:[#allocation5 + $0x508] sm:$0xff]
    %v665 = vld [vmem:[#allocation5 + $0x510] sm:$0xff]
    %v666 = vld [vmem:[#allocation5 + $0x518] sm:$0xff]
    %v667 = vld [vmem:[#allocation5 + $0x520] sm:$0xff]
    %v668 = vld [vmem:[#allocation5 + $0x528] sm:$0xff]
    %v669 = vld [vmem:[#allocation5 + $0x530] sm:$0xff]
    %v670 = vld [vmem:[#allocation5 + $0x538] sm:$0xff]
    %v671 = vld [vmem:[#allocation5 + $0x540] sm:$0xff]
    %v672 = vld [vmem:[#allocation5 + $0x548] sm:$0xff]
    %v673 = vld [vmem:[#allocation5 + $0x550] sm:$0xff]
    %v674 = vld [vmem:[#allocation5 + $0x558] sm:$0xff]
    %v675 = vld [vmem:[#allocation5 + $0x560] sm:$0xff]
    %v676 = vld [vmem:[#allocation5 + $0x568] sm:$0xff]
    %v677 = vld [vmem:[#allocation5 + $0x570] sm:$0xff]
    %v678 = vld [vmem:[#allocation5 + $0x578] sm:$0xff]
    %v679 = vld [vmem:[#allocation5 + $0x580] sm:$0xff]
    %v680 = vld [vmem:[#allocation5 + $0x588] sm:$0xff]
    %v681 = vld [vmem:[#allocation5 + $0x590] sm:$0xff]
    %v682 = vld [vmem:[#allocation5 + $0x598] sm:$0xff]
    %v683 = vld [vmem:[#allocation5 + $0x5a0] sm:$0xff]
    %v684 = vld [vmem:[#allocation5 + $0x5a8] sm:$0xff]
    %v685 = vld [vmem:[#allocation5 + $0x5b0] sm:$0xff]
    %v686 = vld [vmem:[#allocation5 + $0x5b8] sm:$0xff]
    %v687 = vld [vmem:[#allocation5 + $0x5c0] sm:$0xff]
    %v688 = vld [vmem:[#allocation5 + $0x5c8] sm:$0xff]
    %v689 = vld [vmem:[#allocation5 + $0x5d0] sm:$0xff]
    %v690 = vld [vmem:[#allocation5 + $0x5d8] sm:$0xff]
    %v691 = vld [vmem:[#allocation5 + $0x5e0] sm:$0xff]
    %v692 = vld [vmem:[#allocation5 + $0x5e8] sm:$0xff]
    %v693 = vld [vmem:[#allocation5 + $0x5f0] sm:$0xff]
    %v694 = vld [vmem:[#allocation5 + $0x5f8] sm:$0xff]
    %v695 = vld [vmem:[#allocation5 + $0x600] sm:$0xff]
    %v696 = vld [vmem:[#allocation5 + $0x608] sm:$0xff]
    %v697 = vld [vmem:[#allocation5 + $0x610] sm:$0xff]
    %v698 = vld [vmem:[#allocation5 + $0x618] sm:$0xff]
    %v699 = vld [vmem:[#allocation5 + $0x620] sm:$0xff]
    %v700 = vld [vmem:[#allocation5 + $0x628] sm:$0xff]
    %v701 = vld [vmem:[#allocation5 + $0x630] sm:$0xff]
    %v702 = vld [vmem:[#allocation5 + $0x638] sm:$0xff]
    %v703 = vld [vmem:[#allocation5 + $0x640] sm:$0xff]
    %v704 = vld [vmem:[#allocation5 + $0x648] sm:$0xff]
    %v705 = vld [vmem:[#allocation5 + $0x650] sm:$0xff]
    %v706 = vld [vmem:[#allocation5 + $0x658] sm:$0xff]
    %v707 = vld [vmem:[#allocation5 + $0x660] sm:$0xff]
    %v708 = vld [vmem:[#allocation5 + $0x668] sm:$0xff]
    %v709 = vld [vmem:[#allocation5 + $0x670] sm:$0xff]
    %v710 = vld [vmem:[#allocation5 + $0x678] sm:$0xff]
    %v711 = vld [vmem:[#allocation5 + $0x680] sm:$0xff]
    %v712 = vld [vmem:[#allocation5 + $0x688] sm:$0xff]
    %v713 = vld [vmem:[#allocation5 + $0x690] sm:$0xff]
    %v714 = vld [vmem:[#allocation5 + $0x698] sm:$0xff]
    %v715 = vld [vmem:[#allocation5 + $0x6a0] sm:$0xff]
    %v716 = vld [vmem:[#allocation5 + $0x6a8] sm:$0xff]
    %v717 = vld [vmem:[#allocation5 + $0x6b0] sm:$0xff]
    %v718 = vld [vmem:[#allocation5 + $0x6b8] sm:$0xff]
    %v719 = vld [vmem:[#allocation5 + $0x6c0] sm:$0xff]
    %v720 = vld [vmem:[#allocation5 + $0x6c8] sm:$0xff]
    %v721 = vld [vmem:[#allocation5 + $0x6d0] sm:$0xff]
    %v722 = vld [vmem:[#allocation5 + $0x6d8] sm:$0xff]
    %v723 = vld [vmem:[#allocation5 + $0x6e0] sm:$0xff]
    %v724 = vld [vmem:[#allocation5 + $0x6e8] sm:$0xff]
    %v725 = vld [vmem:[#allocation5 + $0x6f0] sm:$0xff]
    %v726 = vld [vmem:[#allocation5 + $0x6f8] sm:$0xff]
    %v727 = vld [vmem:[#allocation5 + $0x700] sm:$0xff]
    %v728 = vld [vmem:[#allocation5 + $0x708] sm:$0xff]
    %v729 = vld [vmem:[#allocation5 + $0x710] sm:$0xff]
    %v730 = vld [vmem:[#allocation5 + $0x718] sm:$0xff]
    %v731 = vld [vmem:[#allocation5 + $0x720] sm:$0xff]
    %v732 = vld [vmem:[#allocation5 + $0x728] sm:$0xff]
    %v733 = vld [vmem:[#allocation5 + $0x730] sm:$0xff]
    %v734 = vld [vmem:[#allocation5 + $0x738] sm:$0xff]
    %v735 = vld [vmem:[#allocation5 + $0x740] sm:$0xff]
    %v736 = vld [vmem:[#allocation5 + $0x748] sm:$0xff]
    %v737 = vld [vmem:[#allocation5 + $0x750] sm:$0xff]
    %v738 = vld [vmem:[#allocation5 + $0x758] sm:$0xff]
    %v739 = vld [vmem:[#allocation5 + $0x760] sm:$0xff]
    %v740 = vld [vmem:[#allocation5 + $0x768] sm:$0xff]
    %v741 = vld [vmem:[#allocation5 + $0x770] sm:$0xff]
    %v742 = vld [vmem:[#allocation5 + $0x778] sm:$0xff]
    %v743 = vld [vmem:[#allocation5 + $0x780] sm:$0xff]
    %v744 = vld [vmem:[#allocation5 + $0x788] sm:$0xff]
    %v745 = vld [vmem:[#allocation5 + $0x790] sm:$0xff]
    %v746 = vld [vmem:[#allocation5 + $0x798] sm:$0xff]
    %v747 = vld [vmem:[#allocation5 + $0x7a0] sm:$0xff]
    %v748 = vld [vmem:[#allocation5 + $0x7a8] sm:$0xff]
    %v749 = vld [vmem:[#allocation5 + $0x7b0] sm:$0xff]
    %v750 = vld [vmem:[#allocation5 + $0x7b8] sm:$0xff]
    %v751 = vld [vmem:[#allocation5 + $0x7c0] sm:$0xff]
    %v752 = vld [vmem:[#allocation5 + $0x7c8] sm:$0xff]
    %v753 = vld [vmem:[#allocation5 + $0x7d0] sm:$0xff]
    %v754 = vld [vmem:[#allocation5 + $0x7d8] sm:$0xff]
    %v755 = vld [vmem:[#allocation5 + $0x7e0] sm:$0xff]
    %v756 = vld [vmem:[#allocation5 + $0x7e8] sm:$0xff]
    %v757 = vld [vmem:[#allocation5 + $0x7f0] sm:$0xff]
    %v758 = vld [vmem:[#allocation5 + $0x7f8] sm:$0xff]
    %v759 = vld [vmem:[#allocation5 + $0x800] sm:$0xff]
    %v760 = vld [vmem:[#allocation5 + $0x808] sm:$0xff]
    %v761 = vld [vmem:[#allocation5 + $0x810] sm:$0xff]
    %v762 = vld [vmem:[#allocation5 + $0x818] sm:$0xff]
    %v763 = vld [vmem:[#allocation5 + $0x820] sm:$0xff]
    %v764 = vld [vmem:[#allocation5 + $0x828] sm:$0xff]
    %v765 = vld [vmem:[#allocation5 + $0x830] sm:$0xff]
    %v766 = vld [vmem:[#allocation5 + $0x838] sm:$0xff]
    %v767 = vld [vmem:[#allocation5 + $0x840] sm:$0xff]
    %v768 = vld [vmem:[#allocation5 + $0x848] sm:$0xff]
    %v769 = vld [vmem:[#allocation5 + $0x850] sm:$0xff]
    %v770 = vld [vmem:[#allocation5 + $0x858] sm:$0xff]
    %v771 = vld [vmem:[#allocation5 + $0x860] sm:$0xff]
    %v772 = vld [vmem:[#allocation5 + $0x868] sm:$0xff]
    %v773 = vld [vmem:[#allocation5 + $0x870] sm:$0xff]
    %v774 = vld [vmem:[#allocation5 + $0x878] sm:$0xff]
    %v775 = vld [vmem:[#allocation5 + $0x880] sm:$0xff]
    %v776 = vld [vmem:[#allocation5 + $0x888] sm:$0xff]
    %v777 = vld [vmem:[#allocation5 + $0x890] sm:$0xff]
    %v778 = vld [vmem:[#allocation5 + $0x898] sm:$0xff]
    %v779 = vld [vmem:[#allocation5 + $0x8a0] sm:$0xff]
    %v780 = vld [vmem:[#allocation5 + $0x8a8] sm:$0xff]
    %v781 = vld [vmem:[#allocation5 + $0x8b0] sm:$0xff]
    %v782 = vld [vmem:[#allocation5 + $0x8b8] sm:$0xff]
    %v783 = vld [vmem:[#allocation5 + $0x8c0] sm:$0xff]
    %v784 = vld [vmem:[#allocation5 + $0x8c8] sm:$0xff]
    %v785 = vld [vmem:[#allocation5 + $0x8d0] sm:$0xff]
    %v786 = vld [vmem:[#allocation5 + $0x8d8] sm:$0xff]
    %v787 = vld [vmem:[#allocation5 + $0x8e0] sm:$0xff]
    %v788 = vld [vmem:[#allocation5 + $0x8e8] sm:$0xff]
    %v789 = vld [vmem:[#allocation5 + $0x8f0] sm:$0xff]
    %v790 = vld [vmem:[#allocation5 + $0x8f8] sm:$0xff]
    %v791 = vld [vmem:[#allocation5 + $0x900] sm:$0xff]
    %v792 = vld [vmem:[#allocation5 + $0x908] sm:$0xff]
    %v793 = vld [vmem:[#allocation5 + $0x910] sm:$0xff]
    %v794 = vld [vmem:[#allocation5 + $0x918] sm:$0xff]
    %v795 = vld [vmem:[#allocation5 + $0x920] sm:$0xff]
    %v796 = vld [vmem:[#allocation5 + $0x928] sm:$0xff]
    %v797 = vld [vmem:[#allocation5 + $0x930] sm:$0xff]
    %v798 = vld [vmem:[#allocation5 + $0x938] sm:$0xff]
    %v799 = vld [vmem:[#allocation5 + $0x940] sm:$0xff]
    %v800 = vld [vmem:[#allocation5 + $0x948] sm:$0xff]
    %v801 = vld [vmem:[#allocation5 + $0x950] sm:$0xff]
    %v802 = vld [vmem:[#allocation5 + $0x958] sm:$0xff]
    %v803 = vld [vmem:[#allocation5 + $0x960] sm:$0xff]
    %v804 = vld [vmem:[#allocation5 + $0x968] sm:$0xff]
    %v805 = vld [vmem:[#allocation5 + $0x970] sm:$0xff]
    %v806 = vld [vmem:[#allocation5 + $0x978] sm:$0xff]
    %v807 = vld [vmem:[#allocation5 + $0x980] sm:$0xff]
    %v808 = vld [vmem:[#allocation5 + $0x988] sm:$0xff]
    %v809 = vld [vmem:[#allocation5 + $0x990] sm:$0xff]
    %v810 = vld [vmem:[#allocation5 + $0x998] sm:$0xff]
    %v811 = vld [vmem:[#allocation5 + $0x9a0] sm:$0xff]
    %v812 = vld [vmem:[#allocation5 + $0x9a8] sm:$0xff]
    %v813 = vld [vmem:[#allocation5 + $0x9b0] sm:$0xff]
    %v814 = vld [vmem:[#allocation5 + $0x9b8] sm:$0xff]
    %v815 = vld [vmem:[#allocation5 + $0x9c0] sm:$0xff]
    %v816 = vld [vmem:[#allocation5 + $0x9c8] sm:$0xff]
    %v817 = vld [vmem:[#allocation5 + $0x9d0] sm:$0xff]
    %v818 = vld [vmem:[#allocation5 + $0x9d8] sm:$0xff]
    %v819 = vld [vmem:[#allocation5 + $0x9e0] sm:$0xff]
    %v820 = vld [vmem:[#allocation5 + $0x9e8] sm:$0xff]
    %v821 = vld [vmem:[#allocation5 + $0x9f0] sm:$0xff]
    %v822 = vld [vmem:[#allocation5 + $0x9f8] sm:$0xff]
    %v823 = vld [vmem:[#allocation5 + $0xa00] sm:$0xff]
    %v824 = vld [vmem:[#allocation5 + $0xa08] sm:$0xff]
    %v825 = vld [vmem:[#allocation5 + $0xa10] sm:$0xff]
    %v826 = vld [vmem:[#allocation5 + $0xa18] sm:$0xff]
    %v827 = vld [vmem:[#allocation5 + $0xa20] sm:$0xff]
    %v828 = vld [vmem:[#allocation5 + $0xa28] sm:$0xff]
    %v829 = vld [vmem:[#allocation5 + $0xa30] sm:$0xff]
    %v830 = vld [vmem:[#allocation5 + $0xa38] sm:$0xff]
    %v831 = vld [vmem:[#allocation5 + $0xa40] sm:$0xff]
    %v832 = vld [vmem:[#allocation5 + $0xa48] sm:$0xff]
    %v833 = vld [vmem:[#allocation5 + $0xa50] sm:$0xff]
    %v834 = vld [vmem:[#allocation5 + $0xa58] sm:$0xff]
    %v835 = vld [vmem:[#allocation5 + $0xa60] sm:$0xff]
    %v836 = vld [vmem:[#allocation5 + $0xa68] sm:$0xff]
    %v837 = vld [vmem:[#allocation5 + $0xa70] sm:$0xff]
    %v838 = vld [vmem:[#allocation5 + $0xa78] sm:$0xff]
    %v839 = vld [vmem:[#allocation5 + $0xa80] sm:$0xff]
    %v840 = vld [vmem:[#allocation5 + $0xa88] sm:$0xff]
    %v841 = vld [vmem:[#allocation5 + $0xa90] sm:$0xff]
    %v842 = vld [vmem:[#allocation5 + $0xa98] sm:$0xff]
    %v843 = vld [vmem:[#allocation5 + $0xaa0] sm:$0xff]
    %v844 = vld [vmem:[#allocation5 + $0xaa8] sm:$0xff]
    %v845 = vld [vmem:[#allocation5 + $0xab0] sm:$0xff]
    %v846 = vld [vmem:[#allocation5 + $0xab8] sm:$0xff]
    %v847 = vld [vmem:[#allocation5 + $0xac0] sm:$0xff]
    %v848 = vld [vmem:[#allocation5 + $0xac8] sm:$0xff]
    %v849 = vld [vmem:[#allocation5 + $0xad0] sm:$0xff]
    %v850 = vld [vmem:[#allocation5 + $0xad8] sm:$0xff]
    %v851 = vld [vmem:[#allocation5 + $0xae0] sm:$0xff]
    %v852 = vld [vmem:[#allocation5 + $0xae8] sm:$0xff]
    %v853 = vld [vmem:[#allocation5 + $0xaf0] sm:$0xff]
    %v854 = vld [vmem:[#allocation5 + $0xaf8] sm:$0xff]
    %v855 = vld [vmem:[#allocation5 + $0xb00] sm:$0xff]
    %v856 = vld [vmem:[#allocation5 + $0xb08] sm:$0xff]
    %v857 = vld [vmem:[#allocation5 + $0xb10] sm:$0xff]
    %v858 = vld [vmem:[#allocation5 + $0xb18] sm:$0xff]
    %v859 = vld [vmem:[#allocation5 + $0xb20] sm:$0xff]
    %v860 = vld [vmem:[#allocation5 + $0xb28] sm:$0xff]
    %v861 = vld [vmem:[#allocation5 + $0xb30] sm:$0xff]
    %v862 = vld [vmem:[#allocation5 + $0xb38] sm:$0xff]
    %v863 = vld [vmem:[#allocation5 + $0xb40] sm:$0xff]
    %v864 = vld [vmem:[#allocation5 + $0xb48] sm:$0xff]
    %v865 = vld [vmem:[#allocation5 + $0xb50] sm:$0xff]
    %v866 = vld [vmem:[#allocation5 + $0xb58] sm:$0xff]
    %v867 = vld [vmem:[#allocation5 + $0xb60] sm:$0xff]
    %v868 = vld [vmem:[#allocation5 + $0xb68] sm:$0xff]
    %v869 = vld [vmem:[#allocation5 + $0xb70] sm:$0xff]
    %v870 = vld [vmem:[#allocation5 + $0xb78] sm:$0xff]
    %v871 = vld [vmem:[#allocation5 + $0xb80] sm:$0xff]
    %v872 = vld [vmem:[#allocation5 + $0xb88] sm:$0xff]
    %v873 = vld [vmem:[#allocation5 + $0xb90] sm:$0xff]
    %v874 = vld [vmem:[#allocation5 + $0xb98] sm:$0xff]
    %v875 = vld [vmem:[#allocation5 + $0xba0] sm:$0xff]
    %v876 = vld [vmem:[#allocation5 + $0xba8] sm:$0xff]
    %v877 = vld [vmem:[#allocation5 + $0xbb0] sm:$0xff]
    %v878 = vld [vmem:[#allocation5 + $0xbb8] sm:$0xff]
    %v879 = vld [vmem:[#allocation5 + $0xbc0] sm:$0xff]
    %v880 = vld [vmem:[#allocation5 + $0xbc8] sm:$0xff]
    %v881 = vld [vmem:[#allocation5 + $0xbd0] sm:$0xff]
    %v882 = vld [vmem:[#allocation5 + $0xbd8] sm:$0xff]
    %v883 = vld [vmem:[#allocation5 + $0xbe0] sm:$0xff]
    %v884 = vld [vmem:[#allocation5 + $0xbe8] sm:$0xff]
    %v885 = vld [vmem:[#allocation5 + $0xbf0] sm:$0xff]
    %v886 = vld [vmem:[#allocation5 + $0xbf8] sm:$0xff]
    %v887 = vld [vmem:[#allocation5 + $0xc00] sm:$0xff]
    %v888 = vld [vmem:[#allocation5 + $0xc08] sm:$0xff]
    %v889 = vld [vmem:[#allocation5 + $0xc10] sm:$0xff]
    %v890 = vld [vmem:[#allocation5 + $0xc18] sm:$0xff]
    %v891 = vld [vmem:[#allocation5 + $0xc20] sm:$0xff]
    %v892 = vld [vmem:[#allocation5 + $0xc28] sm:$0xff]
    %v893 = vld [vmem:[#allocation5 + $0xc30] sm:$0xff]
    %v894 = vld [vmem:[#allocation5 + $0xc38] sm:$0xff]
    %v895 = vld [vmem:[#allocation5 + $0xc40] sm:$0xff]
    %v896 = vld [vmem:[#allocation5 + $0xc48] sm:$0xff]
    %v897 = vld [vmem:[#allocation5 + $0xc50] sm:$0xff]
    %v898 = vld [vmem:[#allocation5 + $0xc58] sm:$0xff]
    %v899 = vld [vmem:[#allocation5 + $0xc60] sm:$0xff]
    %v900 = vld [vmem:[#allocation5 + $0xc68] sm:$0xff]
    %v901 = vld [vmem:[#allocation5 + $0xc70] sm:$0xff]
    %v902 = vld [vmem:[#allocation5 + $0xc78] sm:$0xff]
    %v903 = vld [vmem:[#allocation5 + $0xc80] sm:$0xff]
    %v904 = vld [vmem:[#allocation5 + $0xc88] sm:$0xff]
    %v905 = vld [vmem:[#allocation5 + $0xc90] sm:$0xff]
    %v906 = vld [vmem:[#allocation5 + $0xc98] sm:$0xff]
    %v907 = vld [vmem:[#allocation5 + $0xca0] sm:$0xff]
    %v908 = vld [vmem:[#allocation5 + $0xca8] sm:$0xff]
    %v909 = vld [vmem:[#allocation5 + $0xcb0] sm:$0xff]
    %v910 = vld [vmem:[#allocation5 + $0xcb8] sm:$0xff]
    %v911 = vld [vmem:[#allocation5 + $0xcc0] sm:$0xff]
    %v912 = vld [vmem:[#allocation5 + $0xcc8] sm:$0xff]
    %v913 = vld [vmem:[#allocation5 + $0xcd0] sm:$0xff]
    %v914 = vld [vmem:[#allocation5 + $0xcd8] sm:$0xff]
    %v915 = vld [vmem:[#allocation5 + $0xce0] sm:$0xff]
    %v916 = vld [vmem:[#allocation5 + $0xce8] sm:$0xff]
    %v917 = vld [vmem:[#allocation5 + $0xcf0] sm:$0xff]
    %v918 = vld [vmem:[#allocation5 + $0xcf8] sm:$0xff]
    %v919 = vld [vmem:[#allocation5 + $0xd00] sm:$0xff]
    %v920 = vld [vmem:[#allocation5 + $0xd08] sm:$0xff]
    %v921 = vld [vmem:[#allocation5 + $0xd10] sm:$0xff]
    %v922 = vld [vmem:[#allocation5 + $0xd18] sm:$0xff]
    %v923 = vld [vmem:[#allocation5 + $0xd20] sm:$0xff]
    %v924 = vld [vmem:[#allocation5 + $0xd28] sm:$0xff]
    %v925 = vld [vmem:[#allocation5 + $0xd30] sm:$0xff]
    %v926 = vld [vmem:[#allocation5 + $0xd38] sm:$0xff]
    %v927 = vld [vmem:[#allocation5 + $0xd40] sm:$0xff]
    %v928 = vld [vmem:[#allocation5 + $0xd48] sm:$0xff]
    %v929 = vld [vmem:[#allocation5 + $0xd50] sm:$0xff]
    %v930 = vld [vmem:[#allocation5 + $0xd58] sm:$0xff]
    %v931 = vld [vmem:[#allocation5 + $0xd60] sm:$0xff]
    %v932 = vld [vmem:[#allocation5 + $0xd68] sm:$0xff]
    %v933 = vld [vmem:[#allocation5 + $0xd70] sm:$0xff]
    %v934 = vld [vmem:[#allocation5 + $0xd78] sm:$0xff]
    %v935 = vld [vmem:[#allocation5 + $0xd80] sm:$0xff]
    %v936 = vld [vmem:[#allocation5 + $0xd88] sm:$0xff]
    %v937 = vld [vmem:[#allocation5 + $0xd90] sm:$0xff]
    %v938 = vld [vmem:[#allocation5 + $0xd98] sm:$0xff]
    %v939 = vld [vmem:[#allocation5 + $0xda0] sm:$0xff]
    %v940 = vld [vmem:[#allocation5 + $0xda8] sm:$0xff]
    %v941 = vld [vmem:[#allocation5 + $0xdb0] sm:$0xff]
    %v942 = vld [vmem:[#allocation5 + $0xdb8] sm:$0xff]
    %v943 = vld [vmem:[#allocation5 + $0xdc0] sm:$0xff]
    %v944 = vld [vmem:[#allocation5 + $0xdc8] sm:$0xff]
    %v945 = vld [vmem:[#allocation5 + $0xdd0] sm:$0xff]
    %v946 = vld [vmem:[#allocation5 + $0xdd8] sm:$0xff]
    %v947 = vld [vmem:[#allocation5 + $0xde0] sm:$0xff]
    %v948 = vld [vmem:[#allocation5 + $0xde8] sm:$0xff]
    %v949 = vld [vmem:[#allocation5 + $0xdf0] sm:$0xff]
    %v950 = vld [vmem:[#allocation5 + $0xdf8] sm:$0xff]
    %v951 = vld [vmem:[#allocation5 + $0xe00] sm:$0xff]
    %v952 = vld [vmem:[#allocation5 + $0xe08] sm:$0xff]
    %v953 = vld [vmem:[#allocation5 + $0xe10] sm:$0xff]
    %v954 = vld [vmem:[#allocation5 + $0xe18] sm:$0xff]
    %v955 = vld [vmem:[#allocation5 + $0xe20] sm:$0xff]
    %v956 = vld [vmem:[#allocation5 + $0xe28] sm:$0xff]
    %v957 = vld [vmem:[#allocation5 + $0xe30] sm:$0xff]
    %v958 = vld [vmem:[#allocation5 + $0xe38] sm:$0xff]
    %v959 = vld [vmem:[#allocation5 + $0xe40] sm:$0xff]
    %v960 = vld [vmem:[#allocation5 + $0xe48] sm:$0xff]
    %v961 = vld [vmem:[#allocation5 + $0xe50] sm:$0xff]
    %v962 = vld [vmem:[#allocation5 + $0xe58] sm:$0xff]
    %v963 = vld [vmem:[#allocation5 + $0xe60] sm:$0xff]
    %v964 = vld [vmem:[#allocation5 + $0xe68] sm:$0xff]
    %v965 = vld [vmem:[#allocation5 + $0xe70] sm:$0xff]
    %v966 = vld [vmem:[#allocation5 + $0xe78] sm:$0xff]
    %v967 = vld [vmem:[#allocation5 + $0xe80] sm:$0xff]
    %v968 = vld [vmem:[#allocation5 + $0xe88] sm:$0xff]
    %v969 = vld [vmem:[#allocation5 + $0xe90] sm:$0xff]
    %v970 = vld [vmem:[#allocation5 + $0xe98] sm:$0xff]
    %v971 = vld [vmem:[#allocation5 + $0xea0] sm:$0xff]
    %v972 = vld [vmem:[#allocation5 + $0xea8] sm:$0xff]
    %v973 = vld [vmem:[#allocation5 + $0xeb0] sm:$0xff]
    %v974 = vld [vmem:[#allocation5 + $0xeb8] sm:$0xff]
    %v975 = vld [vmem:[#allocation5 + $0xec0] sm:$0xff]
    %v976 = vld [vmem:[#allocation5 + $0xec8] sm:$0xff]
    %v977 = vld [vmem:[#allocation5 + $0xed0] sm:$0xff]
    %v978 = vld [vmem:[#allocation5 + $0xed8] sm:$0xff]
    %v979 = vld [vmem:[#allocation5 + $0xee0] sm:$0xff]
    %v980 = vld [vmem:[#allocation5 + $0xee8] sm:$0xff]
    %v981 = vld [vmem:[#allocation5 + $0xef0] sm:$0xff]
    %v982 = vld [vmem:[#allocation5 + $0xef8] sm:$0xff]
    %v983 = vld [vmem:[#allocation5 + $0xf00] sm:$0xff]
    %v984 = vld [vmem:[#allocation5 + $0xf08] sm:$0xff]
    %v985 = vld [vmem:[#allocation5 + $0xf10] sm:$0xff]
    %v986 = vld [vmem:[#allocation5 + $0xf18] sm:$0xff]
    %v987 = vld [vmem:[#allocation5 + $0xf20] sm:$0xff]
    %v988 = vld [vmem:[#allocation5 + $0xf28] sm:$0xff]
    %v989 = vld [vmem:[#allocation5 + $0xf30] sm:$0xff]
    %v990 = vld [vmem:[#allocation5 + $0xf38] sm:$0xff]
    %v991 = vld [vmem:[#allocation5 + $0xf40] sm:$0xff]
    %v992 = vld [vmem:[#allocation5 + $0xf48] sm:$0xff]
    %v993 = vld [vmem:[#allocation5 + $0xf50] sm:$0xff]
    %v994 = vld [vmem:[#allocation5 + $0xf58] sm:$0xff]
    %v995 = vld [vmem:[#allocation5 + $0xf60] sm:$0xff]
    %v996 = vld [vmem:[#allocation5 + $0xf68] sm:$0xff]
    %v997 = vld [vmem:[#allocation5 + $0xf70] sm:$0xff]
    %v998 = vld [vmem:[#allocation5 + $0xf78] sm:$0xff]
    %v999 = vld [vmem:[#allocation5 + $0xf80] sm:$0xff]
    %v1000 = vld [vmem:[#allocation5 + $0xf88] sm:$0xff]
    %v1001 = vld [vmem:[#allocation5 + $0xf90] sm:$0xff]
    %v1002 = vld [vmem:[#allocation5 + $0xf98] sm:$0xff]
    %v1003 = vld [vmem:[#allocation5 + $0xfa0] sm:$0xff]
    %v1004 = vld [vmem:[#allocation5 + $0xfa8] sm:$0xff]
    %v1005 = vld [vmem:[#allocation5 + $0xfb0] sm:$0xff]
    %v1006 = vld [vmem:[#allocation5 + $0xfb8] sm:$0xff]
    %v1007 = vld [vmem:[#allocation5 + $0xfc0] sm:$0xff]
    %v1008 = vld [vmem:[#allocation5 + $0xfc8] sm:$0xff]
    %v1009 = vld [vmem:[#allocation5 + $0xfd0] sm:$0xff]
    %v1010 = vld [vmem:[#allocation5 + $0xfd8] sm:$0xff]
    %v1011 = vld [vmem:[#allocation5 + $0xfe0] sm:$0xff]
    %v1012 = vld [vmem:[#allocation5 + $0xfe8] sm:$0xff]
    %v1013 = vld [vmem:[#allocation5 + $0xff0] sm:$0xff]
    %v1014 = vld [vmem:[#allocation5 + $0xff8] sm:$0xff]
    %v1015 = vld [vmem:[#allocation5 + $0x1000] sm:$0xff]
    %v1016 = vld [vmem:[#allocation5 + $0x1008] sm:$0xff]
    %v1017 = vld [vmem:[#allocation5 + $0x1010] sm:$0xff]
    %v1018 = vld [vmem:[#allocation5 + $0x1018] sm:$0xff]
    %v1019 = vld [vmem:[#allocation5 + $0x1020] sm:$0xff]
    %v1020 = vld [vmem:[#allocation5 + $0x1028] sm:$0xff]
    %v1021 = vld [vmem:[#allocation5 + $0x1030] sm:$0xff]
    %v1022 = vld [vmem:[#allocation5 + $0x1038] sm:$0xff]
    %v1023 = vld [vmem:[#allocation5 + $0x1040] sm:$0xff]
    %v1024 = vld [vmem:[#allocation5 + $0x1048] sm:$0xff]
    %v1025 = vld [vmem:[#allocation5 + $0x1050] sm:$0xff]
    %v1026 = vld [vmem:[#allocation5 + $0x1058] sm:$0xff]
    %v1027 = vld [vmem:[#allocation5 + $0x1060] sm:$0xff]
    %v1028 = vld [vmem:[#allocation5 + $0x1068] sm:$0xff]
    %v1029 = vld [vmem:[#allocation5 + $0x1070] sm:$0xff]
    %v1030 = vld [vmem:[#allocation5 + $0x1078] sm:$0xff]
    %v1031 = vld [vmem:[#allocation5 + $0x1080] sm:$0xff]
    %v1032 = vld [vmem:[#allocation5 + $0x1088] sm:$0xff]
    %v1033 = vld [vmem:[#allocation5 + $0x1090] sm:$0xff]
    %v1034 = vld [vmem:[#allocation5 + $0x1098] sm:$0xff]
    %v1035 = vld [vmem:[#allocation5 + $0x10a0] sm:$0xff]
    %v1036 = vld [vmem:[#allocation5 + $0x10a8] sm:$0xff]
    %v1037 = vld [vmem:[#allocation5 + $0x10b0] sm:$0xff]
    %v1038 = vld [vmem:[#allocation5 + $0x10b8] sm:$0xff]
    %v1039 = vld [vmem:[#allocation5 + $0x10c0] sm:$0xff]
    %v1040 = vld [vmem:[#allocation5 + $0x10c8] sm:$0xff]
    %v1041 = vld [vmem:[#allocation5 + $0x10d0] sm:$0xff]
    %v1042 = vld [vmem:[#allocation5 + $0x10d8] sm:$0xff]
    %v1043 = vld [vmem:[#allocation5 + $0x10e0] sm:$0xff]
    %v1044 = vld [vmem:[#allocation5 + $0x10e8] sm:$0xff]
    %v1045 = vld [vmem:[#allocation5 + $0x10f0] sm:$0xff]
    %v1046 = vld [vmem:[#allocation5 + $0x10f8] sm:$0xff]
    %v1047 = vld [vmem:[#allocation5 + $0x1100] sm:$0xff]
    %v1048 = vld [vmem:[#allocation5 + $0x1108] sm:$0xff]
    %v1049 = vld [vmem:[#allocation5 + $0x1110] sm:$0xff]
    %v1050 = vld [vmem:[#allocation5 + $0x1118] sm:$0xff]
    %v1051 = vld [vmem:[#allocation5 + $0x1120] sm:$0xff]
    %v1052 = vld [vmem:[#allocation5 + $0x1128] sm:$0xff]
    %v1053 = vld [vmem:[#allocation5 + $0x1130] sm:$0xff]
    %v1054 = vld [vmem:[#allocation5 + $0x1138] sm:$0xff]
    %v1055 = vld [vmem:[#allocation5 + $0x1140] sm:$0xff]
    %v1056 = vld [vmem:[#allocation5 + $0x1148] sm:$0xff]
    %v1057 = vld [vmem:[#allocation5 + $0x1150] sm:$0xff]
    %v1058 = vld [vmem:[#allocation5 + $0x1158] sm:$0xff]
    %v1059 = vld [vmem:[#allocation5 + $0x1160] sm:$0xff]
    %v1060 = vld [vmem:[#allocation5 + $0x1168] sm:$0xff]
    %v1061 = vld [vmem:[#allocation5 + $0x1170] sm:$0xff]
    %v1062 = vld [vmem:[#allocation5 + $0x1178] sm:$0xff]
    %v1063 = vld [vmem:[#allocation5 + $0x1180] sm:$0xff]
    %v1064 = vld [vmem:[#allocation5 + $0x1188] sm:$0xff]
    %v1065 = vld [vmem:[#allocation5 + $0x1190] sm:$0xff]
    %v1066 = vld [vmem:[#allocation5 + $0x1198] sm:$0xff]
    %v1067 = vld [vmem:[#allocation5 + $0x11a0] sm:$0xff]
    %v1068 = vld [vmem:[#allocation5 + $0x11a8] sm:$0xff]
    %v1069 = vld [vmem:[#allocation5 + $0x11b0] sm:$0xff]
    %v1070 = vld [vmem:[#allocation5 + $0x11b8] sm:$0xff]
    %v1071 = vld [vmem:[#allocation5 + $0x11c0] sm:$0xff]
    %v1072 = vld [vmem:[#allocation5 + $0x11c8] sm:$0xff]
    %v1073 = vld [vmem:[#allocation5 + $0x11d0] sm:$0xff]
    %v1074 = vld [vmem:[#allocation5 + $0x11d8] sm:$0xff]
    %v1075 = vld [vmem:[#allocation5 + $0x11e0] sm:$0xff]
    %v1076 = vld [vmem:[#allocation5 + $0x11e8] sm:$0xff]
    %v1077 = vld [vmem:[#allocation5 + $0x11f0] sm:$0xff]
    %v1078 = vld [vmem:[#allocation5 + $0x11f8] sm:$0xff]
    %v1079 = vld [vmem:[#allocation5 + $0x1200] sm:$0xff]
    %v1080 = vld [vmem:[#allocation5 + $0x1208] sm:$0xff]
    %v1081 = vld [vmem:[#allocation5 + $0x1210] sm:$0xff]
    %v1082 = vld [vmem:[#allocation5 + $0x1218] sm:$0xff]
    %v1083 = vld [vmem:[#allocation5 + $0x1220] sm:$0xff]
    %v1084 = vld [vmem:[#allocation5 + $0x1228] sm:$0xff]
    %v1085 = vld [vmem:[#allocation5 + $0x1230] sm:$0xff]
    %v1086 = vld [vmem:[#allocation5 + $0x1238] sm:$0xff]
    %v1087 = vld [vmem:[#allocation5 + $0x1240] sm:$0xff]
    %v1088 = vld [vmem:[#allocation5 + $0x1248] sm:$0xff]
    %v1089 = vld [vmem:[#allocation5 + $0x1250] sm:$0xff]
    %v1090 = vld [vmem:[#allocation5 + $0x1258] sm:$0xff]
    %v1091 = vld [vmem:[#allocation5 + $0x1260] sm:$0xff]
    %v1092 = vld [vmem:[#allocation5 + $0x1268] sm:$0xff]
    %v1093 = vld [vmem:[#allocation5 + $0x1270] sm:$0xff]
    %v1094 = vld [vmem:[#allocation5 + $0x1278] sm:$0xff]
    %v1095 = vld [vmem:[#allocation5 + $0x1280] sm:$0xff]
    %v1096 = vld [vmem:[#allocation5 + $0x1288] sm:$0xff]
    %v1097 = vld [vmem:[#allocation5 + $0x1290] sm:$0xff]
    %v1098 = vld [vmem:[#allocation5 + $0x1298] sm:$0xff]
    %v1099 = vld [vmem:[#allocation5 + $0x12a0] sm:$0xff]
    %v1100 = vld [vmem:[#allocation5 + $0x12a8] sm:$0xff]
    %v1101 = vld [vmem:[#allocation5 + $0x12b0] sm:$0xff]
    %v1102 = vld [vmem:[#allocation5 + $0x12b8] sm:$0xff]
    %v1103 = vld [vmem:[#allocation5 + $0x12c0] sm:$0xff]
    %v1104 = vld [vmem:[#allocation5 + $0x12c8] sm:$0xff]
    %v1105 = vld [vmem:[#allocation5 + $0x12d0] sm:$0xff]
    %v1106 = vld [vmem:[#allocation5 + $0x12d8] sm:$0xff]
    %v1107 = vld [vmem:[#allocation5 + $0x12e0] sm:$0xff]
    %v1108 = vld [vmem:[#allocation5 + $0x12e8] sm:$0xff]
    %v1109 = vld [vmem:[#allocation5 + $0x12f0] sm:$0xff]
    %v1110 = vld [vmem:[#allocation5 + $0x12f8] sm:$0xff]
    %v1111 = vld [vmem:[#allocation5 + $0x1300] sm:$0xff]
    %v1112 = vld [vmem:[#allocation5 + $0x1308] sm:$0xff]
    %v1113 = vld [vmem:[#allocation5 + $0x1310] sm:$0xff]
    %v1114 = vld [vmem:[#allocation5 + $0x1318] sm:$0xff]
    %v1115 = vld [vmem:[#allocation5 + $0x1320] sm:$0xff]
    %v1116 = vld [vmem:[#allocation5 + $0x1328] sm:$0xff]
    %v1117 = vld [vmem:[#allocation5 + $0x1330] sm:$0xff]
    %v1118 = vld [vmem:[#allocation5 + $0x1338] sm:$0xff]
    %v1119 = vld [vmem:[#allocation5 + $0x1340] sm:$0xff]
    %v1120 = vld [vmem:[#allocation5 + $0x1348] sm:$0xff]
    %v1121 = vld [vmem:[#allocation5 + $0x1350] sm:$0xff]
    %v1122 = vld [vmem:[#allocation5 + $0x1358] sm:$0xff]
    %v1123 = vld [vmem:[#allocation5 + $0x1360] sm:$0xff]
    %v1124 = vld [vmem:[#allocation5 + $0x1368] sm:$0xff]
    %v1125 = vld [vmem:[#allocation5 + $0x1370] sm:$0xff]
    %v1126 = vld [vmem:[#allocation5 + $0x1378] sm:$0xff]
    %v1127 = vld [vmem:[#allocation5 + $0x1380] sm:$0xff]
    %v1128 = vld [vmem:[#allocation5 + $0x1388] sm:$0xff]
    %v1129 = vld [vmem:[#allocation5 + $0x1390] sm:$0xff]
    %v1130 = vld [vmem:[#allocation5 + $0x1398] sm:$0xff]
    %v1131 = vld [vmem:[#allocation5 + $0x13a0] sm:$0xff]
    %v1132 = vld [vmem:[#allocation5 + $0x13a8] sm:$0xff]
    %v1133 = vld [vmem:[#allocation5 + $0x13b0] sm:$0xff]
    %v1134 = vld [vmem:[#allocation5 + $0x13b8] sm:$0xff]
    %v1135 = vld [vmem:[#allocation5 + $0x13c0] sm:$0xff]
    %v1136 = vld [vmem:[#allocation5 + $0x13c8] sm:$0xff]
    %v1137 = vld [vmem:[#allocation5 + $0x13d0] sm:$0xff]
    %v1138 = vld [vmem:[#allocation5 + $0x13d8] sm:$0xff]
    %v1139 = vld [vmem:[#allocation5 + $0x13e0] sm:$0xff]
    %v1140 = vld [vmem:[#allocation5 + $0x13e8] sm:$0xff]
    %v1141 = vld [vmem:[#allocation5 + $0x13f0] sm:$0xff]
    %v1142 = vld [vmem:[#allocation5 + $0x13f8] sm:$0xff]
    %v1143 = vld [vmem:[#allocation5 + $0x1400] sm:$0xff]
    %v1144 = vld [vmem:[#allocation5 + $0x1408] sm:$0xff]
    %v1145 = vld [vmem:[#allocation5 + $0x1410] sm:$0xff]
    %v1146 = vld [vmem:[#allocation5 + $0x1418] sm:$0xff]
    %v1147 = vld [vmem:[#allocation5 + $0x1420] sm:$0xff]
    %v1148 = vld [vmem:[#allocation5 + $0x1428] sm:$0xff]
    %v1149 = vld [vmem:[#allocation5 + $0x1430] sm:$0xff]
    %v1150 = vld [vmem:[#allocation5 + $0x1438] sm:$0xff]
    %v1151 = vld [vmem:[#allocation5 + $0x1440] sm:$0xff]
    %v1152 = vld [vmem:[#allocation5 + $0x1448] sm:$0xff]
    %v1153 = vld [vmem:[#allocation5 + $0x1450] sm:$0xff]
    %v1154 = vld [vmem:[#allocation5 + $0x1458] sm:$0xff]
    %v1155 = vld [vmem:[#allocation5 + $0x1460] sm:$0xff]
    %v1156 = vld [vmem:[#allocation5 + $0x1468] sm:$0xff]
    %v1157 = vld [vmem:[#allocation5 + $0x1470] sm:$0xff]
    %v1158 = vld [vmem:[#allocation5 + $0x1478] sm:$0xff]
    %v1159 = vld [vmem:[#allocation5 + $0x1480] sm:$0xff]
    %v1160 = vld [vmem:[#allocation5 + $0x1488] sm:$0xff]
    %v1161 = vld [vmem:[#allocation5 + $0x1490] sm:$0xff]
    %v1162 = vld [vmem:[#allocation5 + $0x1498] sm:$0xff]
    %v1163 = vld [vmem:[#allocation5 + $0x14a0] sm:$0xff]
    %v1164 = vld [vmem:[#allocation5 + $0x14a8] sm:$0xff]
    %v1165 = vld [vmem:[#allocation5 + $0x14b0] sm:$0xff]
    %v1166 = vld [vmem:[#allocation5 + $0x14b8] sm:$0xff]
    %v1167 = vld [vmem:[#allocation5 + $0x14c0] sm:$0xff]
    %v1168 = vld [vmem:[#allocation5 + $0x14c8] sm:$0xff]
    %v1169 = vld [vmem:[#allocation5 + $0x14d0] sm:$0xff]
    %v1170 = vld [vmem:[#allocation5 + $0x14d8] sm:$0xff]
    %v1171 = vld [vmem:[#allocation5 + $0x14e0] sm:$0xff]
    %v1172 = vld [vmem:[#allocation5 + $0x14e8] sm:$0xff]
    %v1173 = vld [vmem:[#allocation5 + $0x14f0] sm:$0xff]
    %v1174 = vld [vmem:[#allocation5 + $0x14f8] sm:$0xff]
    %v1175 = vld [vmem:[#allocation5 + $0x1500] sm:$0xff]
    %v1176 = vld [vmem:[#allocation5 + $0x1508] sm:$0xff]
    %v1177 = vld [vmem:[#allocation5 + $0x1510] sm:$0xff]
    %v1178 = vld [vmem:[#allocation5 + $0x1518] sm:$0xff]
    %v1179 = vld [vmem:[#allocation5 + $0x1520] sm:$0xff]
    %v1180 = vld [vmem:[#allocation5 + $0x1528] sm:$0xff]
    %v1181 = vld [vmem:[#allocation5 + $0x1530] sm:$0xff]
    %v1182 = vld [vmem:[#allocation5 + $0x1538] sm:$0xff]
    %v1183 = vld [vmem:[#allocation5 + $0x1540] sm:$0xff]
    %v1184 = vld [vmem:[#allocation5 + $0x1548] sm:$0xff]
    %v1185 = vld [vmem:[#allocation5 + $0x1550] sm:$0xff]
    %v1186 = vld [vmem:[#allocation5 + $0x1558] sm:$0xff]
    %v1187 = vld [vmem:[#allocation5 + $0x1560] sm:$0xff]
    %v1188 = vld [vmem:[#allocation5 + $0x1568] sm:$0xff]
    %v1189 = vld [vmem:[#allocation5 + $0x1570] sm:$0xff]
    %v1190 = vld [vmem:[#allocation5 + $0x1578] sm:$0xff]
    %v1191 = vld [vmem:[#allocation5 + $0x1580] sm:$0xff]
    %v1192 = vld [vmem:[#allocation5 + $0x1588] sm:$0xff]
    %v1193 = vld [vmem:[#allocation5 + $0x1590] sm:$0xff]
    %v1194 = vld [vmem:[#allocation5 + $0x1598] sm:$0xff]
    %v1195 = vld [vmem:[#allocation5 + $0x15a0] sm:$0xff]
    %v1196 = vld [vmem:[#allocation5 + $0x15a8] sm:$0xff]
    %v1197 = vld [vmem:[#allocation5 + $0x15b0] sm:$0xff]
    %v1198 = vld [vmem:[#allocation5 + $0x15b8] sm:$0xff]
    %v1199 = vld [vmem:[#allocation5 + $0x15c0] sm:$0xff]
    %v1200 = vld [vmem:[#allocation5 + $0x15c8] sm:$0xff]
    %v1201 = vld [vmem:[#allocation5 + $0x15d0] sm:$0xff]
    %v1202 = vld [vmem:[#allocation5 + $0x15d8] sm:$0xff]
    %v1203 = vld [vmem:[#allocation5 + $0x15e0] sm:$0xff]
    %v1204 = vld [vmem:[#allocation5 + $0x15e8] sm:$0xff]
    %v1205 = vld [vmem:[#allocation5 + $0x15f0] sm:$0xff]
    %v1206 = vld [vmem:[#allocation5 + $0x15f8] sm:$0xff]
    %v1207 = vld [vmem:[#allocation5 + $0x1600] sm:$0xff]
    %v1208 = vld [vmem:[#allocation5 + $0x1608] sm:$0xff]
    %v1209 = vld [vmem:[#allocation5 + $0x1610] sm:$0xff]
    %v1210 = vld [vmem:[#allocation5 + $0x1618] sm:$0xff]
    %v1211 = vld [vmem:[#allocation5 + $0x1620] sm:$0xff]
    %v1212 = vld [vmem:[#allocation5 + $0x1628] sm:$0xff]
    %v1213 = vld [vmem:[#allocation5 + $0x1630] sm:$0xff]
    %v1214 = vld [vmem:[#allocation5 + $0x1638] sm:$0xff]
    %v1215 = vld [vmem:[#allocation5 + $0x1640] sm:$0xff]
    %v1216 = vld [vmem:[#allocation5 + $0x1648] sm:$0xff]
    %v1217 = vld [vmem:[#allocation5 + $0x1650] sm:$0xff]
    %v1218 = vld [vmem:[#allocation5 + $0x1658] sm:$0xff]
    %v1219 = vld [vmem:[#allocation5 + $0x1660] sm:$0xff]
    %v1220 = vld [vmem:[#allocation5 + $0x1668] sm:$0xff]
    %v1221 = vld [vmem:[#allocation5 + $0x1670] sm:$0xff]
    %v1222 = vld [vmem:[#allocation5 + $0x1678] sm:$0xff]
    %v1223 = vld [vmem:[#allocation5 + $0x1680] sm:$0xff]
    %v1224 = vld [vmem:[#allocation5 + $0x1688] sm:$0xff]
    %v1225 = vld [vmem:[#allocation5 + $0x1690] sm:$0xff]
    %v1226 = vld [vmem:[#allocation5 + $0x1698] sm:$0xff]
    %v1227 = vld [vmem:[#allocation5 + $0x16a0] sm:$0xff]
    %v1228 = vld [vmem:[#allocation5 + $0x16a8] sm:$0xff]
    %v1229 = vld [vmem:[#allocation5 + $0x16b0] sm:$0xff]
    %v1230 = vld [vmem:[#allocation5 + $0x16b8] sm:$0xff]
    %v1231 = vld [vmem:[#allocation5 + $0x16c0] sm:$0xff]
    %v1232 = vld [vmem:[#allocation5 + $0x16c8] sm:$0xff]
    %v1233 = vld [vmem:[#allocation5 + $0x16d0] sm:$0xff]
    %v1234 = vld [vmem:[#allocation5 + $0x16d8] sm:$0xff]
    %v1235 = vld [vmem:[#allocation5 + $0x16e0] sm:$0xff]
    %v1236 = vld [vmem:[#allocation5 + $0x16e8] sm:$0xff]
    %v1237 = vld [vmem:[#allocation5 + $0x16f0] sm:$0xff]
    %v1238 = vld [vmem:[#allocation5 + $0x16f8] sm:$0xff]
    %v1239 = vld [vmem:[#allocation5 + $0x1700] sm:$0xff]
    %v1240 = vld [vmem:[#allocation5 + $0x1708] sm:$0xff]
    %v1241 = vld [vmem:[#allocation5 + $0x1710] sm:$0xff]
    %v1242 = vld [vmem:[#allocation5 + $0x1718] sm:$0xff]
    %v1243 = vld [vmem:[#allocation5 + $0x1720] sm:$0xff]
    %v1244 = vld [vmem:[#allocation5 + $0x1728] sm:$0xff]
    %v1245 = vld [vmem:[#allocation5 + $0x1730] sm:$0xff]
    %v1246 = vld [vmem:[#allocation5 + $0x1738] sm:$0xff]
    %v1247 = vld [vmem:[#allocation5 + $0x1740] sm:$0xff]
    %v1248 = vld [vmem:[#allocation5 + $0x1748] sm:$0xff]
    %v1249 = vld [vmem:[#allocation5 + $0x1750] sm:$0xff]
    %v1250 = vld [vmem:[#allocation5 + $0x1758] sm:$0xff]
    %v1251 = vld [vmem:[#allocation5 + $0x1760] sm:$0xff]
    %v1252 = vld [vmem:[#allocation5 + $0x1768] sm:$0xff]
    %v1253 = vld [vmem:[#allocation5 + $0x1770] sm:$0xff]
    %v1254 = vld [vmem:[#allocation5 + $0x1778] sm:$0xff]
    %v1255 = vld [vmem:[#allocation5 + $0x1780] sm:$0xff]
    %v1256 = vld [vmem:[#allocation5 + $0x1788] sm:$0xff]
    %v1257 = vld [vmem:[#allocation5 + $0x1790] sm:$0xff]
    %v1258 = vld [vmem:[#allocation5 + $0x1798] sm:$0xff]
    %v1259 = vld [vmem:[#allocation5 + $0x17a0] sm:$0xff]
    %v1260 = vld [vmem:[#allocation5 + $0x17a8] sm:$0xff]
    %v1261 = vld [vmem:[#allocation5 + $0x17b0] sm:$0xff]
    %v1262 = vld [vmem:[#allocation5 + $0x17b8] sm:$0xff]
    %v1263 = vld [vmem:[#allocation5 + $0x17c0] sm:$0xff]
    %v1264 = vld [vmem:[#allocation5 + $0x17c8] sm:$0xff]
    %v1265 = vld [vmem:[#allocation5 + $0x17d0] sm:$0xff]
    %v1266 = vld [vmem:[#allocation5 + $0x17d8] sm:$0xff]
    %v1267 = vld [vmem:[#allocation5 + $0x17e0] sm:$0xff]
    %v1268 = vld [vmem:[#allocation5 + $0x17e8] sm:$0xff]
    %v1269 = vld [vmem:[#allocation5 + $0x17f0] sm:$0xff]
    %v1270 = vld [vmem:[#allocation5 + $0x17f8] sm:$0xff]
    %v1271 = vld [vmem:[#allocation5 + $0x1800] sm:$0xff]
    %v1272 = vld [vmem:[#allocation5 + $0x1808] sm:$0xff]
    %v1273 = vld [vmem:[#allocation5 + $0x1810] sm:$0xff]
    %v1274 = vld [vmem:[#allocation5 + $0x1818] sm:$0xff]
    %v1275 = vld [vmem:[#allocation5 + $0x1820] sm:$0xff]
    %v1276 = vld [vmem:[#allocation5 + $0x1828] sm:$0xff]
    %v1277 = vld [vmem:[#allocation5 + $0x1830] sm:$0xff]
    %v1278 = vld [vmem:[#allocation5 + $0x1838] sm:$0xff]
    %v1279 = vld [vmem:[#allocation5 + $0x1840] sm:$0xff]
    %v1280 = vld [vmem:[#allocation5 + $0x1848] sm:$0xff]
    %v1281 = vld [vmem:[#allocation5 + $0x1850] sm:$0xff]
    %v1282 = vld [vmem:[#allocation5 + $0x1858] sm:$0xff]
    %v1283 = vld [vmem:[#allocation5 + $0x1860] sm:$0xff]
    %v1284 = vld [vmem:[#allocation5 + $0x1868] sm:$0xff]
    %v1285 = vld [vmem:[#allocation5 + $0x1870] sm:$0xff]
    %v1286 = vld [vmem:[#allocation5 + $0x1878] sm:$0xff]
    %v1287 = vld [vmem:[#allocation5 + $0x1880] sm:$0xff]
    %v1288 = vld [vmem:[#allocation5 + $0x1888] sm:$0xff]
    %v1289 = vld [vmem:[#allocation5 + $0x1890] sm:$0xff]
    %v1290 = vld [vmem:[#allocation5 + $0x1898] sm:$0xff]
    %v1291 = vld [vmem:[#allocation5 + $0x18a0] sm:$0xff]
    %v1292 = vld [vmem:[#allocation5 + $0x18a8] sm:$0xff]
    %v1293 = vld [vmem:[#allocation5 + $0x18b0] sm:$0xff]
    %v1294 = vld [vmem:[#allocation5 + $0x18b8] sm:$0xff]
    %v1295 = vld [vmem:[#allocation5 + $0x18c0] sm:$0xff]
    %v1296 = vld [vmem:[#allocation5 + $0x18c8] sm:$0xff]
    %v1297 = vld [vmem:[#allocation5 + $0x18d0] sm:$0xff]
    %v1298 = vld [vmem:[#allocation5 + $0x18d8] sm:$0xff]
    %v1299 = vld [vmem:[#allocation5 + $0x18e0] sm:$0xff]
    %v1300 = vld [vmem:[#allocation5 + $0x18e8] sm:$0xff]
    %v1301 = vld [vmem:[#allocation5 + $0x18f0] sm:$0xff]
    %v1302 = vld [vmem:[#allocation5 + $0x18f8] sm:$0xff]
    %v1303 = vld [vmem:[#allocation5 + $0x1900] sm:$0xff]
    %v1304 = vld [vmem:[#allocation5 + $0x1908] sm:$0xff]
    %v1305 = vld [vmem:[#allocation5 + $0x1910] sm:$0xff]
    %v1306 = vld [vmem:[#allocation5 + $0x1918] sm:$0xff]
    %v1307 = vld [vmem:[#allocation5 + $0x1920] sm:$0xff]
    %v1308 = vld [vmem:[#allocation5 + $0x1928] sm:$0xff]
    %v1309 = vld [vmem:[#allocation5 + $0x1930] sm:$0xff]
    %v1310 = vld [vmem:[#allocation5 + $0x1938] sm:$0xff]
    %v1311 = vld [vmem:[#allocation5 + $0x1940] sm:$0xff]
    %v1312 = vld [vmem:[#allocation5 + $0x1948] sm:$0xff]
    %v1313 = vld [vmem:[#allocation5 + $0x1950] sm:$0xff]
    %v1314 = vld [vmem:[#allocation5 + $0x1958] sm:$0xff]
    %v1315 = vld [vmem:[#allocation5 + $0x1960] sm:$0xff]
    %v1316 = vld [vmem:[#allocation5 + $0x1968] sm:$0xff]
    %v1317 = vld [vmem:[#allocation5 + $0x1970] sm:$0xff]
    %v1318 = vld [vmem:[#allocation5 + $0x1978] sm:$0xff]
    %v1319 = vld [vmem:[#allocation5 + $0x1980] sm:$0xff]
    %v1320 = vld [vmem:[#allocation5 + $0x1988] sm:$0xff]
    %v1321 = vld [vmem:[#allocation5 + $0x1990] sm:$0xff]
    %v1322 = vld [vmem:[#allocation5 + $0x1998] sm:$0xff]
    %v1323 = vld [vmem:[#allocation5 + $0x19a0] sm:$0xff]
    %v1324 = vld [vmem:[#allocation5 + $0x19a8] sm:$0xff]
    %v1325 = vld [vmem:[#allocation5 + $0x19b0] sm:$0xff]
    %v1326 = vld [vmem:[#allocation5 + $0x19b8] sm:$0xff]
    %v1327 = vld [vmem:[#allocation5 + $0x19c0] sm:$0xff]
    %v1328 = vld [vmem:[#allocation5 + $0x19c8] sm:$0xff]
    %v1329 = vld [vmem:[#allocation5 + $0x19d0] sm:$0xff]
    %v1330 = vld [vmem:[#allocation5 + $0x19d8] sm:$0xff]
    %v1331 = vld [vmem:[#allocation5 + $0x19e0] sm:$0xff]
    %v1332 = vld [vmem:[#allocation5 + $0x19e8] sm:$0xff]
    %v1333 = vld [vmem:[#allocation5 + $0x19f0] sm:$0xff]
    %v1334 = vld [vmem:[#allocation5 + $0x19f8] sm:$0xff]
    %v1335 = vld [vmem:[#allocation5 + $0x1a00] sm:$0xff]
    %v1336 = vld [vmem:[#allocation5 + $0x1a08] sm:$0xff]
    %v1337 = vld [vmem:[#allocation5 + $0x1a10] sm:$0xff]
    %v1338 = vld [vmem:[#allocation5 + $0x1a18] sm:$0xff]
    %v1339 = vld [vmem:[#allocation5 + $0x1a20] sm:$0xff]
    %v1340 = vld [vmem:[#allocation5 + $0x1a28] sm:$0xff]
    %v1341 = vld [vmem:[#allocation5 + $0x1a30] sm:$0xff]
    %v1342 = vld [vmem:[#allocation5 + $0x1a38] sm:$0xff]
    %v1343 = vld [vmem:[#allocation5 + $0x1a40] sm:$0xff]
    %v1344 = vld [vmem:[#allocation5 + $0x1a48] sm:$0xff]
    %v1345 = vld [vmem:[#allocation5 + $0x1a50] sm:$0xff]
    %v1346 = vld [vmem:[#allocation5 + $0x1a58] sm:$0xff]
    %v1347 = vld [vmem:[#allocation5 + $0x1a60] sm:$0xff]
    %v1348 = vld [vmem:[#allocation5 + $0x1a68] sm:$0xff]
    %v1349 = vld [vmem:[#allocation5 + $0x1a70] sm:$0xff]
    %v1350 = vld [vmem:[#allocation5 + $0x1a78] sm:$0xff]
    %v1351 = vld [vmem:[#allocation5 + $0x1a80] sm:$0xff]
    %v1352 = vld [vmem:[#allocation5 + $0x1a88] sm:$0xff]
    %v1353 = vld [vmem:[#allocation5 + $0x1a90] sm:$0xff]
    %v1354 = vld [vmem:[#allocation5 + $0x1a98] sm:$0xff]
    %v1355 = vld [vmem:[#allocation5 + $0x1aa0] sm:$0xff]
    %v1356 = vld [vmem:[#allocation5 + $0x1aa8] sm:$0xff]
    %v1357 = vld [vmem:[#allocation5 + $0x1ab0] sm:$0xff]
    %v1358 = vld [vmem:[#allocation5 + $0x1ab8] sm:$0xff]
    %v1359 = vld [vmem:[#allocation5 + $0x1ac0] sm:$0xff]
    %v1360 = vld [vmem:[#allocation5 + $0x1ac8] sm:$0xff]
    %v1361 = vld [vmem:[#allocation5 + $0x1ad0] sm:$0xff]
    %v1362 = vld [vmem:[#allocation5 + $0x1ad8] sm:$0xff]
    %v1363 = vld [vmem:[#allocation5 + $0x1ae0] sm:$0xff]
    %v1364 = vld [vmem:[#allocation5 + $0x1ae8] sm:$0xff]
    %v1365 = vld [vmem:[#allocation5 + $0x1af0] sm:$0xff]
    %v1366 = vld [vmem:[#allocation5 + $0x1af8] sm:$0xff]
    %v1367 = vld [vmem:[#allocation5 + $0x1b00] sm:$0xff]
    %v1368 = vld [vmem:[#allocation5 + $0x1b08] sm:$0xff]
    %v1369 = vld [vmem:[#allocation5 + $0x1b10] sm:$0xff]
    %v1370 = vld [vmem:[#allocation5 + $0x1b18] sm:$0xff]
    %v1371 = vld [vmem:[#allocation5 + $0x1b20] sm:$0xff]
    %v1372 = vld [vmem:[#allocation5 + $0x1b28] sm:$0xff]
    %v1373 = vld [vmem:[#allocation5 + $0x1b30] sm:$0xff]
    %v1374 = vld [vmem:[#allocation5 + $0x1b38] sm:$0xff]
    %v1375 = vld [vmem:[#allocation5 + $0x1b40] sm:$0xff]
    %v1376 = vld [vmem:[#allocation5 + $0x1b48] sm:$0xff]
    %v1377 = vld [vmem:[#allocation5 + $0x1b50] sm:$0xff]
    %v1378 = vld [vmem:[#allocation5 + $0x1b58] sm:$0xff]
    %v1379 = vld [vmem:[#allocation5 + $0x1b60] sm:$0xff]
    %v1380 = vld [vmem:[#allocation5 + $0x1b68] sm:$0xff]
    %v1381 = vld [vmem:[#allocation5 + $0x1b70] sm:$0xff]
    %v1382 = vld [vmem:[#allocation5 + $0x1b78] sm:$0xff]
    %v1383 = vld [vmem:[#allocation5 + $0x1b80] sm:$0xff]
    %v1384 = vld [vmem:[#allocation5 + $0x1b88] sm:$0xff]
    %v1385 = vld [vmem:[#allocation5 + $0x1b90] sm:$0xff]
    %v1386 = vld [vmem:[#allocation5 + $0x1b98] sm:$0xff]
    %v1387 = vld [vmem:[#allocation5 + $0x1ba0] sm:$0xff]
    %v1388 = vld [vmem:[#allocation5 + $0x1ba8] sm:$0xff]
    %v1389 = vld [vmem:[#allocation5 + $0x1bb0] sm:$0xff]
    %v1390 = vld [vmem:[#allocation5 + $0x1bb8] sm:$0xff]
    %v1391 = vld [vmem:[#allocation5 + $0x1bc0] sm:$0xff]
    %v1392 = vld [vmem:[#allocation5 + $0x1bc8] sm:$0xff]
    %v1393 = vld [vmem:[#allocation5 + $0x1bd0] sm:$0xff]
    %v1394 = vld [vmem:[#allocation5 + $0x1bd8] sm:$0xff]
    %v1395 = vld [vmem:[#allocation5 + $0x1be0] sm:$0xff]
    %v1396 = vld [vmem:[#allocation5 + $0x1be8] sm:$0xff]
    %v1397 = vld [vmem:[#allocation5 + $0x1bf0] sm:$0xff]
    %v1398 = vld [vmem:[#allocation5 + $0x1bf8] sm:$0xff]
    %v1399 = vld [vmem:[#allocation5 + $0x1c00] sm:$0xff]
    %v1400 = vld [vmem:[#allocation5 + $0x1c08] sm:$0xff]
    %v1401 = vld [vmem:[#allocation5 + $0x1c10] sm:$0xff]
    %v1402 = vld [vmem:[#allocation5 + $0x1c18] sm:$0xff]
    %v1403 = vld [vmem:[#allocation5 + $0x1c20] sm:$0xff]
    %v1404 = vld [vmem:[#allocation5 + $0x1c28] sm:$0xff]
    %v1405 = vld [vmem:[#allocation5 + $0x1c30] sm:$0xff]
    %v1406 = vld [vmem:[#allocation5 + $0x1c38] sm:$0xff]
    %v1407 = vld [vmem:[#allocation5 + $0x1c40] sm:$0xff]
    %v1408 = vld [vmem:[#allocation5 + $0x1c48] sm:$0xff]
    %v1409 = vld [vmem:[#allocation5 + $0x1c50] sm:$0xff]
    %v1410 = vld [vmem:[#allocation5 + $0x1c58] sm:$0xff]
    %v1411 = vld [vmem:[#allocation5 + $0x1c60] sm:$0xff]
    %v1412 = vld [vmem:[#allocation5 + $0x1c68] sm:$0xff]
    %v1413 = vld [vmem:[#allocation5 + $0x1c70] sm:$0xff]
    %v1414 = vld [vmem:[#allocation5 + $0x1c78] sm:$0xff]
    %v1415 = vld [vmem:[#allocation5 + $0x1c80] sm:$0xff]
    %v1416 = vld [vmem:[#allocation5 + $0x1c88] sm:$0xff]
    %v1417 = vld [vmem:[#allocation5 + $0x1c90] sm:$0xff]
    %v1418 = vld [vmem:[#allocation5 + $0x1c98] sm:$0xff]
    %v1419 = vld [vmem:[#allocation5 + $0x1ca0] sm:$0xff]
    %v1420 = vld [vmem:[#allocation5 + $0x1ca8] sm:$0xff]
    %v1421 = vld [vmem:[#allocation5 + $0x1cb0] sm:$0xff]
    %v1422 = vld [vmem:[#allocation5 + $0x1cb8] sm:$0xff]
    %v1423 = vld [vmem:[#allocation5 + $0x1cc0] sm:$0xff]
    %v1424 = vld [vmem:[#allocation5 + $0x1cc8] sm:$0xff]
    %v1425 = vld [vmem:[#allocation5 + $0x1cd0] sm:$0xff]
    %v1426 = vld [vmem:[#allocation5 + $0x1cd8] sm:$0xff]
    %v1427 = vld [vmem:[#allocation5 + $0x1ce0] sm:$0xff]
    %v1428 = vld [vmem:[#allocation5 + $0x1ce8] sm:$0xff]
    %v1429 = vld [vmem:[#allocation5 + $0x1cf0] sm:$0xff]
    %v1430 = vld [vmem:[#allocation5 + $0x1cf8] sm:$0xff]
    %v1431 = vld [vmem:[#allocation5 + $0x1d00] sm:$0xff]
    %v1432 = vld [vmem:[#allocation5 + $0x1d08] sm:$0xff]
    %v1433 = vld [vmem:[#allocation5 + $0x1d10] sm:$0xff]
    %v1434 = vld [vmem:[#allocation5 + $0x1d18] sm:$0xff]
    %v1435 = vld [vmem:[#allocation5 + $0x1d20] sm:$0xff]
    %v1436 = vld [vmem:[#allocation5 + $0x1d28] sm:$0xff]
    %v1437 = vld [vmem:[#allocation5 + $0x1d30] sm:$0xff]
    %v1438 = vld [vmem:[#allocation5 + $0x1d38] sm:$0xff]
    %v1439 = vld [vmem:[#allocation5 + $0x1d40] sm:$0xff]
    %v1440 = vld [vmem:[#allocation5 + $0x1d48] sm:$0xff]
    %v1441 = vld [vmem:[#allocation5 + $0x1d50] sm:$0xff]
    %v1442 = vld [vmem:[#allocation5 + $0x1d58] sm:$0xff]
    %v1443 = vld [vmem:[#allocation5 + $0x1d60] sm:$0xff]
    %v1444 = vld [vmem:[#allocation5 + $0x1d68] sm:$0xff]
    %v1445 = vld [vmem:[#allocation5 + $0x1d70] sm:$0xff]
    %v1446 = vld [vmem:[#allocation5 + $0x1d78] sm:$0xff]
    %v1447 = vld [vmem:[#allocation5 + $0x1d80] sm:$0xff]
    %v1448 = vld [vmem:[#allocation5 + $0x1d88] sm:$0xff]
    %v1449 = vld [vmem:[#allocation5 + $0x1d90] sm:$0xff]
    %v1450 = vld [vmem:[#allocation5 + $0x1d98] sm:$0xff]
    %v1451 = vld [vmem:[#allocation5 + $0x1da0] sm:$0xff]
    %v1452 = vld [vmem:[#allocation5 + $0x1da8] sm:$0xff]
    %v1453 = vld [vmem:[#allocation5 + $0x1db0] sm:$0xff]
    %v1454 = vld [vmem:[#allocation5 + $0x1db8] sm:$0xff]
    %v1455 = vld [vmem:[#allocation5 + $0x1dc0] sm:$0xff]
    %v1456 = vld [vmem:[#allocation5 + $0x1dc8] sm:$0xff]
    %v1457 = vld [vmem:[#allocation5 + $0x1dd0] sm:$0xff]
    %v1458 = vld [vmem:[#allocation5 + $0x1dd8] sm:$0xff]
    %v1459 = vld [vmem:[#allocation5 + $0x1de0] sm:$0xff]
    %v1460 = vld [vmem:[#allocation5 + $0x1de8] sm:$0xff]
    %v1461 = vld [vmem:[#allocation5 + $0x1df0] sm:$0xff]
    %v1462 = vld [vmem:[#allocation5 + $0x1df8] sm:$0xff]
    %v1463 = vld [vmem:[#allocation5 + $0x1e00] sm:$0xff]
    %v1464 = vld [vmem:[#allocation5 + $0x1e08] sm:$0xff]
    %v1465 = vld [vmem:[#allocation5 + $0x1e10] sm:$0xff]
    %v1466 = vld [vmem:[#allocation5 + $0x1e18] sm:$0xff]
    %v1467 = vld [vmem:[#allocation5 + $0x1e20] sm:$0xff]
    %v1468 = vld [vmem:[#allocation5 + $0x1e28] sm:$0xff]
    %v1469 = vld [vmem:[#allocation5 + $0x1e30] sm:$0xff]
    %v1470 = vld [vmem:[#allocation5 + $0x1e38] sm:$0xff]
    %v1471 = vld [vmem:[#allocation5 + $0x1e40] sm:$0xff]
    %v1472 = vld [vmem:[#allocation5 + $0x1e48] sm:$0xff]
    %v1473 = vld [vmem:[#allocation5 + $0x1e50] sm:$0xff]
    %v1474 = vld [vmem:[#allocation5 + $0x1e58] sm:$0xff]
    %v1475 = vld [vmem:[#allocation5 + $0x1e60] sm:$0xff]
    %v1476 = vld [vmem:[#allocation5 + $0x1e68] sm:$0xff]
    %v1477 = vld [vmem:[#allocation5 + $0x1e70] sm:$0xff]
    %v1478 = vld [vmem:[#allocation5 + $0x1e78] sm:$0xff]
    %v1479 = vld [vmem:[#allocation5 + $0x1e80] sm:$0xff]
    %v1480 = vld [vmem:[#allocation5 + $0x1e88] sm:$0xff]
    %v1481 = vld [vmem:[#allocation5 + $0x1e90] sm:$0xff]
    %v1482 = vld [vmem:[#allocation5 + $0x1e98] sm:$0xff]
    %v1483 = vld [vmem:[#allocation5 + $0x1ea0] sm:$0xff]
    %v1484 = vld [vmem:[#allocation5 + $0x1ea8] sm:$0xff]
    %v1485 = vld [vmem:[#allocation5 + $0x1eb0] sm:$0xff]
    %v1486 = vld [vmem:[#allocation5 + $0x1eb8] sm:$0xff]
    %v1487 = vld [vmem:[#allocation5 + $0x1ec0] sm:$0xff]
    %v1488 = vld [vmem:[#allocation5 + $0x1ec8] sm:$0xff]
    %v1489 = vld [vmem:[#allocation5 + $0x1ed0] sm:$0xff]
    %v1490 = vld [vmem:[#allocation5 + $0x1ed8] sm:$0xff]
    %v1491 = vld [vmem:[#allocation5 + $0x1ee0] sm:$0xff]
    %v1492 = vld [vmem:[#allocation5 + $0x1ee8] sm:$0xff]
    %v1493 = vld [vmem:[#allocation5 + $0x1ef0] sm:$0xff]
    %v1494 = vld [vmem:[#allocation5 + $0x1ef8] sm:$0xff]
    %v1495 = vld [vmem:[#allocation5 + $0x1f00] sm:$0xff]
    %v1496 = vld [vmem:[#allocation5 + $0x1f08] sm:$0xff]
    %v1497 = vld [vmem:[#allocation5 + $0x1f10] sm:$0xff]
    %v1498 = vld [vmem:[#allocation5 + $0x1f18] sm:$0xff]
    %v1499 = vld [vmem:[#allocation5 + $0x1f20] sm:$0xff]
    %v1500 = vld [vmem:[#allocation5 + $0x1f28] sm:$0xff]
    %v1501 = vld [vmem:[#allocation5 + $0x1f30] sm:$0xff]
    %v1502 = vld [vmem:[#allocation5 + $0x1f38] sm:$0xff]
    %v1503 = vld [vmem:[#allocation5 + $0x1f40] sm:$0xff]
    %v1504 = vld [vmem:[#allocation5 + $0x1f48] sm:$0xff]
    %v1505 = vld [vmem:[#allocation5 + $0x1f50] sm:$0xff]
    %v1506 = vld [vmem:[#allocation5 + $0x1f58] sm:$0xff]
    %v1507 = vld [vmem:[#allocation5 + $0x1f60] sm:$0xff]
    %v1508 = vld [vmem:[#allocation5 + $0x1f68] sm:$0xff]
    %v1509 = vld [vmem:[#allocation5 + $0x1f70] sm:$0xff]
    %v1510 = vld [vmem:[#allocation5 + $0x1f78] sm:$0xff]
    %v1511 = vld [vmem:[#allocation5 + $0x1f80] sm:$0xff]
    %v1512 = vld [vmem:[#allocation5 + $0x1f88] sm:$0xff]
    %v1513 = vld [vmem:[#allocation5 + $0x1f90] sm:$0xff]
    %v1514 = vld [vmem:[#allocation5 + $0x1f98] sm:$0xff]
    %v1515 = vld [vmem:[#allocation5 + $0x1fa0] sm:$0xff]
    %v1516 = vld [vmem:[#allocation5 + $0x1fa8] sm:$0xff]
    %v1517 = vld [vmem:[#allocation5 + $0x1fb0] sm:$0xff]
    %v1518 = vld [vmem:[#allocation5 + $0x1fb8] sm:$0xff]
    %v1519 = vld [vmem:[#allocation5 + $0x1fc0] sm:$0xff]
    %v1520 = vld [vmem:[#allocation5 + $0x1fc8] sm:$0xff]
    %v1521 = vld [vmem:[#allocation5 + $0x1fd0] sm:$0xff]
    %v1522 = vld [vmem:[#allocation5 + $0x1fd8] sm:$0xff]
    %v1523 = vld [vmem:[#allocation5 + $0x1fe0] sm:$0xff]
    %v1524 = vld [vmem:[#allocation5 + $0x1fe8] sm:$0xff]
    %v1525 = vld [vmem:[#allocation5 + $0x1ff0] sm:$0xff]
    %v1526 = vld [vmem:[#allocation5 + $0x1ff8] sm:$0xff]
    %v1527 = vld [vmem:[#allocation7] sm:$0x3]
    %v1529 = vlaneseq
    %v1530 = vshrl.u32 %v1529, 7
    %v1531 = vsub.s32 0, %v1530
    %v1532 = vrot.slane %v1527, %v1531
    %v1533 = vlaneseq
    %v1534 = vshrl.u32 %v1533, 7
    %v1535 = vsub.s32 1, %v1534
    %v1536 = vrot.slane %v1527, %v1535
    %v2563 = vunpack.c.l.b16 %v503
    %v2564 = vunpack.c.h.b16 %v503
    %v2565 = vunpack.c.l.b16 %v504
    %v2566 = vunpack.c.h.b16 %v504
    %v2567 = vunpack.c.l.b16 %v505
    %v2568 = vunpack.c.h.b16 %v505
    %v2569 = vunpack.c.l.b16 %v506
    %v2570 = vunpack.c.h.b16 %v506
    %v2571 = vunpack.c.l.b16 %v507
    %v2572 = vunpack.c.h.b16 %v507
    %v2573 = vunpack.c.l.b16 %v508
    %v2574 = vunpack.c.h.b16 %v508
    %v2575 = vunpack.c.l.b16 %v509
    %v2576 = vunpack.c.h.b16 %v509
    %v2577 = vunpack.c.l.b16 %v510
    %v2578 = vunpack.c.h.b16 %v510
    %v2579 = vunpack.c.l.b16 %v511
    %v2580 = vunpack.c.h.b16 %v511
    %v2581 = vunpack.c.l.b16 %v512
    %v2582 = vunpack.c.h.b16 %v512
    %v2583 = vunpack.c.l.b16 %v513
    %v2584 = vunpack.c.h.b16 %v513
    %v2585 = vunpack.c.l.b16 %v514
    %v2586 = vunpack.c.h.b16 %v514
    %v2587 = vunpack.c.l.b16 %v515
    %v2588 = vunpack.c.h.b16 %v515
    %v2589 = vunpack.c.l.b16 %v516
    %v2590 = vunpack.c.h.b16 %v516
    %v2591 = vunpack.c.l.b16 %v517
    %v2592 = vunpack.c.h.b16 %v517
    %v2593 = vunpack.c.l.b16 %v518
    %v2594 = vunpack.c.h.b16 %v518
    %v2595 = vunpack.c.l.b16 %v519
    %v2596 = vunpack.c.h.b16 %v519
    %v2597 = vunpack.c.l.b16 %v520
    %v2598 = vunpack.c.h.b16 %v520
    %v2599 = vunpack.c.l.b16 %v521
    %v2600 = vunpack.c.h.b16 %v521
    %v2601 = vunpack.c.l.b16 %v522
    %v2602 = vunpack.c.h.b16 %v522
    %v2603 = vunpack.c.l.b16 %v523
    %v2604 = vunpack.c.h.b16 %v523
    %v2605 = vunpack.c.l.b16 %v524
    %v2606 = vunpack.c.h.b16 %v524
    %v2607 = vunpack.c.l.b16 %v525
    %v2608 = vunpack.c.h.b16 %v525
    %v2609 = vunpack.c.l.b16 %v526
    %v2610 = vunpack.c.h.b16 %v526
    %v2611 = vunpack.c.l.b16 %v527
    %v2612 = vunpack.c.h.b16 %v527
    %v2613 = vunpack.c.l.b16 %v528
    %v2614 = vunpack.c.h.b16 %v528
    %v2615 = vunpack.c.l.b16 %v529
    %v2616 = vunpack.c.h.b16 %v529
    %v2617 = vunpack.c.l.b16 %v530
    %v2618 = vunpack.c.h.b16 %v530
    %v2619 = vunpack.c.l.b16 %v531
    %v2620 = vunpack.c.h.b16 %v531
    %v2621 = vunpack.c.l.b16 %v532
    %v2622 = vunpack.c.h.b16 %v532
    %v2623 = vunpack.c.l.b16 %v533
    %v2624 = vunpack.c.h.b16 %v533
    %v2625 = vunpack.c.l.b16 %v534
    %v2626 = vunpack.c.h.b16 %v534
    %v2627 = vunpack.c.l.b16 %v535
    %v2628 = vunpack.c.h.b16 %v535
    %v2629 = vunpack.c.l.b16 %v536
    %v2630 = vunpack.c.h.b16 %v536
    %v2631 = vunpack.c.l.b16 %v537
    %v2632 = vunpack.c.h.b16 %v537
    %v2633 = vunpack.c.l.b16 %v538
    %v2634 = vunpack.c.h.b16 %v538
    %v2635 = vunpack.c.l.b16 %v539
    %v2636 = vunpack.c.h.b16 %v539
    %v2637 = vunpack.c.l.b16 %v540
    %v2638 = vunpack.c.h.b16 %v540
    %v2639 = vunpack.c.l.b16 %v541
    %v2640 = vunpack.c.h.b16 %v541
    %v2641 = vunpack.c.l.b16 %v542
    %v2642 = vunpack.c.h.b16 %v542
    %v2643 = vunpack.c.l.b16 %v543
    %v2644 = vunpack.c.h.b16 %v543
    %v2645 = vunpack.c.l.b16 %v544
    %v2646 = vunpack.c.h.b16 %v544
    %v2647 = vunpack.c.l.b16 %v545
    %v2648 = vunpack.c.h.b16 %v545
    %v2649 = vunpack.c.l.b16 %v546
    %v2650 = vunpack.c.h.b16 %v546
    %v2651 = vunpack.c.l.b16 %v547
    %v2652 = vunpack.c.h.b16 %v547
    %v2653 = vunpack.c.l.b16 %v548
    %v2654 = vunpack.c.h.b16 %v548
    %v2655 = vunpack.c.l.b16 %v549
    %v2656 = vunpack.c.h.b16 %v549
    %v2657 = vunpack.c.l.b16 %v550
    %v2658 = vunpack.c.h.b16 %v550
    %v2659 = vunpack.c.l.b16 %v551
    %v2660 = vunpack.c.h.b16 %v551
    %v2661 = vunpack.c.l.b16 %v552
    %v2662 = vunpack.c.h.b16 %v552
    %v2663 = vunpack.c.l.b16 %v553
    %v2664 = vunpack.c.h.b16 %v553
    %v2665 = vunpack.c.l.b16 %v554
    %v2666 = vunpack.c.h.b16 %v554
    %v2667 = vunpack.c.l.b16 %v555
    %v2668 = vunpack.c.h.b16 %v555
    %v2669 = vunpack.c.l.b16 %v556
    %v2670 = vunpack.c.h.b16 %v556
    %v2671 = vunpack.c.l.b16 %v557
    %v2672 = vunpack.c.h.b16 %v557
    %v2673 = vunpack.c.l.b16 %v558
    %v2674 = vunpack.c.h.b16 %v558
    %v2675 = vunpack.c.l.b16 %v559
    %v2676 = vunpack.c.h.b16 %v559
    %v2677 = vunpack.c.l.b16 %v560
    %v2678 = vunpack.c.h.b16 %v560
    %v2679 = vunpack.c.l.b16 %v561
    %v2680 = vunpack.c.h.b16 %v561
    %v2681 = vunpack.c.l.b16 %v562
    %v2682 = vunpack.c.h.b16 %v562
    %v2683 = vunpack.c.l.b16 %v563
    %v2684 = vunpack.c.h.b16 %v563
    %v2685 = vunpack.c.l.b16 %v564
    %v2686 = vunpack.c.h.b16 %v564
    %v2687 = vunpack.c.l.b16 %v565
    %v2688 = vunpack.c.h.b16 %v565
    %v2689 = vunpack.c.l.b16 %v566
    %v2690 = vunpack.c.h.b16 %v566
    %v2691 = vunpack.c.l.b16 %v567
    %v2692 = vunpack.c.h.b16 %v567
    %v2693 = vunpack.c.l.b16 %v568
    %v2694 = vunpack.c.h.b16 %v568
    %v2695 = vunpack.c.l.b16 %v569
    %v2696 = vunpack.c.h.b16 %v569
    %v2697 = vunpack.c.l.b16 %v570
    %v2698 = vunpack.c.h.b16 %v570
    %v2699 = vunpack.c.l.b16 %v571
    %v2700 = vunpack.c.h.b16 %v571
    %v2701 = vunpack.c.l.b16 %v572
    %v2702 = vunpack.c.h.b16 %v572
    %v2703 = vunpack.c.l.b16 %v573
    %v2704 = vunpack.c.h.b16 %v573
    %v2705 = vunpack.c.l.b16 %v574
    %v2706 = vunpack.c.h.b16 %v574
    %v2707 = vunpack.c.l.b16 %v575
    %v2708 = vunpack.c.h.b16 %v575
    %v2709 = vunpack.c.l.b16 %v576
    %v2710 = vunpack.c.h.b16 %v576
    %v2711 = vunpack.c.l.b16 %v577
    %v2712 = vunpack.c.h.b16 %v577
    %v2713 = vunpack.c.l.b16 %v578
    %v2714 = vunpack.c.h.b16 %v578
    %v2715 = vunpack.c.l.b16 %v579
    %v2716 = vunpack.c.h.b16 %v579
    %v2717 = vunpack.c.l.b16 %v580
    %v2718 = vunpack.c.h.b16 %v580
    %v2719 = vunpack.c.l.b16 %v581
    %v2720 = vunpack.c.h.b16 %v581
    %v2721 = vunpack.c.l.b16 %v582
    %v2722 = vunpack.c.h.b16 %v582
    %v2723 = vunpack.c.l.b16 %v583
    %v2724 = vunpack.c.h.b16 %v583
    %v2725 = vunpack.c.l.b16 %v584
    %v2726 = vunpack.c.h.b16 %v584
    %v2727 = vunpack.c.l.b16 %v585
    %v2728 = vunpack.c.h.b16 %v585
    %v2729 = vunpack.c.l.b16 %v586
    %v2730 = vunpack.c.h.b16 %v586
    %v2731 = vunpack.c.l.b16 %v587
    %v2732 = vunpack.c.h.b16 %v587
    %v2733 = vunpack.c.l.b16 %v588
    %v2734 = vunpack.c.h.b16 %v588
    %v2735 = vunpack.c.l.b16 %v589
    %v2736 = vunpack.c.h.b16 %v589
    %v2737 = vunpack.c.l.b16 %v590
    %v2738 = vunpack.c.h.b16 %v590
    %v2739 = vunpack.c.l.b16 %v591
    %v2740 = vunpack.c.h.b16 %v591
    %v2741 = vunpack.c.l.b16 %v592
    %v2742 = vunpack.c.h.b16 %v592
    %v2743 = vunpack.c.l.b16 %v593
    %v2744 = vunpack.c.h.b16 %v593
    %v2745 = vunpack.c.l.b16 %v594
    %v2746 = vunpack.c.h.b16 %v594
    %v2747 = vunpack.c.l.b16 %v595
    %v2748 = vunpack.c.h.b16 %v595
    %v2749 = vunpack.c.l.b16 %v596
    %v2750 = vunpack.c.h.b16 %v596
    %v2751 = vunpack.c.l.b16 %v597
    %v2752 = vunpack.c.h.b16 %v597
    %v2753 = vunpack.c.l.b16 %v598
    %v2754 = vunpack.c.h.b16 %v598
    %v2755 = vunpack.c.l.b16 %v599
    %v2756 = vunpack.c.h.b16 %v599
    %v2757 = vunpack.c.l.b16 %v600
    %v2758 = vunpack.c.h.b16 %v600
    %v2759 = vunpack.c.l.b16 %v601
    %v2760 = vunpack.c.h.b16 %v601
    %v2761 = vunpack.c.l.b16 %v602
    %v2762 = vunpack.c.h.b16 %v602
    %v2763 = vunpack.c.l.b16 %v603
    %v2764 = vunpack.c.h.b16 %v603
    %v2765 = vunpack.c.l.b16 %v604
    %v2766 = vunpack.c.h.b16 %v604
    %v2767 = vunpack.c.l.b16 %v605
    %v2768 = vunpack.c.h.b16 %v605
    %v2769 = vunpack.c.l.b16 %v606
    %v2770 = vunpack.c.h.b16 %v606
    %v2771 = vunpack.c.l.b16 %v607
    %v2772 = vunpack.c.h.b16 %v607
    %v2773 = vunpack.c.l.b16 %v608
    %v2774 = vunpack.c.h.b16 %v608
    %v2775 = vunpack.c.l.b16 %v609
    %v2776 = vunpack.c.h.b16 %v609
    %v2777 = vunpack.c.l.b16 %v610
    %v2778 = vunpack.c.h.b16 %v610
    %v2779 = vunpack.c.l.b16 %v611
    %v2780 = vunpack.c.h.b16 %v611
    %v2781 = vunpack.c.l.b16 %v612
    %v2782 = vunpack.c.h.b16 %v612
    %v2783 = vunpack.c.l.b16 %v613
    %v2784 = vunpack.c.h.b16 %v613
    %v2785 = vunpack.c.l.b16 %v614
    %v2786 = vunpack.c.h.b16 %v614
    %v2787 = vunpack.c.l.b16 %v615
    %v2788 = vunpack.c.h.b16 %v615
    %v2789 = vunpack.c.l.b16 %v616
    %v2790 = vunpack.c.h.b16 %v616
    %v2791 = vunpack.c.l.b16 %v617
    %v2792 = vunpack.c.h.b16 %v617
    %v2793 = vunpack.c.l.b16 %v618
    %v2794 = vunpack.c.h.b16 %v618
    %v2795 = vunpack.c.l.b16 %v619
    %v2796 = vunpack.c.h.b16 %v619
    %v2797 = vunpack.c.l.b16 %v620
    %v2798 = vunpack.c.h.b16 %v620
    %v2799 = vunpack.c.l.b16 %v621
    %v2800 = vunpack.c.h.b16 %v621
    %v2801 = vunpack.c.l.b16 %v622
    %v2802 = vunpack.c.h.b16 %v622
    %v2803 = vunpack.c.l.b16 %v623
    %v2804 = vunpack.c.h.b16 %v623
    %v2805 = vunpack.c.l.b16 %v624
    %v2806 = vunpack.c.h.b16 %v624
    %v2807 = vunpack.c.l.b16 %v625
    %v2808 = vunpack.c.h.b16 %v625
    %v2809 = vunpack.c.l.b16 %v626
    %v2810 = vunpack.c.h.b16 %v626
    %v2811 = vunpack.c.l.b16 %v627
    %v2812 = vunpack.c.h.b16 %v627
    %v2813 = vunpack.c.l.b16 %v628
    %v2814 = vunpack.c.h.b16 %v628
    %v2815 = vunpack.c.l.b16 %v629
    %v2816 = vunpack.c.h.b16 %v629
    %v2817 = vunpack.c.l.b16 %v630
    %v2818 = vunpack.c.h.b16 %v630
    %v2819 = vunpack.c.l.b16 %v631
    %v2820 = vunpack.c.h.b16 %v631
    %v2821 = vunpack.c.l.b16 %v632
    %v2822 = vunpack.c.h.b16 %v632
    %v2823 = vunpack.c.l.b16 %v633
    %v2824 = vunpack.c.h.b16 %v633
    %v2825 = vunpack.c.l.b16 %v634
    %v2826 = vunpack.c.h.b16 %v634
    %v2827 = vunpack.c.l.b16 %v635
    %v2828 = vunpack.c.h.b16 %v635
    %v2829 = vunpack.c.l.b16 %v636
    %v2830 = vunpack.c.h.b16 %v636
    %v2831 = vunpack.c.l.b16 %v637
    %v2832 = vunpack.c.h.b16 %v637
    %v2833 = vunpack.c.l.b16 %v638
    %v2834 = vunpack.c.h.b16 %v638
    %v2835 = vunpack.c.l.b16 %v639
    %v2836 = vunpack.c.h.b16 %v639
    %v2837 = vunpack.c.l.b16 %v640
    %v2838 = vunpack.c.h.b16 %v640
    %v2839 = vunpack.c.l.b16 %v641
    %v2840 = vunpack.c.h.b16 %v641
    %v2841 = vunpack.c.l.b16 %v642
    %v2842 = vunpack.c.h.b16 %v642
    %v2843 = vunpack.c.l.b16 %v643
    %v2844 = vunpack.c.h.b16 %v643
    %v2845 = vunpack.c.l.b16 %v644
    %v2846 = vunpack.c.h.b16 %v644
    %v2847 = vunpack.c.l.b16 %v645
    %v2848 = vunpack.c.h.b16 %v645
    %v2849 = vunpack.c.l.b16 %v646
    %v2850 = vunpack.c.h.b16 %v646
    %v2851 = vunpack.c.l.b16 %v647
    %v2852 = vunpack.c.h.b16 %v647
    %v2853 = vunpack.c.l.b16 %v648
    %v2854 = vunpack.c.h.b16 %v648
    %v2855 = vunpack.c.l.b16 %v649
    %v2856 = vunpack.c.h.b16 %v649
    %v2857 = vunpack.c.l.b16 %v650
    %v2858 = vunpack.c.h.b16 %v650
    %v2859 = vunpack.c.l.b16 %v651
    %v2860 = vunpack.c.h.b16 %v651
    %v2861 = vunpack.c.l.b16 %v652
    %v2862 = vunpack.c.h.b16 %v652
    %v2863 = vunpack.c.l.b16 %v653
    %v2864 = vunpack.c.h.b16 %v653
    %v2865 = vunpack.c.l.b16 %v654
    %v2866 = vunpack.c.h.b16 %v654
    %v2867 = vunpack.c.l.b16 %v655
    %v2868 = vunpack.c.h.b16 %v655
    %v2869 = vunpack.c.l.b16 %v656
    %v2870 = vunpack.c.h.b16 %v656
    %v2871 = vunpack.c.l.b16 %v657
    %v2872 = vunpack.c.h.b16 %v657
    %v2873 = vunpack.c.l.b16 %v658
    %v2874 = vunpack.c.h.b16 %v658
    %v2875 = vunpack.c.l.b16 %v659
    %v2876 = vunpack.c.h.b16 %v659
    %v2877 = vunpack.c.l.b16 %v660
    %v2878 = vunpack.c.h.b16 %v660
    %v2879 = vunpack.c.l.b16 %v661
    %v2880 = vunpack.c.h.b16 %v661
    %v2881 = vunpack.c.l.b16 %v662
    %v2882 = vunpack.c.h.b16 %v662
    %v2883 = vunpack.c.l.b16 %v663
    %v2884 = vunpack.c.h.b16 %v663
    %v2885 = vunpack.c.l.b16 %v664
    %v2886 = vunpack.c.h.b16 %v664
    %v2887 = vunpack.c.l.b16 %v665
    %v2888 = vunpack.c.h.b16 %v665
    %v2889 = vunpack.c.l.b16 %v666
    %v2890 = vunpack.c.h.b16 %v666
    %v2891 = vunpack.c.l.b16 %v667
    %v2892 = vunpack.c.h.b16 %v667
    %v2893 = vunpack.c.l.b16 %v668
    %v2894 = vunpack.c.h.b16 %v668
    %v2895 = vunpack.c.l.b16 %v669
    %v2896 = vunpack.c.h.b16 %v669
    %v2897 = vunpack.c.l.b16 %v670
    %v2898 = vunpack.c.h.b16 %v670
    %v2899 = vunpack.c.l.b16 %v671
    %v2900 = vunpack.c.h.b16 %v671
    %v2901 = vunpack.c.l.b16 %v672
    %v2902 = vunpack.c.h.b16 %v672
    %v2903 = vunpack.c.l.b16 %v673
    %v2904 = vunpack.c.h.b16 %v673
    %v2905 = vunpack.c.l.b16 %v674
    %v2906 = vunpack.c.h.b16 %v674
    %v2907 = vunpack.c.l.b16 %v675
    %v2908 = vunpack.c.h.b16 %v675
    %v2909 = vunpack.c.l.b16 %v676
    %v2910 = vunpack.c.h.b16 %v676
    %v2911 = vunpack.c.l.b16 %v677
    %v2912 = vunpack.c.h.b16 %v677
    %v2913 = vunpack.c.l.b16 %v678
    %v2914 = vunpack.c.h.b16 %v678
    %v2915 = vunpack.c.l.b16 %v679
    %v2916 = vunpack.c.h.b16 %v679
    %v2917 = vunpack.c.l.b16 %v680
    %v2918 = vunpack.c.h.b16 %v680
    %v2919 = vunpack.c.l.b16 %v681
    %v2920 = vunpack.c.h.b16 %v681
    %v2921 = vunpack.c.l.b16 %v682
    %v2922 = vunpack.c.h.b16 %v682
    %v2923 = vunpack.c.l.b16 %v683
    %v2924 = vunpack.c.h.b16 %v683
    %v2925 = vunpack.c.l.b16 %v684
    %v2926 = vunpack.c.h.b16 %v684
    %v2927 = vunpack.c.l.b16 %v685
    %v2928 = vunpack.c.h.b16 %v685
    %v2929 = vunpack.c.l.b16 %v686
    %v2930 = vunpack.c.h.b16 %v686
    %v2931 = vunpack.c.l.b16 %v687
    %v2932 = vunpack.c.h.b16 %v687
    %v2933 = vunpack.c.l.b16 %v688
    %v2934 = vunpack.c.h.b16 %v688
    %v2935 = vunpack.c.l.b16 %v689
    %v2936 = vunpack.c.h.b16 %v689
    %v2937 = vunpack.c.l.b16 %v690
    %v2938 = vunpack.c.h.b16 %v690
    %v2939 = vunpack.c.l.b16 %v691
    %v2940 = vunpack.c.h.b16 %v691
    %v2941 = vunpack.c.l.b16 %v692
    %v2942 = vunpack.c.h.b16 %v692
    %v2943 = vunpack.c.l.b16 %v693
    %v2944 = vunpack.c.h.b16 %v693
    %v2945 = vunpack.c.l.b16 %v694
    %v2946 = vunpack.c.h.b16 %v694
    %v2947 = vunpack.c.l.b16 %v695
    %v2948 = vunpack.c.h.b16 %v695
    %v2949 = vunpack.c.l.b16 %v696
    %v2950 = vunpack.c.h.b16 %v696
    %v2951 = vunpack.c.l.b16 %v697
    %v2952 = vunpack.c.h.b16 %v697
    %v2953 = vunpack.c.l.b16 %v698
    %v2954 = vunpack.c.h.b16 %v698
    %v2955 = vunpack.c.l.b16 %v699
    %v2956 = vunpack.c.h.b16 %v699
    %v2957 = vunpack.c.l.b16 %v700
    %v2958 = vunpack.c.h.b16 %v700
    %v2959 = vunpack.c.l.b16 %v701
    %v2960 = vunpack.c.h.b16 %v701
    %v2961 = vunpack.c.l.b16 %v702
    %v2962 = vunpack.c.h.b16 %v702
    %v2963 = vunpack.c.l.b16 %v703
    %v2964 = vunpack.c.h.b16 %v703
    %v2965 = vunpack.c.l.b16 %v704
    %v2966 = vunpack.c.h.b16 %v704
    %v2967 = vunpack.c.l.b16 %v705
    %v2968 = vunpack.c.h.b16 %v705
    %v2969 = vunpack.c.l.b16 %v706
    %v2970 = vunpack.c.h.b16 %v706
    %v2971 = vunpack.c.l.b16 %v707
    %v2972 = vunpack.c.h.b16 %v707
    %v2973 = vunpack.c.l.b16 %v708
    %v2974 = vunpack.c.h.b16 %v708
    %v2975 = vunpack.c.l.b16 %v709
    %v2976 = vunpack.c.h.b16 %v709
    %v2977 = vunpack.c.l.b16 %v710
    %v2978 = vunpack.c.h.b16 %v710
    %v2979 = vunpack.c.l.b16 %v711
    %v2980 = vunpack.c.h.b16 %v711
    %v2981 = vunpack.c.l.b16 %v712
    %v2982 = vunpack.c.h.b16 %v712
    %v2983 = vunpack.c.l.b16 %v713
    %v2984 = vunpack.c.h.b16 %v713
    %v2985 = vunpack.c.l.b16 %v714
    %v2986 = vunpack.c.h.b16 %v714
    %v2987 = vunpack.c.l.b16 %v715
    %v2988 = vunpack.c.h.b16 %v715
    %v2989 = vunpack.c.l.b16 %v716
    %v2990 = vunpack.c.h.b16 %v716
    %v2991 = vunpack.c.l.b16 %v717
    %v2992 = vunpack.c.h.b16 %v717
    %v2993 = vunpack.c.l.b16 %v718
    %v2994 = vunpack.c.h.b16 %v718
    %v2995 = vunpack.c.l.b16 %v719
    %v2996 = vunpack.c.h.b16 %v719
    %v2997 = vunpack.c.l.b16 %v720
    %v2998 = vunpack.c.h.b16 %v720
    %v2999 = vunpack.c.l.b16 %v721
    %v3000 = vunpack.c.h.b16 %v721
    %v3001 = vunpack.c.l.b16 %v722
    %v3002 = vunpack.c.h.b16 %v722
    %v3003 = vunpack.c.l.b16 %v723
    %v3004 = vunpack.c.h.b16 %v723
    %v3005 = vunpack.c.l.b16 %v724
    %v3006 = vunpack.c.h.b16 %v724
    %v3007 = vunpack.c.l.b16 %v725
    %v3008 = vunpack.c.h.b16 %v725
    %v3009 = vunpack.c.l.b16 %v726
    %v3010 = vunpack.c.h.b16 %v726
    %v3011 = vunpack.c.l.b16 %v727
    %v3012 = vunpack.c.h.b16 %v727
    %v3013 = vunpack.c.l.b16 %v728
    %v3014 = vunpack.c.h.b16 %v728
    %v3015 = vunpack.c.l.b16 %v729
    %v3016 = vunpack.c.h.b16 %v729
    %v3017 = vunpack.c.l.b16 %v730
    %v3018 = vunpack.c.h.b16 %v730
    %v3019 = vunpack.c.l.b16 %v731
    %v3020 = vunpack.c.h.b16 %v731
    %v3021 = vunpack.c.l.b16 %v732
    %v3022 = vunpack.c.h.b16 %v732
    %v3023 = vunpack.c.l.b16 %v733
    %v3024 = vunpack.c.h.b16 %v733
    %v3025 = vunpack.c.l.b16 %v734
    %v3026 = vunpack.c.h.b16 %v734
    %v3027 = vunpack.c.l.b16 %v735
    %v3028 = vunpack.c.h.b16 %v735
    %v3029 = vunpack.c.l.b16 %v736
    %v3030 = vunpack.c.h.b16 %v736
    %v3031 = vunpack.c.l.b16 %v737
    %v3032 = vunpack.c.h.b16 %v737
    %v3033 = vunpack.c.l.b16 %v738
    %v3034 = vunpack.c.h.b16 %v738
    %v3035 = vunpack.c.l.b16 %v739
    %v3036 = vunpack.c.h.b16 %v739
    %v3037 = vunpack.c.l.b16 %v740
    %v3038 = vunpack.c.h.b16 %v740
    %v3039 = vunpack.c.l.b16 %v741
    %v3040 = vunpack.c.h.b16 %v741
    %v3041 = vunpack.c.l.b16 %v742
    %v3042 = vunpack.c.h.b16 %v742
    %v3043 = vunpack.c.l.b16 %v743
    %v3044 = vunpack.c.h.b16 %v743
    %v3045 = vunpack.c.l.b16 %v744
    %v3046 = vunpack.c.h.b16 %v744
    %v3047 = vunpack.c.l.b16 %v745
    %v3048 = vunpack.c.h.b16 %v745
    %v3049 = vunpack.c.l.b16 %v746
    %v3050 = vunpack.c.h.b16 %v746
    %v3051 = vunpack.c.l.b16 %v747
    %v3052 = vunpack.c.h.b16 %v747
    %v3053 = vunpack.c.l.b16 %v748
    %v3054 = vunpack.c.h.b16 %v748
    %v3055 = vunpack.c.l.b16 %v749
    %v3056 = vunpack.c.h.b16 %v749
    %v3057 = vunpack.c.l.b16 %v750
    %v3058 = vunpack.c.h.b16 %v750
    %v3059 = vunpack.c.l.b16 %v751
    %v3060 = vunpack.c.h.b16 %v751
    %v3061 = vunpack.c.l.b16 %v752
    %v3062 = vunpack.c.h.b16 %v752
    %v3063 = vunpack.c.l.b16 %v753
    %v3064 = vunpack.c.h.b16 %v753
    %v3065 = vunpack.c.l.b16 %v754
    %v3066 = vunpack.c.h.b16 %v754
    %v3067 = vunpack.c.l.b16 %v755
    %v3068 = vunpack.c.h.b16 %v755
    %v3069 = vunpack.c.l.b16 %v756
    %v3070 = vunpack.c.h.b16 %v756
    %v3071 = vunpack.c.l.b16 %v757
    %v3072 = vunpack.c.h.b16 %v757
    %v3073 = vunpack.c.l.b16 %v758
    %v3074 = vunpack.c.h.b16 %v758
    %v3075 = vunpack.c.l.b16 %v759
    %v3076 = vunpack.c.h.b16 %v759
    %v3077 = vunpack.c.l.b16 %v760
    %v3078 = vunpack.c.h.b16 %v760
    %v3079 = vunpack.c.l.b16 %v761
    %v3080 = vunpack.c.h.b16 %v761
    %v3081 = vunpack.c.l.b16 %v762
    %v3082 = vunpack.c.h.b16 %v762
    %v3083 = vunpack.c.l.b16 %v763
    %v3084 = vunpack.c.h.b16 %v763
    %v3085 = vunpack.c.l.b16 %v764
    %v3086 = vunpack.c.h.b16 %v764
    %v3087 = vunpack.c.l.b16 %v765
    %v3088 = vunpack.c.h.b16 %v765
    %v3089 = vunpack.c.l.b16 %v766
    %v3090 = vunpack.c.h.b16 %v766
    %v3091 = vunpack.c.l.b16 %v767
    %v3092 = vunpack.c.h.b16 %v767
    %v3093 = vunpack.c.l.b16 %v768
    %v3094 = vunpack.c.h.b16 %v768
    %v3095 = vunpack.c.l.b16 %v769
    %v3096 = vunpack.c.h.b16 %v769
    %v3097 = vunpack.c.l.b16 %v770
    %v3098 = vunpack.c.h.b16 %v770
    %v3099 = vunpack.c.l.b16 %v771
    %v3100 = vunpack.c.h.b16 %v771
    %v3101 = vunpack.c.l.b16 %v772
    %v3102 = vunpack.c.h.b16 %v772
    %v3103 = vunpack.c.l.b16 %v773
    %v3104 = vunpack.c.h.b16 %v773
    %v3105 = vunpack.c.l.b16 %v774
    %v3106 = vunpack.c.h.b16 %v774
    %v3107 = vunpack.c.l.b16 %v775
    %v3108 = vunpack.c.h.b16 %v775
    %v3109 = vunpack.c.l.b16 %v776
    %v3110 = vunpack.c.h.b16 %v776
    %v3111 = vunpack.c.l.b16 %v777
    %v3112 = vunpack.c.h.b16 %v777
    %v3113 = vunpack.c.l.b16 %v778
    %v3114 = vunpack.c.h.b16 %v778
    %v3115 = vunpack.c.l.b16 %v779
    %v3116 = vunpack.c.h.b16 %v779
    %v3117 = vunpack.c.l.b16 %v780
    %v3118 = vunpack.c.h.b16 %v780
    %v3119 = vunpack.c.l.b16 %v781
    %v3120 = vunpack.c.h.b16 %v781
    %v3121 = vunpack.c.l.b16 %v782
    %v3122 = vunpack.c.h.b16 %v782
    %v3123 = vunpack.c.l.b16 %v783
    %v3124 = vunpack.c.h.b16 %v783
    %v3125 = vunpack.c.l.b16 %v784
    %v3126 = vunpack.c.h.b16 %v784
    %v3127 = vunpack.c.l.b16 %v785
    %v3128 = vunpack.c.h.b16 %v785
    %v3129 = vunpack.c.l.b16 %v786
    %v3130 = vunpack.c.h.b16 %v786
    %v3131 = vunpack.c.l.b16 %v787
    %v3132 = vunpack.c.h.b16 %v787
    %v3133 = vunpack.c.l.b16 %v788
    %v3134 = vunpack.c.h.b16 %v788
    %v3135 = vunpack.c.l.b16 %v789
    %v3136 = vunpack.c.h.b16 %v789
    %v3137 = vunpack.c.l.b16 %v790
    %v3138 = vunpack.c.h.b16 %v790
    %v3139 = vunpack.c.l.b16 %v791
    %v3140 = vunpack.c.h.b16 %v791
    %v3141 = vunpack.c.l.b16 %v792
    %v3142 = vunpack.c.h.b16 %v792
    %v3143 = vunpack.c.l.b16 %v793
    %v3144 = vunpack.c.h.b16 %v793
    %v3145 = vunpack.c.l.b16 %v794
    %v3146 = vunpack.c.h.b16 %v794
    %v3147 = vunpack.c.l.b16 %v795
    %v3148 = vunpack.c.h.b16 %v795
    %v3149 = vunpack.c.l.b16 %v796
    %v3150 = vunpack.c.h.b16 %v796
    %v3151 = vunpack.c.l.b16 %v797
    %v3152 = vunpack.c.h.b16 %v797
    %v3153 = vunpack.c.l.b16 %v798
    %v3154 = vunpack.c.h.b16 %v798
    %v3155 = vunpack.c.l.b16 %v799
    %v3156 = vunpack.c.h.b16 %v799
    %v3157 = vunpack.c.l.b16 %v800
    %v3158 = vunpack.c.h.b16 %v800
    %v3159 = vunpack.c.l.b16 %v801
    %v3160 = vunpack.c.h.b16 %v801
    %v3161 = vunpack.c.l.b16 %v802
    %v3162 = vunpack.c.h.b16 %v802
    %v3163 = vunpack.c.l.b16 %v803
    %v3164 = vunpack.c.h.b16 %v803
    %v3165 = vunpack.c.l.b16 %v804
    %v3166 = vunpack.c.h.b16 %v804
    %v3167 = vunpack.c.l.b16 %v805
    %v3168 = vunpack.c.h.b16 %v805
    %v3169 = vunpack.c.l.b16 %v806
    %v3170 = vunpack.c.h.b16 %v806
    %v3171 = vunpack.c.l.b16 %v807
    %v3172 = vunpack.c.h.b16 %v807
    %v3173 = vunpack.c.l.b16 %v808
    %v3174 = vunpack.c.h.b16 %v808
    %v3175 = vunpack.c.l.b16 %v809
    %v3176 = vunpack.c.h.b16 %v809
    %v3177 = vunpack.c.l.b16 %v810
    %v3178 = vunpack.c.h.b16 %v810
    %v3179 = vunpack.c.l.b16 %v811
    %v3180 = vunpack.c.h.b16 %v811
    %v3181 = vunpack.c.l.b16 %v812
    %v3182 = vunpack.c.h.b16 %v812
    %v3183 = vunpack.c.l.b16 %v813
    %v3184 = vunpack.c.h.b16 %v813
    %v3185 = vunpack.c.l.b16 %v814
    %v3186 = vunpack.c.h.b16 %v814
    %v3187 = vunpack.c.l.b16 %v815
    %v3188 = vunpack.c.h.b16 %v815
    %v3189 = vunpack.c.l.b16 %v816
    %v3190 = vunpack.c.h.b16 %v816
    %v3191 = vunpack.c.l.b16 %v817
    %v3192 = vunpack.c.h.b16 %v817
    %v3193 = vunpack.c.l.b16 %v818
    %v3194 = vunpack.c.h.b16 %v818
    %v3195 = vunpack.c.l.b16 %v819
    %v3196 = vunpack.c.h.b16 %v819
    %v3197 = vunpack.c.l.b16 %v820
    %v3198 = vunpack.c.h.b16 %v820
    %v3199 = vunpack.c.l.b16 %v821
    %v3200 = vunpack.c.h.b16 %v821
    %v3201 = vunpack.c.l.b16 %v822
    %v3202 = vunpack.c.h.b16 %v822
    %v3203 = vunpack.c.l.b16 %v823
    %v3204 = vunpack.c.h.b16 %v823
    %v3205 = vunpack.c.l.b16 %v824
    %v3206 = vunpack.c.h.b16 %v824
    %v3207 = vunpack.c.l.b16 %v825
    %v3208 = vunpack.c.h.b16 %v825
    %v3209 = vunpack.c.l.b16 %v826
    %v3210 = vunpack.c.h.b16 %v826
    %v3211 = vunpack.c.l.b16 %v827
    %v3212 = vunpack.c.h.b16 %v827
    %v3213 = vunpack.c.l.b16 %v828
    %v3214 = vunpack.c.h.b16 %v828
    %v3215 = vunpack.c.l.b16 %v829
    %v3216 = vunpack.c.h.b16 %v829
    %v3217 = vunpack.c.l.b16 %v830
    %v3218 = vunpack.c.h.b16 %v830
    %v3219 = vunpack.c.l.b16 %v831
    %v3220 = vunpack.c.h.b16 %v831
    %v3221 = vunpack.c.l.b16 %v832
    %v3222 = vunpack.c.h.b16 %v832
    %v3223 = vunpack.c.l.b16 %v833
    %v3224 = vunpack.c.h.b16 %v833
    %v3225 = vunpack.c.l.b16 %v834
    %v3226 = vunpack.c.h.b16 %v834
    %v3227 = vunpack.c.l.b16 %v835
    %v3228 = vunpack.c.h.b16 %v835
    %v3229 = vunpack.c.l.b16 %v836
    %v3230 = vunpack.c.h.b16 %v836
    %v3231 = vunpack.c.l.b16 %v837
    %v3232 = vunpack.c.h.b16 %v837
    %v3233 = vunpack.c.l.b16 %v838
    %v3234 = vunpack.c.h.b16 %v838
    %v3235 = vunpack.c.l.b16 %v839
    %v3236 = vunpack.c.h.b16 %v839
    %v3237 = vunpack.c.l.b16 %v840
    %v3238 = vunpack.c.h.b16 %v840
    %v3239 = vunpack.c.l.b16 %v841
    %v3240 = vunpack.c.h.b16 %v841
    %v3241 = vunpack.c.l.b16 %v842
    %v3242 = vunpack.c.h.b16 %v842
    %v3243 = vunpack.c.l.b16 %v843
    %v3244 = vunpack.c.h.b16 %v843
    %v3245 = vunpack.c.l.b16 %v844
    %v3246 = vunpack.c.h.b16 %v844
    %v3247 = vunpack.c.l.b16 %v845
    %v3248 = vunpack.c.h.b16 %v845
    %v3249 = vunpack.c.l.b16 %v846
    %v3250 = vunpack.c.h.b16 %v846
    %v3251 = vunpack.c.l.b16 %v847
    %v3252 = vunpack.c.h.b16 %v847
    %v3253 = vunpack.c.l.b16 %v848
    %v3254 = vunpack.c.h.b16 %v848
    %v3255 = vunpack.c.l.b16 %v849
    %v3256 = vunpack.c.h.b16 %v849
    %v3257 = vunpack.c.l.b16 %v850
    %v3258 = vunpack.c.h.b16 %v850
    %v3259 = vunpack.c.l.b16 %v851
    %v3260 = vunpack.c.h.b16 %v851
    %v3261 = vunpack.c.l.b16 %v852
    %v3262 = vunpack.c.h.b16 %v852
    %v3263 = vunpack.c.l.b16 %v853
    %v3264 = vunpack.c.h.b16 %v853
    %v3265 = vunpack.c.l.b16 %v854
    %v3266 = vunpack.c.h.b16 %v854
    %v3267 = vunpack.c.l.b16 %v855
    %v3268 = vunpack.c.h.b16 %v855
    %v3269 = vunpack.c.l.b16 %v856
    %v3270 = vunpack.c.h.b16 %v856
    %v3271 = vunpack.c.l.b16 %v857
    %v3272 = vunpack.c.h.b16 %v857
    %v3273 = vunpack.c.l.b16 %v858
    %v3274 = vunpack.c.h.b16 %v858
    %v3275 = vunpack.c.l.b16 %v859
    %v3276 = vunpack.c.h.b16 %v859
    %v3277 = vunpack.c.l.b16 %v860
    %v3278 = vunpack.c.h.b16 %v860
    %v3279 = vunpack.c.l.b16 %v861
    %v3280 = vunpack.c.h.b16 %v861
    %v3281 = vunpack.c.l.b16 %v862
    %v3282 = vunpack.c.h.b16 %v862
    %v3283 = vunpack.c.l.b16 %v863
    %v3284 = vunpack.c.h.b16 %v863
    %v3285 = vunpack.c.l.b16 %v864
    %v3286 = vunpack.c.h.b16 %v864
    %v3287 = vunpack.c.l.b16 %v865
    %v3288 = vunpack.c.h.b16 %v865
    %v3289 = vunpack.c.l.b16 %v866
    %v3290 = vunpack.c.h.b16 %v866
    %v3291 = vunpack.c.l.b16 %v867
    %v3292 = vunpack.c.h.b16 %v867
    %v3293 = vunpack.c.l.b16 %v868
    %v3294 = vunpack.c.h.b16 %v868
    %v3295 = vunpack.c.l.b16 %v869
    %v3296 = vunpack.c.h.b16 %v869
    %v3297 = vunpack.c.l.b16 %v870
    %v3298 = vunpack.c.h.b16 %v870
    %v3299 = vunpack.c.l.b16 %v871
    %v3300 = vunpack.c.h.b16 %v871
    %v3301 = vunpack.c.l.b16 %v872
    %v3302 = vunpack.c.h.b16 %v872
    %v3303 = vunpack.c.l.b16 %v873
    %v3304 = vunpack.c.h.b16 %v873
    %v3305 = vunpack.c.l.b16 %v874
    %v3306 = vunpack.c.h.b16 %v874
    %v3307 = vunpack.c.l.b16 %v875
    %v3308 = vunpack.c.h.b16 %v875
    %v3309 = vunpack.c.l.b16 %v876
    %v3310 = vunpack.c.h.b16 %v876
    %v3311 = vunpack.c.l.b16 %v877
    %v3312 = vunpack.c.h.b16 %v877
    %v3313 = vunpack.c.l.b16 %v878
    %v3314 = vunpack.c.h.b16 %v878
    %v3315 = vunpack.c.l.b16 %v879
    %v3316 = vunpack.c.h.b16 %v879
    %v3317 = vunpack.c.l.b16 %v880
    %v3318 = vunpack.c.h.b16 %v880
    %v3319 = vunpack.c.l.b16 %v881
    %v3320 = vunpack.c.h.b16 %v881
    %v3321 = vunpack.c.l.b16 %v882
    %v3322 = vunpack.c.h.b16 %v882
    %v3323 = vunpack.c.l.b16 %v883
    %v3324 = vunpack.c.h.b16 %v883
    %v3325 = vunpack.c.l.b16 %v884
    %v3326 = vunpack.c.h.b16 %v884
    %v3327 = vunpack.c.l.b16 %v885
    %v3328 = vunpack.c.h.b16 %v885
    %v3329 = vunpack.c.l.b16 %v886
    %v3330 = vunpack.c.h.b16 %v886
    %v3331 = vunpack.c.l.b16 %v887
    %v3332 = vunpack.c.h.b16 %v887
    %v3333 = vunpack.c.l.b16 %v888
    %v3334 = vunpack.c.h.b16 %v888
    %v3335 = vunpack.c.l.b16 %v889
    %v3336 = vunpack.c.h.b16 %v889
    %v3337 = vunpack.c.l.b16 %v890
    %v3338 = vunpack.c.h.b16 %v890
    %v3339 = vunpack.c.l.b16 %v891
    %v3340 = vunpack.c.h.b16 %v891
    %v3341 = vunpack.c.l.b16 %v892
    %v3342 = vunpack.c.h.b16 %v892
    %v3343 = vunpack.c.l.b16 %v893
    %v3344 = vunpack.c.h.b16 %v893
    %v3345 = vunpack.c.l.b16 %v894
    %v3346 = vunpack.c.h.b16 %v894
    %v3347 = vunpack.c.l.b16 %v895
    %v3348 = vunpack.c.h.b16 %v895
    %v3349 = vunpack.c.l.b16 %v896
    %v3350 = vunpack.c.h.b16 %v896
    %v3351 = vunpack.c.l.b16 %v897
    %v3352 = vunpack.c.h.b16 %v897
    %v3353 = vunpack.c.l.b16 %v898
    %v3354 = vunpack.c.h.b16 %v898
    %v3355 = vunpack.c.l.b16 %v899
    %v3356 = vunpack.c.h.b16 %v899
    %v3357 = vunpack.c.l.b16 %v900
    %v3358 = vunpack.c.h.b16 %v900
    %v3359 = vunpack.c.l.b16 %v901
    %v3360 = vunpack.c.h.b16 %v901
    %v3361 = vunpack.c.l.b16 %v902
    %v3362 = vunpack.c.h.b16 %v902
    %v3363 = vunpack.c.l.b16 %v903
    %v3364 = vunpack.c.h.b16 %v903
    %v3365 = vunpack.c.l.b16 %v904
    %v3366 = vunpack.c.h.b16 %v904
    %v3367 = vunpack.c.l.b16 %v905
    %v3368 = vunpack.c.h.b16 %v905
    %v3369 = vunpack.c.l.b16 %v906
    %v3370 = vunpack.c.h.b16 %v906
    %v3371 = vunpack.c.l.b16 %v907
    %v3372 = vunpack.c.h.b16 %v907
    %v3373 = vunpack.c.l.b16 %v908
    %v3374 = vunpack.c.h.b16 %v908
    %v3375 = vunpack.c.l.b16 %v909
    %v3376 = vunpack.c.h.b16 %v909
    %v3377 = vunpack.c.l.b16 %v910
    %v3378 = vunpack.c.h.b16 %v910
    %v3379 = vunpack.c.l.b16 %v911
    %v3380 = vunpack.c.h.b16 %v911
    %v3381 = vunpack.c.l.b16 %v912
    %v3382 = vunpack.c.h.b16 %v912
    %v3383 = vunpack.c.l.b16 %v913
    %v3384 = vunpack.c.h.b16 %v913
    %v3385 = vunpack.c.l.b16 %v914
    %v3386 = vunpack.c.h.b16 %v914
    %v3387 = vunpack.c.l.b16 %v915
    %v3388 = vunpack.c.h.b16 %v915
    %v3389 = vunpack.c.l.b16 %v916
    %v3390 = vunpack.c.h.b16 %v916
    %v3391 = vunpack.c.l.b16 %v917
    %v3392 = vunpack.c.h.b16 %v917
    %v3393 = vunpack.c.l.b16 %v918
    %v3394 = vunpack.c.h.b16 %v918
    %v3395 = vunpack.c.l.b16 %v919
    %v3396 = vunpack.c.h.b16 %v919
    %v3397 = vunpack.c.l.b16 %v920
    %v3398 = vunpack.c.h.b16 %v920
    %v3399 = vunpack.c.l.b16 %v921
    %v3400 = vunpack.c.h.b16 %v921
    %v3401 = vunpack.c.l.b16 %v922
    %v3402 = vunpack.c.h.b16 %v922
    %v3403 = vunpack.c.l.b16 %v923
    %v3404 = vunpack.c.h.b16 %v923
    %v3405 = vunpack.c.l.b16 %v924
    %v3406 = vunpack.c.h.b16 %v924
    %v3407 = vunpack.c.l.b16 %v925
    %v3408 = vunpack.c.h.b16 %v925
    %v3409 = vunpack.c.l.b16 %v926
    %v3410 = vunpack.c.h.b16 %v926
    %v3411 = vunpack.c.l.b16 %v927
    %v3412 = vunpack.c.h.b16 %v927
    %v3413 = vunpack.c.l.b16 %v928
    %v3414 = vunpack.c.h.b16 %v928
    %v3415 = vunpack.c.l.b16 %v929
    %v3416 = vunpack.c.h.b16 %v929
    %v3417 = vunpack.c.l.b16 %v930
    %v3418 = vunpack.c.h.b16 %v930
    %v3419 = vunpack.c.l.b16 %v931
    %v3420 = vunpack.c.h.b16 %v931
    %v3421 = vunpack.c.l.b16 %v932
    %v3422 = vunpack.c.h.b16 %v932
    %v3423 = vunpack.c.l.b16 %v933
    %v3424 = vunpack.c.h.b16 %v933
    %v3425 = vunpack.c.l.b16 %v934
    %v3426 = vunpack.c.h.b16 %v934
    %v3427 = vunpack.c.l.b16 %v935
    %v3428 = vunpack.c.h.b16 %v935
    %v3429 = vunpack.c.l.b16 %v936
    %v3430 = vunpack.c.h.b16 %v936
    %v3431 = vunpack.c.l.b16 %v937
    %v3432 = vunpack.c.h.b16 %v937
    %v3433 = vunpack.c.l.b16 %v938
    %v3434 = vunpack.c.h.b16 %v938
    %v3435 = vunpack.c.l.b16 %v939
    %v3436 = vunpack.c.h.b16 %v939
    %v3437 = vunpack.c.l.b16 %v940
    %v3438 = vunpack.c.h.b16 %v940
    %v3439 = vunpack.c.l.b16 %v941
    %v3440 = vunpack.c.h.b16 %v941
    %v3441 = vunpack.c.l.b16 %v942
    %v3442 = vunpack.c.h.b16 %v942
    %v3443 = vunpack.c.l.b16 %v943
    %v3444 = vunpack.c.h.b16 %v943
    %v3445 = vunpack.c.l.b16 %v944
    %v3446 = vunpack.c.h.b16 %v944
    %v3447 = vunpack.c.l.b16 %v945
    %v3448 = vunpack.c.h.b16 %v945
    %v3449 = vunpack.c.l.b16 %v946
    %v3450 = vunpack.c.h.b16 %v946
    %v3451 = vunpack.c.l.b16 %v947
    %v3452 = vunpack.c.h.b16 %v947
    %v3453 = vunpack.c.l.b16 %v948
    %v3454 = vunpack.c.h.b16 %v948
    %v3455 = vunpack.c.l.b16 %v949
    %v3456 = vunpack.c.h.b16 %v949
    %v3457 = vunpack.c.l.b16 %v950
    %v3458 = vunpack.c.h.b16 %v950
    %v3459 = vunpack.c.l.b16 %v951
    %v3460 = vunpack.c.h.b16 %v951
    %v3461 = vunpack.c.l.b16 %v952
    %v3462 = vunpack.c.h.b16 %v952
    %v3463 = vunpack.c.l.b16 %v953
    %v3464 = vunpack.c.h.b16 %v953
    %v3465 = vunpack.c.l.b16 %v954
    %v3466 = vunpack.c.h.b16 %v954
    %v3467 = vunpack.c.l.b16 %v955
    %v3468 = vunpack.c.h.b16 %v955
    %v3469 = vunpack.c.l.b16 %v956
    %v3470 = vunpack.c.h.b16 %v956
    %v3471 = vunpack.c.l.b16 %v957
    %v3472 = vunpack.c.h.b16 %v957
    %v3473 = vunpack.c.l.b16 %v958
    %v3474 = vunpack.c.h.b16 %v958
    %v3475 = vunpack.c.l.b16 %v959
    %v3476 = vunpack.c.h.b16 %v959
    %v3477 = vunpack.c.l.b16 %v960
    %v3478 = vunpack.c.h.b16 %v960
    %v3479 = vunpack.c.l.b16 %v961
    %v3480 = vunpack.c.h.b16 %v961
    %v3481 = vunpack.c.l.b16 %v962
    %v3482 = vunpack.c.h.b16 %v962
    %v3483 = vunpack.c.l.b16 %v963
    %v3484 = vunpack.c.h.b16 %v963
    %v3485 = vunpack.c.l.b16 %v964
    %v3486 = vunpack.c.h.b16 %v964
    %v3487 = vunpack.c.l.b16 %v965
    %v3488 = vunpack.c.h.b16 %v965
    %v3489 = vunpack.c.l.b16 %v966
    %v3490 = vunpack.c.h.b16 %v966
    %v3491 = vunpack.c.l.b16 %v967
    %v3492 = vunpack.c.h.b16 %v967
    %v3493 = vunpack.c.l.b16 %v968
    %v3494 = vunpack.c.h.b16 %v968
    %v3495 = vunpack.c.l.b16 %v969
    %v3496 = vunpack.c.h.b16 %v969
    %v3497 = vunpack.c.l.b16 %v970
    %v3498 = vunpack.c.h.b16 %v970
    %v3499 = vunpack.c.l.b16 %v971
    %v3500 = vunpack.c.h.b16 %v971
    %v3501 = vunpack.c.l.b16 %v972
    %v3502 = vunpack.c.h.b16 %v972
    %v3503 = vunpack.c.l.b16 %v973
    %v3504 = vunpack.c.h.b16 %v973
    %v3505 = vunpack.c.l.b16 %v974
    %v3506 = vunpack.c.h.b16 %v974
    %v3507 = vunpack.c.l.b16 %v975
    %v3508 = vunpack.c.h.b16 %v975
    %v3509 = vunpack.c.l.b16 %v976
    %v3510 = vunpack.c.h.b16 %v976
    %v3511 = vunpack.c.l.b16 %v977
    %v3512 = vunpack.c.h.b16 %v977
    %v3513 = vunpack.c.l.b16 %v978
    %v3514 = vunpack.c.h.b16 %v978
    %v3515 = vunpack.c.l.b16 %v979
    %v3516 = vunpack.c.h.b16 %v979
    %v3517 = vunpack.c.l.b16 %v980
    %v3518 = vunpack.c.h.b16 %v980
    %v3519 = vunpack.c.l.b16 %v981
    %v3520 = vunpack.c.h.b16 %v981
    %v3521 = vunpack.c.l.b16 %v982
    %v3522 = vunpack.c.h.b16 %v982
    %v3523 = vunpack.c.l.b16 %v983
    %v3524 = vunpack.c.h.b16 %v983
    %v3525 = vunpack.c.l.b16 %v984
    %v3526 = vunpack.c.h.b16 %v984
    %v3527 = vunpack.c.l.b16 %v985
    %v3528 = vunpack.c.h.b16 %v985
    %v3529 = vunpack.c.l.b16 %v986
    %v3530 = vunpack.c.h.b16 %v986
    %v3531 = vunpack.c.l.b16 %v987
    %v3532 = vunpack.c.h.b16 %v987
    %v3533 = vunpack.c.l.b16 %v988
    %v3534 = vunpack.c.h.b16 %v988
    %v3535 = vunpack.c.l.b16 %v989
    %v3536 = vunpack.c.h.b16 %v989
    %v3537 = vunpack.c.l.b16 %v990
    %v3538 = vunpack.c.h.b16 %v990
    %v3539 = vunpack.c.l.b16 %v991
    %v3540 = vunpack.c.h.b16 %v991
    %v3541 = vunpack.c.l.b16 %v992
    %v3542 = vunpack.c.h.b16 %v992
    %v3543 = vunpack.c.l.b16 %v993
    %v3544 = vunpack.c.h.b16 %v993
    %v3545 = vunpack.c.l.b16 %v994
    %v3546 = vunpack.c.h.b16 %v994
    %v3547 = vunpack.c.l.b16 %v995
    %v3548 = vunpack.c.h.b16 %v995
    %v3549 = vunpack.c.l.b16 %v996
    %v3550 = vunpack.c.h.b16 %v996
    %v3551 = vunpack.c.l.b16 %v997
    %v3552 = vunpack.c.h.b16 %v997
    %v3553 = vunpack.c.l.b16 %v998
    %v3554 = vunpack.c.h.b16 %v998
    %v3555 = vunpack.c.l.b16 %v999
    %v3556 = vunpack.c.h.b16 %v999
    %v3557 = vunpack.c.l.b16 %v1000
    %v3558 = vunpack.c.h.b16 %v1000
    %v3559 = vunpack.c.l.b16 %v1001
    %v3560 = vunpack.c.h.b16 %v1001
    %v3561 = vunpack.c.l.b16 %v1002
    %v3562 = vunpack.c.h.b16 %v1002
    %v3563 = vunpack.c.l.b16 %v1003
    %v3564 = vunpack.c.h.b16 %v1003
    %v3565 = vunpack.c.l.b16 %v1004
    %v3566 = vunpack.c.h.b16 %v1004
    %v3567 = vunpack.c.l.b16 %v1005
    %v3568 = vunpack.c.h.b16 %v1005
    %v3569 = vunpack.c.l.b16 %v1006
    %v3570 = vunpack.c.h.b16 %v1006
    %v3571 = vunpack.c.l.b16 %v1007
    %v3572 = vunpack.c.h.b16 %v1007
    %v3573 = vunpack.c.l.b16 %v1008
    %v3574 = vunpack.c.h.b16 %v1008
    %v3575 = vunpack.c.l.b16 %v1009
    %v3576 = vunpack.c.h.b16 %v1009
    %v3577 = vunpack.c.l.b16 %v1010
    %v3578 = vunpack.c.h.b16 %v1010
    %v3579 = vunpack.c.l.b16 %v1011
    %v3580 = vunpack.c.h.b16 %v1011
    %v3581 = vunpack.c.l.b16 %v1012
    %v3582 = vunpack.c.h.b16 %v1012
    %v3583 = vunpack.c.l.b16 %v1013
    %v3584 = vunpack.c.h.b16 %v1013
    %v3585 = vunpack.c.l.b16 %v1014
    %v3586 = vunpack.c.h.b16 %v1014
    %v3587 = vunpack.c.l.b16 %v1015
    %v3588 = vunpack.c.h.b16 %v1015
    %v3589 = vunpack.c.l.b16 %v1016
    %v3590 = vunpack.c.h.b16 %v1016
    %v3591 = vunpack.c.l.b16 %v1017
    %v3592 = vunpack.c.h.b16 %v1017
    %v3593 = vunpack.c.l.b16 %v1018
    %v3594 = vunpack.c.h.b16 %v1018
    %v3595 = vunpack.c.l.b16 %v1019
    %v3596 = vunpack.c.h.b16 %v1019
    %v3597 = vunpack.c.l.b16 %v1020
    %v3598 = vunpack.c.h.b16 %v1020
    %v3599 = vunpack.c.l.b16 %v1021
    %v3600 = vunpack.c.h.b16 %v1021
    %v3601 = vunpack.c.l.b16 %v1022
    %v3602 = vunpack.c.h.b16 %v1022
    %v3603 = vunpack.c.l.b16 %v1023
    %v3604 = vunpack.c.h.b16 %v1023
    %v3605 = vunpack.c.l.b16 %v1024
    %v3606 = vunpack.c.h.b16 %v1024
    %v3607 = vunpack.c.l.b16 %v1025
    %v3608 = vunpack.c.h.b16 %v1025
    %v3609 = vunpack.c.l.b16 %v1026
    %v3610 = vunpack.c.h.b16 %v1026
    %v3611 = vunpack.c.l.b16 %v1027
    %v3612 = vunpack.c.h.b16 %v1027
    %v3613 = vunpack.c.l.b16 %v1028
    %v3614 = vunpack.c.h.b16 %v1028
    %v3615 = vunpack.c.l.b16 %v1029
    %v3616 = vunpack.c.h.b16 %v1029
    %v3617 = vunpack.c.l.b16 %v1030
    %v3618 = vunpack.c.h.b16 %v1030
    %v3619 = vunpack.c.l.b16 %v1031
    %v3620 = vunpack.c.h.b16 %v1031
    %v3621 = vunpack.c.l.b16 %v1032
    %v3622 = vunpack.c.h.b16 %v1032
    %v3623 = vunpack.c.l.b16 %v1033
    %v3624 = vunpack.c.h.b16 %v1033
    %v3625 = vunpack.c.l.b16 %v1034
    %v3626 = vunpack.c.h.b16 %v1034
    %v3627 = vunpack.c.l.b16 %v1035
    %v3628 = vunpack.c.h.b16 %v1035
    %v3629 = vunpack.c.l.b16 %v1036
    %v3630 = vunpack.c.h.b16 %v1036
    %v3631 = vunpack.c.l.b16 %v1037
    %v3632 = vunpack.c.h.b16 %v1037
    %v3633 = vunpack.c.l.b16 %v1038
    %v3634 = vunpack.c.h.b16 %v1038
    %v3635 = vunpack.c.l.b16 %v1039
    %v3636 = vunpack.c.h.b16 %v1039
    %v3637 = vunpack.c.l.b16 %v1040
    %v3638 = vunpack.c.h.b16 %v1040
    %v3639 = vunpack.c.l.b16 %v1041
    %v3640 = vunpack.c.h.b16 %v1041
    %v3641 = vunpack.c.l.b16 %v1042
    %v3642 = vunpack.c.h.b16 %v1042
    %v3643 = vunpack.c.l.b16 %v1043
    %v3644 = vunpack.c.h.b16 %v1043
    %v3645 = vunpack.c.l.b16 %v1044
    %v3646 = vunpack.c.h.b16 %v1044
    %v3647 = vunpack.c.l.b16 %v1045
    %v3648 = vunpack.c.h.b16 %v1045
    %v3649 = vunpack.c.l.b16 %v1046
    %v3650 = vunpack.c.h.b16 %v1046
    %v3651 = vunpack.c.l.b16 %v1047
    %v3652 = vunpack.c.h.b16 %v1047
    %v3653 = vunpack.c.l.b16 %v1048
    %v3654 = vunpack.c.h.b16 %v1048
    %v3655 = vunpack.c.l.b16 %v1049
    %v3656 = vunpack.c.h.b16 %v1049
    %v3657 = vunpack.c.l.b16 %v1050
    %v3658 = vunpack.c.h.b16 %v1050
    %v3659 = vunpack.c.l.b16 %v1051
    %v3660 = vunpack.c.h.b16 %v1051
    %v3661 = vunpack.c.l.b16 %v1052
    %v3662 = vunpack.c.h.b16 %v1052
    %v3663 = vunpack.c.l.b16 %v1053
    %v3664 = vunpack.c.h.b16 %v1053
    %v3665 = vunpack.c.l.b16 %v1054
    %v3666 = vunpack.c.h.b16 %v1054
    %v3667 = vunpack.c.l.b16 %v1055
    %v3668 = vunpack.c.h.b16 %v1055
    %v3669 = vunpack.c.l.b16 %v1056
    %v3670 = vunpack.c.h.b16 %v1056
    %v3671 = vunpack.c.l.b16 %v1057
    %v3672 = vunpack.c.h.b16 %v1057
    %v3673 = vunpack.c.l.b16 %v1058
    %v3674 = vunpack.c.h.b16 %v1058
    %v3675 = vunpack.c.l.b16 %v1059
    %v3676 = vunpack.c.h.b16 %v1059
    %v3677 = vunpack.c.l.b16 %v1060
    %v3678 = vunpack.c.h.b16 %v1060
    %v3679 = vunpack.c.l.b16 %v1061
    %v3680 = vunpack.c.h.b16 %v1061
    %v3681 = vunpack.c.l.b16 %v1062
    %v3682 = vunpack.c.h.b16 %v1062
    %v3683 = vunpack.c.l.b16 %v1063
    %v3684 = vunpack.c.h.b16 %v1063
    %v3685 = vunpack.c.l.b16 %v1064
    %v3686 = vunpack.c.h.b16 %v1064
    %v3687 = vunpack.c.l.b16 %v1065
    %v3688 = vunpack.c.h.b16 %v1065
    %v3689 = vunpack.c.l.b16 %v1066
    %v3690 = vunpack.c.h.b16 %v1066
    %v3691 = vunpack.c.l.b16 %v1067
    %v3692 = vunpack.c.h.b16 %v1067
    %v3693 = vunpack.c.l.b16 %v1068
    %v3694 = vunpack.c.h.b16 %v1068
    %v3695 = vunpack.c.l.b16 %v1069
    %v3696 = vunpack.c.h.b16 %v1069
    %v3697 = vunpack.c.l.b16 %v1070
    %v3698 = vunpack.c.h.b16 %v1070
    %v3699 = vunpack.c.l.b16 %v1071
    %v3700 = vunpack.c.h.b16 %v1071
    %v3701 = vunpack.c.l.b16 %v1072
    %v3702 = vunpack.c.h.b16 %v1072
    %v3703 = vunpack.c.l.b16 %v1073
    %v3704 = vunpack.c.h.b16 %v1073
    %v3705 = vunpack.c.l.b16 %v1074
    %v3706 = vunpack.c.h.b16 %v1074
    %v3707 = vunpack.c.l.b16 %v1075
    %v3708 = vunpack.c.h.b16 %v1075
    %v3709 = vunpack.c.l.b16 %v1076
    %v3710 = vunpack.c.h.b16 %v1076
    %v3711 = vunpack.c.l.b16 %v1077
    %v3712 = vunpack.c.h.b16 %v1077
    %v3713 = vunpack.c.l.b16 %v1078
    %v3714 = vunpack.c.h.b16 %v1078
    %v3715 = vunpack.c.l.b16 %v1079
    %v3716 = vunpack.c.h.b16 %v1079
    %v3717 = vunpack.c.l.b16 %v1080
    %v3718 = vunpack.c.h.b16 %v1080
    %v3719 = vunpack.c.l.b16 %v1081
    %v3720 = vunpack.c.h.b16 %v1081
    %v3721 = vunpack.c.l.b16 %v1082
    %v3722 = vunpack.c.h.b16 %v1082
    %v3723 = vunpack.c.l.b16 %v1083
    %v3724 = vunpack.c.h.b16 %v1083
    %v3725 = vunpack.c.l.b16 %v1084
    %v3726 = vunpack.c.h.b16 %v1084
    %v3727 = vunpack.c.l.b16 %v1085
    %v3728 = vunpack.c.h.b16 %v1085
    %v3729 = vunpack.c.l.b16 %v1086
    %v3730 = vunpack.c.h.b16 %v1086
    %v3731 = vunpack.c.l.b16 %v1087
    %v3732 = vunpack.c.h.b16 %v1087
    %v3733 = vunpack.c.l.b16 %v1088
    %v3734 = vunpack.c.h.b16 %v1088
    %v3735 = vunpack.c.l.b16 %v1089
    %v3736 = vunpack.c.h.b16 %v1089
    %v3737 = vunpack.c.l.b16 %v1090
    %v3738 = vunpack.c.h.b16 %v1090
    %v3739 = vunpack.c.l.b16 %v1091
    %v3740 = vunpack.c.h.b16 %v1091
    %v3741 = vunpack.c.l.b16 %v1092
    %v3742 = vunpack.c.h.b16 %v1092
    %v3743 = vunpack.c.l.b16 %v1093
    %v3744 = vunpack.c.h.b16 %v1093
    %v3745 = vunpack.c.l.b16 %v1094
    %v3746 = vunpack.c.h.b16 %v1094
    %v3747 = vunpack.c.l.b16 %v1095
    %v3748 = vunpack.c.h.b16 %v1095
    %v3749 = vunpack.c.l.b16 %v1096
    %v3750 = vunpack.c.h.b16 %v1096
    %v3751 = vunpack.c.l.b16 %v1097
    %v3752 = vunpack.c.h.b16 %v1097
    %v3753 = vunpack.c.l.b16 %v1098
    %v3754 = vunpack.c.h.b16 %v1098
    %v3755 = vunpack.c.l.b16 %v1099
    %v3756 = vunpack.c.h.b16 %v1099
    %v3757 = vunpack.c.l.b16 %v1100
    %v3758 = vunpack.c.h.b16 %v1100
    %v3759 = vunpack.c.l.b16 %v1101
    %v3760 = vunpack.c.h.b16 %v1101
    %v3761 = vunpack.c.l.b16 %v1102
    %v3762 = vunpack.c.h.b16 %v1102
    %v3763 = vunpack.c.l.b16 %v1103
    %v3764 = vunpack.c.h.b16 %v1103
    %v3765 = vunpack.c.l.b16 %v1104
    %v3766 = vunpack.c.h.b16 %v1104
    %v3767 = vunpack.c.l.b16 %v1105
    %v3768 = vunpack.c.h.b16 %v1105
    %v3769 = vunpack.c.l.b16 %v1106
    %v3770 = vunpack.c.h.b16 %v1106
    %v3771 = vunpack.c.l.b16 %v1107
    %v3772 = vunpack.c.h.b16 %v1107
    %v3773 = vunpack.c.l.b16 %v1108
    %v3774 = vunpack.c.h.b16 %v1108
    %v3775 = vunpack.c.l.b16 %v1109
    %v3776 = vunpack.c.h.b16 %v1109
    %v3777 = vunpack.c.l.b16 %v1110
    %v3778 = vunpack.c.h.b16 %v1110
    %v3779 = vunpack.c.l.b16 %v1111
    %v3780 = vunpack.c.h.b16 %v1111
    %v3781 = vunpack.c.l.b16 %v1112
    %v3782 = vunpack.c.h.b16 %v1112
    %v3783 = vunpack.c.l.b16 %v1113
    %v3784 = vunpack.c.h.b16 %v1113
    %v3785 = vunpack.c.l.b16 %v1114
    %v3786 = vunpack.c.h.b16 %v1114
    %v3787 = vunpack.c.l.b16 %v1115
    %v3788 = vunpack.c.h.b16 %v1115
    %v3789 = vunpack.c.l.b16 %v1116
    %v3790 = vunpack.c.h.b16 %v1116
    %v3791 = vunpack.c.l.b16 %v1117
    %v3792 = vunpack.c.h.b16 %v1117
    %v3793 = vunpack.c.l.b16 %v1118
    %v3794 = vunpack.c.h.b16 %v1118
    %v3795 = vunpack.c.l.b16 %v1119
    %v3796 = vunpack.c.h.b16 %v1119
    %v3797 = vunpack.c.l.b16 %v1120
    %v3798 = vunpack.c.h.b16 %v1120
    %v3799 = vunpack.c.l.b16 %v1121
    %v3800 = vunpack.c.h.b16 %v1121
    %v3801 = vunpack.c.l.b16 %v1122
    %v3802 = vunpack.c.h.b16 %v1122
    %v3803 = vunpack.c.l.b16 %v1123
    %v3804 = vunpack.c.h.b16 %v1123
    %v3805 = vunpack.c.l.b16 %v1124
    %v3806 = vunpack.c.h.b16 %v1124
    %v3807 = vunpack.c.l.b16 %v1125
    %v3808 = vunpack.c.h.b16 %v1125
    %v3809 = vunpack.c.l.b16 %v1126
    %v3810 = vunpack.c.h.b16 %v1126
    %v3811 = vunpack.c.l.b16 %v1127
    %v3812 = vunpack.c.h.b16 %v1127
    %v3813 = vunpack.c.l.b16 %v1128
    %v3814 = vunpack.c.h.b16 %v1128
    %v3815 = vunpack.c.l.b16 %v1129
    %v3816 = vunpack.c.h.b16 %v1129
    %v3817 = vunpack.c.l.b16 %v1130
    %v3818 = vunpack.c.h.b16 %v1130
    %v3819 = vunpack.c.l.b16 %v1131
    %v3820 = vunpack.c.h.b16 %v1131
    %v3821 = vunpack.c.l.b16 %v1132
    %v3822 = vunpack.c.h.b16 %v1132
    %v3823 = vunpack.c.l.b16 %v1133
    %v3824 = vunpack.c.h.b16 %v1133
    %v3825 = vunpack.c.l.b16 %v1134
    %v3826 = vunpack.c.h.b16 %v1134
    %v3827 = vunpack.c.l.b16 %v1135
    %v3828 = vunpack.c.h.b16 %v1135
    %v3829 = vunpack.c.l.b16 %v1136
    %v3830 = vunpack.c.h.b16 %v1136
    %v3831 = vunpack.c.l.b16 %v1137
    %v3832 = vunpack.c.h.b16 %v1137
    %v3833 = vunpack.c.l.b16 %v1138
    %v3834 = vunpack.c.h.b16 %v1138
    %v3835 = vunpack.c.l.b16 %v1139
    %v3836 = vunpack.c.h.b16 %v1139
    %v3837 = vunpack.c.l.b16 %v1140
    %v3838 = vunpack.c.h.b16 %v1140
    %v3839 = vunpack.c.l.b16 %v1141
    %v3840 = vunpack.c.h.b16 %v1141
    %v3841 = vunpack.c.l.b16 %v1142
    %v3842 = vunpack.c.h.b16 %v1142
    %v3843 = vunpack.c.l.b16 %v1143
    %v3844 = vunpack.c.h.b16 %v1143
    %v3845 = vunpack.c.l.b16 %v1144
    %v3846 = vunpack.c.h.b16 %v1144
    %v3847 = vunpack.c.l.b16 %v1145
    %v3848 = vunpack.c.h.b16 %v1145
    %v3849 = vunpack.c.l.b16 %v1146
    %v3850 = vunpack.c.h.b16 %v1146
    %v3851 = vunpack.c.l.b16 %v1147
    %v3852 = vunpack.c.h.b16 %v1147
    %v3853 = vunpack.c.l.b16 %v1148
    %v3854 = vunpack.c.h.b16 %v1148
    %v3855 = vunpack.c.l.b16 %v1149
    %v3856 = vunpack.c.h.b16 %v1149
    %v3857 = vunpack.c.l.b16 %v1150
    %v3858 = vunpack.c.h.b16 %v1150
    %v3859 = vunpack.c.l.b16 %v1151
    %v3860 = vunpack.c.h.b16 %v1151
    %v3861 = vunpack.c.l.b16 %v1152
    %v3862 = vunpack.c.h.b16 %v1152
    %v3863 = vunpack.c.l.b16 %v1153
    %v3864 = vunpack.c.h.b16 %v1153
    %v3865 = vunpack.c.l.b16 %v1154
    %v3866 = vunpack.c.h.b16 %v1154
    %v3867 = vunpack.c.l.b16 %v1155
    %v3868 = vunpack.c.h.b16 %v1155
    %v3869 = vunpack.c.l.b16 %v1156
    %v3870 = vunpack.c.h.b16 %v1156
    %v3871 = vunpack.c.l.b16 %v1157
    %v3872 = vunpack.c.h.b16 %v1157
    %v3873 = vunpack.c.l.b16 %v1158
    %v3874 = vunpack.c.h.b16 %v1158
    %v3875 = vunpack.c.l.b16 %v1159
    %v3876 = vunpack.c.h.b16 %v1159
    %v3877 = vunpack.c.l.b16 %v1160
    %v3878 = vunpack.c.h.b16 %v1160
    %v3879 = vunpack.c.l.b16 %v1161
    %v3880 = vunpack.c.h.b16 %v1161
    %v3881 = vunpack.c.l.b16 %v1162
    %v3882 = vunpack.c.h.b16 %v1162
    %v3883 = vunpack.c.l.b16 %v1163
    %v3884 = vunpack.c.h.b16 %v1163
    %v3885 = vunpack.c.l.b16 %v1164
    %v3886 = vunpack.c.h.b16 %v1164
    %v3887 = vunpack.c.l.b16 %v1165
    %v3888 = vunpack.c.h.b16 %v1165
    %v3889 = vunpack.c.l.b16 %v1166
    %v3890 = vunpack.c.h.b16 %v1166
    %v3891 = vunpack.c.l.b16 %v1167
    %v3892 = vunpack.c.h.b16 %v1167
    %v3893 = vunpack.c.l.b16 %v1168
    %v3894 = vunpack.c.h.b16 %v1168
    %v3895 = vunpack.c.l.b16 %v1169
    %v3896 = vunpack.c.h.b16 %v1169
    %v3897 = vunpack.c.l.b16 %v1170
    %v3898 = vunpack.c.h.b16 %v1170
    %v3899 = vunpack.c.l.b16 %v1171
    %v3900 = vunpack.c.h.b16 %v1171
    %v3901 = vunpack.c.l.b16 %v1172
    %v3902 = vunpack.c.h.b16 %v1172
    %v3903 = vunpack.c.l.b16 %v1173
    %v3904 = vunpack.c.h.b16 %v1173
    %v3905 = vunpack.c.l.b16 %v1174
    %v3906 = vunpack.c.h.b16 %v1174
    %v3907 = vunpack.c.l.b16 %v1175
    %v3908 = vunpack.c.h.b16 %v1175
    %v3909 = vunpack.c.l.b16 %v1176
    %v3910 = vunpack.c.h.b16 %v1176
    %v3911 = vunpack.c.l.b16 %v1177
    %v3912 = vunpack.c.h.b16 %v1177
    %v3913 = vunpack.c.l.b16 %v1178
    %v3914 = vunpack.c.h.b16 %v1178
    %v3915 = vunpack.c.l.b16 %v1179
    %v3916 = vunpack.c.h.b16 %v1179
    %v3917 = vunpack.c.l.b16 %v1180
    %v3918 = vunpack.c.h.b16 %v1180
    %v3919 = vunpack.c.l.b16 %v1181
    %v3920 = vunpack.c.h.b16 %v1181
    %v3921 = vunpack.c.l.b16 %v1182
    %v3922 = vunpack.c.h.b16 %v1182
    %v3923 = vunpack.c.l.b16 %v1183
    %v3924 = vunpack.c.h.b16 %v1183
    %v3925 = vunpack.c.l.b16 %v1184
    %v3926 = vunpack.c.h.b16 %v1184
    %v3927 = vunpack.c.l.b16 %v1185
    %v3928 = vunpack.c.h.b16 %v1185
    %v3929 = vunpack.c.l.b16 %v1186
    %v3930 = vunpack.c.h.b16 %v1186
    %v3931 = vunpack.c.l.b16 %v1187
    %v3932 = vunpack.c.h.b16 %v1187
    %v3933 = vunpack.c.l.b16 %v1188
    %v3934 = vunpack.c.h.b16 %v1188
    %v3935 = vunpack.c.l.b16 %v1189
    %v3936 = vunpack.c.h.b16 %v1189
    %v3937 = vunpack.c.l.b16 %v1190
    %v3938 = vunpack.c.h.b16 %v1190
    %v3939 = vunpack.c.l.b16 %v1191
    %v3940 = vunpack.c.h.b16 %v1191
    %v3941 = vunpack.c.l.b16 %v1192
    %v3942 = vunpack.c.h.b16 %v1192
    %v3943 = vunpack.c.l.b16 %v1193
    %v3944 = vunpack.c.h.b16 %v1193
    %v3945 = vunpack.c.l.b16 %v1194
    %v3946 = vunpack.c.h.b16 %v1194
    %v3947 = vunpack.c.l.b16 %v1195
    %v3948 = vunpack.c.h.b16 %v1195
    %v3949 = vunpack.c.l.b16 %v1196
    %v3950 = vunpack.c.h.b16 %v1196
    %v3951 = vunpack.c.l.b16 %v1197
    %v3952 = vunpack.c.h.b16 %v1197
    %v3953 = vunpack.c.l.b16 %v1198
    %v3954 = vunpack.c.h.b16 %v1198
    %v3955 = vunpack.c.l.b16 %v1199
    %v3956 = vunpack.c.h.b16 %v1199
    %v3957 = vunpack.c.l.b16 %v1200
    %v3958 = vunpack.c.h.b16 %v1200
    %v3959 = vunpack.c.l.b16 %v1201
    %v3960 = vunpack.c.h.b16 %v1201
    %v3961 = vunpack.c.l.b16 %v1202
    %v3962 = vunpack.c.h.b16 %v1202
    %v3963 = vunpack.c.l.b16 %v1203
    %v3964 = vunpack.c.h.b16 %v1203
    %v3965 = vunpack.c.l.b16 %v1204
    %v3966 = vunpack.c.h.b16 %v1204
    %v3967 = vunpack.c.l.b16 %v1205
    %v3968 = vunpack.c.h.b16 %v1205
    %v3969 = vunpack.c.l.b16 %v1206
    %v3970 = vunpack.c.h.b16 %v1206
    %v3971 = vunpack.c.l.b16 %v1207
    %v3972 = vunpack.c.h.b16 %v1207
    %v3973 = vunpack.c.l.b16 %v1208
    %v3974 = vunpack.c.h.b16 %v1208
    %v3975 = vunpack.c.l.b16 %v1209
    %v3976 = vunpack.c.h.b16 %v1209
    %v3977 = vunpack.c.l.b16 %v1210
    %v3978 = vunpack.c.h.b16 %v1210
    %v3979 = vunpack.c.l.b16 %v1211
    %v3980 = vunpack.c.h.b16 %v1211
    %v3981 = vunpack.c.l.b16 %v1212
    %v3982 = vunpack.c.h.b16 %v1212
    %v3983 = vunpack.c.l.b16 %v1213
    %v3984 = vunpack.c.h.b16 %v1213
    %v3985 = vunpack.c.l.b16 %v1214
    %v3986 = vunpack.c.h.b16 %v1214
    %v3987 = vunpack.c.l.b16 %v1215
    %v3988 = vunpack.c.h.b16 %v1215
    %v3989 = vunpack.c.l.b16 %v1216
    %v3990 = vunpack.c.h.b16 %v1216
    %v3991 = vunpack.c.l.b16 %v1217
    %v3992 = vunpack.c.h.b16 %v1217
    %v3993 = vunpack.c.l.b16 %v1218
    %v3994 = vunpack.c.h.b16 %v1218
    %v3995 = vunpack.c.l.b16 %v1219
    %v3996 = vunpack.c.h.b16 %v1219
    %v3997 = vunpack.c.l.b16 %v1220
    %v3998 = vunpack.c.h.b16 %v1220
    %v3999 = vunpack.c.l.b16 %v1221
    %v4000 = vunpack.c.h.b16 %v1221
    %v4001 = vunpack.c.l.b16 %v1222
    %v4002 = vunpack.c.h.b16 %v1222
    %v4003 = vunpack.c.l.b16 %v1223
    %v4004 = vunpack.c.h.b16 %v1223
    %v4005 = vunpack.c.l.b16 %v1224
    %v4006 = vunpack.c.h.b16 %v1224
    %v4007 = vunpack.c.l.b16 %v1225
    %v4008 = vunpack.c.h.b16 %v1225
    %v4009 = vunpack.c.l.b16 %v1226
    %v4010 = vunpack.c.h.b16 %v1226
    %v4011 = vunpack.c.l.b16 %v1227
    %v4012 = vunpack.c.h.b16 %v1227
    %v4013 = vunpack.c.l.b16 %v1228
    %v4014 = vunpack.c.h.b16 %v1228
    %v4015 = vunpack.c.l.b16 %v1229
    %v4016 = vunpack.c.h.b16 %v1229
    %v4017 = vunpack.c.l.b16 %v1230
    %v4018 = vunpack.c.h.b16 %v1230
    %v4019 = vunpack.c.l.b16 %v1231
    %v4020 = vunpack.c.h.b16 %v1231
    %v4021 = vunpack.c.l.b16 %v1232
    %v4022 = vunpack.c.h.b16 %v1232
    %v4023 = vunpack.c.l.b16 %v1233
    %v4024 = vunpack.c.h.b16 %v1233
    %v4025 = vunpack.c.l.b16 %v1234
    %v4026 = vunpack.c.h.b16 %v1234
    %v4027 = vunpack.c.l.b16 %v1235
    %v4028 = vunpack.c.h.b16 %v1235
    %v4029 = vunpack.c.l.b16 %v1236
    %v4030 = vunpack.c.h.b16 %v1236
    %v4031 = vunpack.c.l.b16 %v1237
    %v4032 = vunpack.c.h.b16 %v1237
    %v4033 = vunpack.c.l.b16 %v1238
    %v4034 = vunpack.c.h.b16 %v1238
    %v4035 = vunpack.c.l.b16 %v1239
    %v4036 = vunpack.c.h.b16 %v1239
    %v4037 = vunpack.c.l.b16 %v1240
    %v4038 = vunpack.c.h.b16 %v1240
    %v4039 = vunpack.c.l.b16 %v1241
    %v4040 = vunpack.c.h.b16 %v1241
    %v4041 = vunpack.c.l.b16 %v1242
    %v4042 = vunpack.c.h.b16 %v1242
    %v4043 = vunpack.c.l.b16 %v1243
    %v4044 = vunpack.c.h.b16 %v1243
    %v4045 = vunpack.c.l.b16 %v1244
    %v4046 = vunpack.c.h.b16 %v1244
    %v4047 = vunpack.c.l.b16 %v1245
    %v4048 = vunpack.c.h.b16 %v1245
    %v4049 = vunpack.c.l.b16 %v1246
    %v4050 = vunpack.c.h.b16 %v1246
    %v4051 = vunpack.c.l.b16 %v1247
    %v4052 = vunpack.c.h.b16 %v1247
    %v4053 = vunpack.c.l.b16 %v1248
    %v4054 = vunpack.c.h.b16 %v1248
    %v4055 = vunpack.c.l.b16 %v1249
    %v4056 = vunpack.c.h.b16 %v1249
    %v4057 = vunpack.c.l.b16 %v1250
    %v4058 = vunpack.c.h.b16 %v1250
    %v4059 = vunpack.c.l.b16 %v1251
    %v4060 = vunpack.c.h.b16 %v1251
    %v4061 = vunpack.c.l.b16 %v1252
    %v4062 = vunpack.c.h.b16 %v1252
    %v4063 = vunpack.c.l.b16 %v1253
    %v4064 = vunpack.c.h.b16 %v1253
    %v4065 = vunpack.c.l.b16 %v1254
    %v4066 = vunpack.c.h.b16 %v1254
    %v4067 = vunpack.c.l.b16 %v1255
    %v4068 = vunpack.c.h.b16 %v1255
    %v4069 = vunpack.c.l.b16 %v1256
    %v4070 = vunpack.c.h.b16 %v1256
    %v4071 = vunpack.c.l.b16 %v1257
    %v4072 = vunpack.c.h.b16 %v1257
    %v4073 = vunpack.c.l.b16 %v1258
    %v4074 = vunpack.c.h.b16 %v1258
    %v4075 = vunpack.c.l.b16 %v1259
    %v4076 = vunpack.c.h.b16 %v1259
    %v4077 = vunpack.c.l.b16 %v1260
    %v4078 = vunpack.c.h.b16 %v1260
    %v4079 = vunpack.c.l.b16 %v1261
    %v4080 = vunpack.c.h.b16 %v1261
    %v4081 = vunpack.c.l.b16 %v1262
    %v4082 = vunpack.c.h.b16 %v1262
    %v4083 = vunpack.c.l.b16 %v1263
    %v4084 = vunpack.c.h.b16 %v1263
    %v4085 = vunpack.c.l.b16 %v1264
    %v4086 = vunpack.c.h.b16 %v1264
    %v4087 = vunpack.c.l.b16 %v1265
    %v4088 = vunpack.c.h.b16 %v1265
    %v4089 = vunpack.c.l.b16 %v1266
    %v4090 = vunpack.c.h.b16 %v1266
    %v4091 = vunpack.c.l.b16 %v1267
    %v4092 = vunpack.c.h.b16 %v1267
    %v4093 = vunpack.c.l.b16 %v1268
    %v4094 = vunpack.c.h.b16 %v1268
    %v4095 = vunpack.c.l.b16 %v1269
    %v4096 = vunpack.c.h.b16 %v1269
    %v4097 = vunpack.c.l.b16 %v1270
    %v4098 = vunpack.c.h.b16 %v1270
    %v4099 = vunpack.c.l.b16 %v1271
    %v4100 = vunpack.c.h.b16 %v1271
    %v4101 = vunpack.c.l.b16 %v1272
    %v4102 = vunpack.c.h.b16 %v1272
    %v4103 = vunpack.c.l.b16 %v1273
    %v4104 = vunpack.c.h.b16 %v1273
    %v4105 = vunpack.c.l.b16 %v1274
    %v4106 = vunpack.c.h.b16 %v1274
    %v4107 = vunpack.c.l.b16 %v1275
    %v4108 = vunpack.c.h.b16 %v1275
    %v4109 = vunpack.c.l.b16 %v1276
    %v4110 = vunpack.c.h.b16 %v1276
    %v4111 = vunpack.c.l.b16 %v1277
    %v4112 = vunpack.c.h.b16 %v1277
    %v4113 = vunpack.c.l.b16 %v1278
    %v4114 = vunpack.c.h.b16 %v1278
    %v4115 = vunpack.c.l.b16 %v1279
    %v4116 = vunpack.c.h.b16 %v1279
    %v4117 = vunpack.c.l.b16 %v1280
    %v4118 = vunpack.c.h.b16 %v1280
    %v4119 = vunpack.c.l.b16 %v1281
    %v4120 = vunpack.c.h.b16 %v1281
    %v4121 = vunpack.c.l.b16 %v1282
    %v4122 = vunpack.c.h.b16 %v1282
    %v4123 = vunpack.c.l.b16 %v1283
    %v4124 = vunpack.c.h.b16 %v1283
    %v4125 = vunpack.c.l.b16 %v1284
    %v4126 = vunpack.c.h.b16 %v1284
    %v4127 = vunpack.c.l.b16 %v1285
    %v4128 = vunpack.c.h.b16 %v1285
    %v4129 = vunpack.c.l.b16 %v1286
    %v4130 = vunpack.c.h.b16 %v1286
    %v4131 = vunpack.c.l.b16 %v1287
    %v4132 = vunpack.c.h.b16 %v1287
    %v4133 = vunpack.c.l.b16 %v1288
    %v4134 = vunpack.c.h.b16 %v1288
    %v4135 = vunpack.c.l.b16 %v1289
    %v4136 = vunpack.c.h.b16 %v1289
    %v4137 = vunpack.c.l.b16 %v1290
    %v4138 = vunpack.c.h.b16 %v1290
    %v4139 = vunpack.c.l.b16 %v1291
    %v4140 = vunpack.c.h.b16 %v1291
    %v4141 = vunpack.c.l.b16 %v1292
    %v4142 = vunpack.c.h.b16 %v1292
    %v4143 = vunpack.c.l.b16 %v1293
    %v4144 = vunpack.c.h.b16 %v1293
    %v4145 = vunpack.c.l.b16 %v1294
    %v4146 = vunpack.c.h.b16 %v1294
    %v4147 = vunpack.c.l.b16 %v1295
    %v4148 = vunpack.c.h.b16 %v1295
    %v4149 = vunpack.c.l.b16 %v1296
    %v4150 = vunpack.c.h.b16 %v1296
    %v4151 = vunpack.c.l.b16 %v1297
    %v4152 = vunpack.c.h.b16 %v1297
    %v4153 = vunpack.c.l.b16 %v1298
    %v4154 = vunpack.c.h.b16 %v1298
    %v4155 = vunpack.c.l.b16 %v1299
    %v4156 = vunpack.c.h.b16 %v1299
    %v4157 = vunpack.c.l.b16 %v1300
    %v4158 = vunpack.c.h.b16 %v1300
    %v4159 = vunpack.c.l.b16 %v1301
    %v4160 = vunpack.c.h.b16 %v1301
    %v4161 = vunpack.c.l.b16 %v1302
    %v4162 = vunpack.c.h.b16 %v1302
    %v4163 = vunpack.c.l.b16 %v1303
    %v4164 = vunpack.c.h.b16 %v1303
    %v4165 = vunpack.c.l.b16 %v1304
    %v4166 = vunpack.c.h.b16 %v1304
    %v4167 = vunpack.c.l.b16 %v1305
    %v4168 = vunpack.c.h.b16 %v1305
    %v4169 = vunpack.c.l.b16 %v1306
    %v4170 = vunpack.c.h.b16 %v1306
    %v4171 = vunpack.c.l.b16 %v1307
    %v4172 = vunpack.c.h.b16 %v1307
    %v4173 = vunpack.c.l.b16 %v1308
    %v4174 = vunpack.c.h.b16 %v1308
    %v4175 = vunpack.c.l.b16 %v1309
    %v4176 = vunpack.c.h.b16 %v1309
    %v4177 = vunpack.c.l.b16 %v1310
    %v4178 = vunpack.c.h.b16 %v1310
    %v4179 = vunpack.c.l.b16 %v1311
    %v4180 = vunpack.c.h.b16 %v1311
    %v4181 = vunpack.c.l.b16 %v1312
    %v4182 = vunpack.c.h.b16 %v1312
    %v4183 = vunpack.c.l.b16 %v1313
    %v4184 = vunpack.c.h.b16 %v1313
    %v4185 = vunpack.c.l.b16 %v1314
    %v4186 = vunpack.c.h.b16 %v1314
    %v4187 = vunpack.c.l.b16 %v1315
    %v4188 = vunpack.c.h.b16 %v1315
    %v4189 = vunpack.c.l.b16 %v1316
    %v4190 = vunpack.c.h.b16 %v1316
    %v4191 = vunpack.c.l.b16 %v1317
    %v4192 = vunpack.c.h.b16 %v1317
    %v4193 = vunpack.c.l.b16 %v1318
    %v4194 = vunpack.c.h.b16 %v1318
    %v4195 = vunpack.c.l.b16 %v1319
    %v4196 = vunpack.c.h.b16 %v1319
    %v4197 = vunpack.c.l.b16 %v1320
    %v4198 = vunpack.c.h.b16 %v1320
    %v4199 = vunpack.c.l.b16 %v1321
    %v4200 = vunpack.c.h.b16 %v1321
    %v4201 = vunpack.c.l.b16 %v1322
    %v4202 = vunpack.c.h.b16 %v1322
    %v4203 = vunpack.c.l.b16 %v1323
    %v4204 = vunpack.c.h.b16 %v1323
    %v4205 = vunpack.c.l.b16 %v1324
    %v4206 = vunpack.c.h.b16 %v1324
    %v4207 = vunpack.c.l.b16 %v1325
    %v4208 = vunpack.c.h.b16 %v1325
    %v4209 = vunpack.c.l.b16 %v1326
    %v4210 = vunpack.c.h.b16 %v1326
    %v4211 = vunpack.c.l.b16 %v1327
    %v4212 = vunpack.c.h.b16 %v1327
    %v4213 = vunpack.c.l.b16 %v1328
    %v4214 = vunpack.c.h.b16 %v1328
    %v4215 = vunpack.c.l.b16 %v1329
    %v4216 = vunpack.c.h.b16 %v1329
    %v4217 = vunpack.c.l.b16 %v1330
    %v4218 = vunpack.c.h.b16 %v1330
    %v4219 = vunpack.c.l.b16 %v1331
    %v4220 = vunpack.c.h.b16 %v1331
    %v4221 = vunpack.c.l.b16 %v1332
    %v4222 = vunpack.c.h.b16 %v1332
    %v4223 = vunpack.c.l.b16 %v1333
    %v4224 = vunpack.c.h.b16 %v1333
    %v4225 = vunpack.c.l.b16 %v1334
    %v4226 = vunpack.c.h.b16 %v1334
    %v4227 = vunpack.c.l.b16 %v1335
    %v4228 = vunpack.c.h.b16 %v1335
    %v4229 = vunpack.c.l.b16 %v1336
    %v4230 = vunpack.c.h.b16 %v1336
    %v4231 = vunpack.c.l.b16 %v1337
    %v4232 = vunpack.c.h.b16 %v1337
    %v4233 = vunpack.c.l.b16 %v1338
    %v4234 = vunpack.c.h.b16 %v1338
    %v4235 = vunpack.c.l.b16 %v1339
    %v4236 = vunpack.c.h.b16 %v1339
    %v4237 = vunpack.c.l.b16 %v1340
    %v4238 = vunpack.c.h.b16 %v1340
    %v4239 = vunpack.c.l.b16 %v1341
    %v4240 = vunpack.c.h.b16 %v1341
    %v4241 = vunpack.c.l.b16 %v1342
    %v4242 = vunpack.c.h.b16 %v1342
    %v4243 = vunpack.c.l.b16 %v1343
    %v4244 = vunpack.c.h.b16 %v1343
    %v4245 = vunpack.c.l.b16 %v1344
    %v4246 = vunpack.c.h.b16 %v1344
    %v4247 = vunpack.c.l.b16 %v1345
    %v4248 = vunpack.c.h.b16 %v1345
    %v4249 = vunpack.c.l.b16 %v1346
    %v4250 = vunpack.c.h.b16 %v1346
    %v4251 = vunpack.c.l.b16 %v1347
    %v4252 = vunpack.c.h.b16 %v1347
    %v4253 = vunpack.c.l.b16 %v1348
    %v4254 = vunpack.c.h.b16 %v1348
    %v4255 = vunpack.c.l.b16 %v1349
    %v4256 = vunpack.c.h.b16 %v1349
    %v4257 = vunpack.c.l.b16 %v1350
    %v4258 = vunpack.c.h.b16 %v1350
    %v4259 = vunpack.c.l.b16 %v1351
    %v4260 = vunpack.c.h.b16 %v1351
    %v4261 = vunpack.c.l.b16 %v1352
    %v4262 = vunpack.c.h.b16 %v1352
    %v4263 = vunpack.c.l.b16 %v1353
    %v4264 = vunpack.c.h.b16 %v1353
    %v4265 = vunpack.c.l.b16 %v1354
    %v4266 = vunpack.c.h.b16 %v1354
    %v4267 = vunpack.c.l.b16 %v1355
    %v4268 = vunpack.c.h.b16 %v1355
    %v4269 = vunpack.c.l.b16 %v1356
    %v4270 = vunpack.c.h.b16 %v1356
    %v4271 = vunpack.c.l.b16 %v1357
    %v4272 = vunpack.c.h.b16 %v1357
    %v4273 = vunpack.c.l.b16 %v1358
    %v4274 = vunpack.c.h.b16 %v1358
    %v4275 = vunpack.c.l.b16 %v1359
    %v4276 = vunpack.c.h.b16 %v1359
    %v4277 = vunpack.c.l.b16 %v1360
    %v4278 = vunpack.c.h.b16 %v1360
    %v4279 = vunpack.c.l.b16 %v1361
    %v4280 = vunpack.c.h.b16 %v1361
    %v4281 = vunpack.c.l.b16 %v1362
    %v4282 = vunpack.c.h.b16 %v1362
    %v4283 = vunpack.c.l.b16 %v1363
    %v4284 = vunpack.c.h.b16 %v1363
    %v4285 = vunpack.c.l.b16 %v1364
    %v4286 = vunpack.c.h.b16 %v1364
    %v4287 = vunpack.c.l.b16 %v1365
    %v4288 = vunpack.c.h.b16 %v1365
    %v4289 = vunpack.c.l.b16 %v1366
    %v4290 = vunpack.c.h.b16 %v1366
    %v4291 = vunpack.c.l.b16 %v1367
    %v4292 = vunpack.c.h.b16 %v1367
    %v4293 = vunpack.c.l.b16 %v1368
    %v4294 = vunpack.c.h.b16 %v1368
    %v4295 = vunpack.c.l.b16 %v1369
    %v4296 = vunpack.c.h.b16 %v1369
    %v4297 = vunpack.c.l.b16 %v1370
    %v4298 = vunpack.c.h.b16 %v1370
    %v4299 = vunpack.c.l.b16 %v1371
    %v4300 = vunpack.c.h.b16 %v1371
    %v4301 = vunpack.c.l.b16 %v1372
    %v4302 = vunpack.c.h.b16 %v1372
    %v4303 = vunpack.c.l.b16 %v1373
    %v4304 = vunpack.c.h.b16 %v1373
    %v4305 = vunpack.c.l.b16 %v1374
    %v4306 = vunpack.c.h.b16 %v1374
    %v4307 = vunpack.c.l.b16 %v1375
    %v4308 = vunpack.c.h.b16 %v1375
    %v4309 = vunpack.c.l.b16 %v1376
    %v4310 = vunpack.c.h.b16 %v1376
    %v4311 = vunpack.c.l.b16 %v1377
    %v4312 = vunpack.c.h.b16 %v1377
    %v4313 = vunpack.c.l.b16 %v1378
    %v4314 = vunpack.c.h.b16 %v1378
    %v4315 = vunpack.c.l.b16 %v1379
    %v4316 = vunpack.c.h.b16 %v1379
    %v4317 = vunpack.c.l.b16 %v1380
    %v4318 = vunpack.c.h.b16 %v1380
    %v4319 = vunpack.c.l.b16 %v1381
    %v4320 = vunpack.c.h.b16 %v1381
    %v4321 = vunpack.c.l.b16 %v1382
    %v4322 = vunpack.c.h.b16 %v1382
    %v4323 = vunpack.c.l.b16 %v1383
    %v4324 = vunpack.c.h.b16 %v1383
    %v4325 = vunpack.c.l.b16 %v1384
    %v4326 = vunpack.c.h.b16 %v1384
    %v4327 = vunpack.c.l.b16 %v1385
    %v4328 = vunpack.c.h.b16 %v1385
    %v4329 = vunpack.c.l.b16 %v1386
    %v4330 = vunpack.c.h.b16 %v1386
    %v4331 = vunpack.c.l.b16 %v1387
    %v4332 = vunpack.c.h.b16 %v1387
    %v4333 = vunpack.c.l.b16 %v1388
    %v4334 = vunpack.c.h.b16 %v1388
    %v4335 = vunpack.c.l.b16 %v1389
    %v4336 = vunpack.c.h.b16 %v1389
    %v4337 = vunpack.c.l.b16 %v1390
    %v4338 = vunpack.c.h.b16 %v1390
    %v4339 = vunpack.c.l.b16 %v1391
    %v4340 = vunpack.c.h.b16 %v1391
    %v4341 = vunpack.c.l.b16 %v1392
    %v4342 = vunpack.c.h.b16 %v1392
    %v4343 = vunpack.c.l.b16 %v1393
    %v4344 = vunpack.c.h.b16 %v1393
    %v4345 = vunpack.c.l.b16 %v1394
    %v4346 = vunpack.c.h.b16 %v1394
    %v4347 = vunpack.c.l.b16 %v1395
    %v4348 = vunpack.c.h.b16 %v1395
    %v4349 = vunpack.c.l.b16 %v1396
    %v4350 = vunpack.c.h.b16 %v1396
    %v4351 = vunpack.c.l.b16 %v1397
    %v4352 = vunpack.c.h.b16 %v1397
    %v4353 = vunpack.c.l.b16 %v1398
    %v4354 = vunpack.c.h.b16 %v1398
    %v4355 = vunpack.c.l.b16 %v1399
    %v4356 = vunpack.c.h.b16 %v1399
    %v4357 = vunpack.c.l.b16 %v1400
    %v4358 = vunpack.c.h.b16 %v1400
    %v4359 = vunpack.c.l.b16 %v1401
    %v4360 = vunpack.c.h.b16 %v1401
    %v4361 = vunpack.c.l.b16 %v1402
    %v4362 = vunpack.c.h.b16 %v1402
    %v4363 = vunpack.c.l.b16 %v1403
    %v4364 = vunpack.c.h.b16 %v1403
    %v4365 = vunpack.c.l.b16 %v1404
    %v4366 = vunpack.c.h.b16 %v1404
    %v4367 = vunpack.c.l.b16 %v1405
    %v4368 = vunpack.c.h.b16 %v1405
    %v4369 = vunpack.c.l.b16 %v1406
    %v4370 = vunpack.c.h.b16 %v1406
    %v4371 = vunpack.c.l.b16 %v1407
    %v4372 = vunpack.c.h.b16 %v1407
    %v4373 = vunpack.c.l.b16 %v1408
    %v4374 = vunpack.c.h.b16 %v1408
    %v4375 = vunpack.c.l.b16 %v1409
    %v4376 = vunpack.c.h.b16 %v1409
    %v4377 = vunpack.c.l.b16 %v1410
    %v4378 = vunpack.c.h.b16 %v1410
    %v4379 = vunpack.c.l.b16 %v1411
    %v4380 = vunpack.c.h.b16 %v1411
    %v4381 = vunpack.c.l.b16 %v1412
    %v4382 = vunpack.c.h.b16 %v1412
    %v4383 = vunpack.c.l.b16 %v1413
    %v4384 = vunpack.c.h.b16 %v1413
    %v4385 = vunpack.c.l.b16 %v1414
    %v4386 = vunpack.c.h.b16 %v1414
    %v4387 = vunpack.c.l.b16 %v1415
    %v4388 = vunpack.c.h.b16 %v1415
    %v4389 = vunpack.c.l.b16 %v1416
    %v4390 = vunpack.c.h.b16 %v1416
    %v4391 = vunpack.c.l.b16 %v1417
    %v4392 = vunpack.c.h.b16 %v1417
    %v4393 = vunpack.c.l.b16 %v1418
    %v4394 = vunpack.c.h.b16 %v1418
    %v4395 = vunpack.c.l.b16 %v1419
    %v4396 = vunpack.c.h.b16 %v1419
    %v4397 = vunpack.c.l.b16 %v1420
    %v4398 = vunpack.c.h.b16 %v1420
    %v4399 = vunpack.c.l.b16 %v1421
    %v4400 = vunpack.c.h.b16 %v1421
    %v4401 = vunpack.c.l.b16 %v1422
    %v4402 = vunpack.c.h.b16 %v1422
    %v4403 = vunpack.c.l.b16 %v1423
    %v4404 = vunpack.c.h.b16 %v1423
    %v4405 = vunpack.c.l.b16 %v1424
    %v4406 = vunpack.c.h.b16 %v1424
    %v4407 = vunpack.c.l.b16 %v1425
    %v4408 = vunpack.c.h.b16 %v1425
    %v4409 = vunpack.c.l.b16 %v1426
    %v4410 = vunpack.c.h.b16 %v1426
    %v4411 = vunpack.c.l.b16 %v1427
    %v4412 = vunpack.c.h.b16 %v1427
    %v4413 = vunpack.c.l.b16 %v1428
    %v4414 = vunpack.c.h.b16 %v1428
    %v4415 = vunpack.c.l.b16 %v1429
    %v4416 = vunpack.c.h.b16 %v1429
    %v4417 = vunpack.c.l.b16 %v1430
    %v4418 = vunpack.c.h.b16 %v1430
    %v4419 = vunpack.c.l.b16 %v1431
    %v4420 = vunpack.c.h.b16 %v1431
    %v4421 = vunpack.c.l.b16 %v1432
    %v4422 = vunpack.c.h.b16 %v1432
    %v4423 = vunpack.c.l.b16 %v1433
    %v4424 = vunpack.c.h.b16 %v1433
    %v4425 = vunpack.c.l.b16 %v1434
    %v4426 = vunpack.c.h.b16 %v1434
    %v4427 = vunpack.c.l.b16 %v1435
    %v4428 = vunpack.c.h.b16 %v1435
    %v4429 = vunpack.c.l.b16 %v1436
    %v4430 = vunpack.c.h.b16 %v1436
    %v4431 = vunpack.c.l.b16 %v1437
    %v4432 = vunpack.c.h.b16 %v1437
    %v4433 = vunpack.c.l.b16 %v1438
    %v4434 = vunpack.c.h.b16 %v1438
    %v4435 = vunpack.c.l.b16 %v1439
    %v4436 = vunpack.c.h.b16 %v1439
    %v4437 = vunpack.c.l.b16 %v1440
    %v4438 = vunpack.c.h.b16 %v1440
    %v4439 = vunpack.c.l.b16 %v1441
    %v4440 = vunpack.c.h.b16 %v1441
    %v4441 = vunpack.c.l.b16 %v1442
    %v4442 = vunpack.c.h.b16 %v1442
    %v4443 = vunpack.c.l.b16 %v1443
    %v4444 = vunpack.c.h.b16 %v1443
    %v4445 = vunpack.c.l.b16 %v1444
    %v4446 = vunpack.c.h.b16 %v1444
    %v4447 = vunpack.c.l.b16 %v1445
    %v4448 = vunpack.c.h.b16 %v1445
    %v4449 = vunpack.c.l.b16 %v1446
    %v4450 = vunpack.c.h.b16 %v1446
    %v4451 = vunpack.c.l.b16 %v1447
    %v4452 = vunpack.c.h.b16 %v1447
    %v4453 = vunpack.c.l.b16 %v1448
    %v4454 = vunpack.c.h.b16 %v1448
    %v4455 = vunpack.c.l.b16 %v1449
    %v4456 = vunpack.c.h.b16 %v1449
    %v4457 = vunpack.c.l.b16 %v1450
    %v4458 = vunpack.c.h.b16 %v1450
    %v4459 = vunpack.c.l.b16 %v1451
    %v4460 = vunpack.c.h.b16 %v1451
    %v4461 = vunpack.c.l.b16 %v1452
    %v4462 = vunpack.c.h.b16 %v1452
    %v4463 = vunpack.c.l.b16 %v1453
    %v4464 = vunpack.c.h.b16 %v1453
    %v4465 = vunpack.c.l.b16 %v1454
    %v4466 = vunpack.c.h.b16 %v1454
    %v4467 = vunpack.c.l.b16 %v1455
    %v4468 = vunpack.c.h.b16 %v1455
    %v4469 = vunpack.c.l.b16 %v1456
    %v4470 = vunpack.c.h.b16 %v1456
    %v4471 = vunpack.c.l.b16 %v1457
    %v4472 = vunpack.c.h.b16 %v1457
    %v4473 = vunpack.c.l.b16 %v1458
    %v4474 = vunpack.c.h.b16 %v1458
    %v4475 = vunpack.c.l.b16 %v1459
    %v4476 = vunpack.c.h.b16 %v1459
    %v4477 = vunpack.c.l.b16 %v1460
    %v4478 = vunpack.c.h.b16 %v1460
    %v4479 = vunpack.c.l.b16 %v1461
    %v4480 = vunpack.c.h.b16 %v1461
    %v4481 = vunpack.c.l.b16 %v1462
    %v4482 = vunpack.c.h.b16 %v1462
    %v4483 = vunpack.c.l.b16 %v1463
    %v4484 = vunpack.c.h.b16 %v1463
    %v4485 = vunpack.c.l.b16 %v1464
    %v4486 = vunpack.c.h.b16 %v1464
    %v4487 = vunpack.c.l.b16 %v1465
    %v4488 = vunpack.c.h.b16 %v1465
    %v4489 = vunpack.c.l.b16 %v1466
    %v4490 = vunpack.c.h.b16 %v1466
    %v4491 = vunpack.c.l.b16 %v1467
    %v4492 = vunpack.c.h.b16 %v1467
    %v4493 = vunpack.c.l.b16 %v1468
    %v4494 = vunpack.c.h.b16 %v1468
    %v4495 = vunpack.c.l.b16 %v1469
    %v4496 = vunpack.c.h.b16 %v1469
    %v4497 = vunpack.c.l.b16 %v1470
    %v4498 = vunpack.c.h.b16 %v1470
    %v4499 = vunpack.c.l.b16 %v1471
    %v4500 = vunpack.c.h.b16 %v1471
    %v4501 = vunpack.c.l.b16 %v1472
    %v4502 = vunpack.c.h.b16 %v1472
    %v4503 = vunpack.c.l.b16 %v1473
    %v4504 = vunpack.c.h.b16 %v1473
    %v4505 = vunpack.c.l.b16 %v1474
    %v4506 = vunpack.c.h.b16 %v1474
    %v4507 = vunpack.c.l.b16 %v1475
    %v4508 = vunpack.c.h.b16 %v1475
    %v4509 = vunpack.c.l.b16 %v1476
    %v4510 = vunpack.c.h.b16 %v1476
    %v4511 = vunpack.c.l.b16 %v1477
    %v4512 = vunpack.c.h.b16 %v1477
    %v4513 = vunpack.c.l.b16 %v1478
    %v4514 = vunpack.c.h.b16 %v1478
    %v4515 = vunpack.c.l.b16 %v1479
    %v4516 = vunpack.c.h.b16 %v1479
    %v4517 = vunpack.c.l.b16 %v1480
    %v4518 = vunpack.c.h.b16 %v1480
    %v4519 = vunpack.c.l.b16 %v1481
    %v4520 = vunpack.c.h.b16 %v1481
    %v4521 = vunpack.c.l.b16 %v1482
    %v4522 = vunpack.c.h.b16 %v1482
    %v4523 = vunpack.c.l.b16 %v1483
    %v4524 = vunpack.c.h.b16 %v1483
    %v4525 = vunpack.c.l.b16 %v1484
    %v4526 = vunpack.c.h.b16 %v1484
    %v4527 = vunpack.c.l.b16 %v1485
    %v4528 = vunpack.c.h.b16 %v1485
    %v4529 = vunpack.c.l.b16 %v1486
    %v4530 = vunpack.c.h.b16 %v1486
    %v4531 = vunpack.c.l.b16 %v1487
    %v4532 = vunpack.c.h.b16 %v1487
    %v4533 = vunpack.c.l.b16 %v1488
    %v4534 = vunpack.c.h.b16 %v1488
    %v4535 = vunpack.c.l.b16 %v1489
    %v4536 = vunpack.c.h.b16 %v1489
    %v4537 = vunpack.c.l.b16 %v1490
    %v4538 = vunpack.c.h.b16 %v1490
    %v4539 = vunpack.c.l.b16 %v1491
    %v4540 = vunpack.c.h.b16 %v1491
    %v4541 = vunpack.c.l.b16 %v1492
    %v4542 = vunpack.c.h.b16 %v1492
    %v4543 = vunpack.c.l.b16 %v1493
    %v4544 = vunpack.c.h.b16 %v1493
    %v4545 = vunpack.c.l.b16 %v1494
    %v4546 = vunpack.c.h.b16 %v1494
    %v4547 = vunpack.c.l.b16 %v1495
    %v4548 = vunpack.c.h.b16 %v1495
    %v4549 = vunpack.c.l.b16 %v1496
    %v4550 = vunpack.c.h.b16 %v1496
    %v4551 = vunpack.c.l.b16 %v1497
    %v4552 = vunpack.c.h.b16 %v1497
    %v4553 = vunpack.c.l.b16 %v1498
    %v4554 = vunpack.c.h.b16 %v1498
    %v4555 = vunpack.c.l.b16 %v1499
    %v4556 = vunpack.c.h.b16 %v1499
    %v4557 = vunpack.c.l.b16 %v1500
    %v4558 = vunpack.c.h.b16 %v1500
    %v4559 = vunpack.c.l.b16 %v1501
    %v4560 = vunpack.c.h.b16 %v1501
    %v4561 = vunpack.c.l.b16 %v1502
    %v4562 = vunpack.c.h.b16 %v1502
    %v4563 = vunpack.c.l.b16 %v1503
    %v4564 = vunpack.c.h.b16 %v1503
    %v4565 = vunpack.c.l.b16 %v1504
    %v4566 = vunpack.c.h.b16 %v1504
    %v4567 = vunpack.c.l.b16 %v1505
    %v4568 = vunpack.c.h.b16 %v1505
    %v4569 = vunpack.c.l.b16 %v1506
    %v4570 = vunpack.c.h.b16 %v1506
    %v4571 = vunpack.c.l.b16 %v1507
    %v4572 = vunpack.c.h.b16 %v1507
    %v4573 = vunpack.c.l.b16 %v1508
    %v4574 = vunpack.c.h.b16 %v1508
    %v4575 = vunpack.c.l.b16 %v1509
    %v4576 = vunpack.c.h.b16 %v1509
    %v4577 = vunpack.c.l.b16 %v1510
    %v4578 = vunpack.c.h.b16 %v1510
    %v4579 = vunpack.c.l.b16 %v1511
    %v4580 = vunpack.c.h.b16 %v1511
    %v4581 = vunpack.c.l.b16 %v1512
    %v4582 = vunpack.c.h.b16 %v1512
    %v4583 = vunpack.c.l.b16 %v1513
    %v4584 = vunpack.c.h.b16 %v1513
    %v4585 = vunpack.c.l.b16 %v1514
    %v4586 = vunpack.c.h.b16 %v1514
    %v4587 = vunpack.c.l.b16 %v1515
    %v4588 = vunpack.c.h.b16 %v1515
    %v4589 = vunpack.c.l.b16 %v1516
    %v4590 = vunpack.c.h.b16 %v1516
    %v4591 = vunpack.c.l.b16 %v1517
    %v4592 = vunpack.c.h.b16 %v1517
    %v4593 = vunpack.c.l.b16 %v1518
    %v4594 = vunpack.c.h.b16 %v1518
    %v4595 = vunpack.c.l.b16 %v1519
    %v4596 = vunpack.c.h.b16 %v1519
    %v4597 = vunpack.c.l.b16 %v1520
    %v4598 = vunpack.c.h.b16 %v1520
    %v4599 = vunpack.c.l.b16 %v1521
    %v4600 = vunpack.c.h.b16 %v1521
    %v4601 = vunpack.c.l.b16 %v1522
    %v4602 = vunpack.c.h.b16 %v1522
    %v4603 = vunpack.c.l.b16 %v1523
    %v4604 = vunpack.c.h.b16 %v1523
    %v4605 = vunpack.c.l.b16 %v1524
    %v4606 = vunpack.c.h.b16 %v1524
    %v4607 = vunpack.c.l.b16 %v1525
    %v4608 = vunpack.c.h.b16 %v1525
    %v4609 = vunpack.c.l.b16 %v1526
    %v4610 = vunpack.c.h.b16 %v1526
    %v4611 = vpack.c.b16 %v2565, %v2563
    %v4612 = vpack.c.b16 %v2566, %v2564
    %v4613 = vpack.c.b16 %v2569, %v2567
    %v4614 = vpack.c.b16 %v2570, %v2568
    %v4615 = vpack.c.b16 %v2573, %v2571
    %v4616 = vpack.c.b16 %v2574, %v2572
    %v4617 = vpack.c.b16 %v2577, %v2575
    %v4618 = vpack.c.b16 %v2578, %v2576
    %v4619 = vpack.c.b16 %v2581, %v2579
    %v4620 = vpack.c.b16 %v2582, %v2580
    %v4621 = vpack.c.b16 %v2585, %v2583
    %v4622 = vpack.c.b16 %v2586, %v2584
    %v4623 = vpack.c.b16 %v2589, %v2587
    %v4624 = vpack.c.b16 %v2590, %v2588
    %v4625 = vpack.c.b16 %v2593, %v2591
    %v4626 = vpack.c.b16 %v2594, %v2592
    %v4627 = vpack.c.b16 %v2597, %v2595
    %v4628 = vpack.c.b16 %v2598, %v2596
    %v4629 = vpack.c.b16 %v2601, %v2599
    %v4630 = vpack.c.b16 %v2602, %v2600
    %v4631 = vpack.c.b16 %v2605, %v2603
    %v4632 = vpack.c.b16 %v2606, %v2604
    %v4633 = vpack.c.b16 %v2609, %v2607
    %v4634 = vpack.c.b16 %v2610, %v2608
    %v4635 = vpack.c.b16 %v2613, %v2611
    %v4636 = vpack.c.b16 %v2614, %v2612
    %v4637 = vpack.c.b16 %v2617, %v2615
    %v4638 = vpack.c.b16 %v2618, %v2616
    %v4639 = vpack.c.b16 %v2621, %v2619
    %v4640 = vpack.c.b16 %v2622, %v2620
    %v4641 = vpack.c.b16 %v2625, %v2623
    %v4642 = vpack.c.b16 %v2626, %v2624
    %v4643 = vpack.c.b16 %v2629, %v2627
    %v4644 = vpack.c.b16 %v2630, %v2628
    %v4645 = vpack.c.b16 %v2633, %v2631
    %v4646 = vpack.c.b16 %v2634, %v2632
    %v4647 = vpack.c.b16 %v2637, %v2635
    %v4648 = vpack.c.b16 %v2638, %v2636
    %v4649 = vpack.c.b16 %v2641, %v2639
    %v4650 = vpack.c.b16 %v2642, %v2640
    %v4651 = vpack.c.b16 %v2645, %v2643
    %v4652 = vpack.c.b16 %v2646, %v2644
    %v4653 = vpack.c.b16 %v2649, %v2647
    %v4654 = vpack.c.b16 %v2650, %v2648
    %v4655 = vpack.c.b16 %v2653, %v2651
    %v4656 = vpack.c.b16 %v2654, %v2652
    %v4657 = vpack.c.b16 %v2657, %v2655
    %v4658 = vpack.c.b16 %v2658, %v2656
    %v4659 = vpack.c.b16 %v2661, %v2659
    %v4660 = vpack.c.b16 %v2662, %v2660
    %v4661 = vpack.c.b16 %v2665, %v2663
    %v4662 = vpack.c.b16 %v2666, %v2664
    %v4663 = vpack.c.b16 %v2669, %v2667
    %v4664 = vpack.c.b16 %v2670, %v2668
    %v4665 = vpack.c.b16 %v2673, %v2671
    %v4666 = vpack.c.b16 %v2674, %v2672
    %v4667 = vpack.c.b16 %v2677, %v2675
    %v4668 = vpack.c.b16 %v2678, %v2676
    %v4669 = vpack.c.b16 %v2681, %v2679
    %v4670 = vpack.c.b16 %v2682, %v2680
    %v4671 = vpack.c.b16 %v2685, %v2683
    %v4672 = vpack.c.b16 %v2686, %v2684
    %v4673 = vpack.c.b16 %v2689, %v2687
    %v4674 = vpack.c.b16 %v2690, %v2688
    %v4675 = vpack.c.b16 %v2693, %v2691
    %v4676 = vpack.c.b16 %v2694, %v2692
    %v4677 = vpack.c.b16 %v2697, %v2695
    %v4678 = vpack.c.b16 %v2698, %v2696
    %v4679 = vpack.c.b16 %v2701, %v2699
    %v4680 = vpack.c.b16 %v2702, %v2700
    %v4681 = vpack.c.b16 %v2705, %v2703
    %v4682 = vpack.c.b16 %v2706, %v2704
    %v4683 = vpack.c.b16 %v2709, %v2707
    %v4684 = vpack.c.b16 %v2710, %v2708
    %v4685 = vpack.c.b16 %v2713, %v2711
    %v4686 = vpack.c.b16 %v2714, %v2712
    %v4687 = vpack.c.b16 %v2717, %v2715
    %v4688 = vpack.c.b16 %v2718, %v2716
    %v4689 = vpack.c.b16 %v2721, %v2719
    %v4690 = vpack.c.b16 %v2722, %v2720
    %v4691 = vpack.c.b16 %v2725, %v2723
    %v4692 = vpack.c.b16 %v2726, %v2724
    %v4693 = vpack.c.b16 %v2729, %v2727
    %v4694 = vpack.c.b16 %v2730, %v2728
    %v4695 = vpack.c.b16 %v2733, %v2731
    %v4696 = vpack.c.b16 %v2734, %v2732
    %v4697 = vpack.c.b16 %v2737, %v2735
    %v4698 = vpack.c.b16 %v2738, %v2736
    %v4699 = vpack.c.b16 %v2741, %v2739
    %v4700 = vpack.c.b16 %v2742, %v2740
    %v4701 = vpack.c.b16 %v2745, %v2743
    %v4702 = vpack.c.b16 %v2746, %v2744
    %v4703 = vpack.c.b16 %v2749, %v2747
    %v4704 = vpack.c.b16 %v2750, %v2748
    %v4705 = vpack.c.b16 %v2753, %v2751
    %v4706 = vpack.c.b16 %v2754, %v2752
    %v4707 = vpack.c.b16 %v2757, %v2755
    %v4708 = vpack.c.b16 %v2758, %v2756
    %v4709 = vpack.c.b16 %v2761, %v2759
    %v4710 = vpack.c.b16 %v2762, %v2760
    %v4711 = vpack.c.b16 %v2765, %v2763
    %v4712 = vpack.c.b16 %v2766, %v2764
    %v4713 = vpack.c.b16 %v2769, %v2767
    %v4714 = vpack.c.b16 %v2770, %v2768
    %v4715 = vpack.c.b16 %v2773, %v2771
    %v4716 = vpack.c.b16 %v2774, %v2772
    %v4717 = vpack.c.b16 %v2777, %v2775
    %v4718 = vpack.c.b16 %v2778, %v2776
    %v4719 = vpack.c.b16 %v2781, %v2779
    %v4720 = vpack.c.b16 %v2782, %v2780
    %v4721 = vpack.c.b16 %v2785, %v2783
    %v4722 = vpack.c.b16 %v2786, %v2784
    %v4723 = vpack.c.b16 %v2789, %v2787
    %v4724 = vpack.c.b16 %v2790, %v2788
    %v4725 = vpack.c.b16 %v2793, %v2791
    %v4726 = vpack.c.b16 %v2794, %v2792
    %v4727 = vpack.c.b16 %v2797, %v2795
    %v4728 = vpack.c.b16 %v2798, %v2796
    %v4729 = vpack.c.b16 %v2801, %v2799
    %v4730 = vpack.c.b16 %v2802, %v2800
    %v4731 = vpack.c.b16 %v2805, %v2803
    %v4732 = vpack.c.b16 %v2806, %v2804
    %v4733 = vpack.c.b16 %v2809, %v2807
    %v4734 = vpack.c.b16 %v2810, %v2808
    %v4735 = vpack.c.b16 %v2813, %v2811
    %v4736 = vpack.c.b16 %v2814, %v2812
    %v4737 = vpack.c.b16 %v2817, %v2815
    %v4738 = vpack.c.b16 %v2818, %v2816
    %v4739 = vpack.c.b16 %v2821, %v2819
    %v4740 = vpack.c.b16 %v2822, %v2820
    %v4741 = vpack.c.b16 %v2825, %v2823
    %v4742 = vpack.c.b16 %v2826, %v2824
    %v4743 = vpack.c.b16 %v2829, %v2827
    %v4744 = vpack.c.b16 %v2830, %v2828
    %v4745 = vpack.c.b16 %v2833, %v2831
    %v4746 = vpack.c.b16 %v2834, %v2832
    %v4747 = vpack.c.b16 %v2837, %v2835
    %v4748 = vpack.c.b16 %v2838, %v2836
    %v4749 = vpack.c.b16 %v2841, %v2839
    %v4750 = vpack.c.b16 %v2842, %v2840
    %v4751 = vpack.c.b16 %v2845, %v2843
    %v4752 = vpack.c.b16 %v2846, %v2844
    %v4753 = vpack.c.b16 %v2849, %v2847
    %v4754 = vpack.c.b16 %v2850, %v2848
    %v4755 = vpack.c.b16 %v2853, %v2851
    %v4756 = vpack.c.b16 %v2854, %v2852
    %v4757 = vpack.c.b16 %v2857, %v2855
    %v4758 = vpack.c.b16 %v2858, %v2856
    %v4759 = vpack.c.b16 %v2861, %v2859
    %v4760 = vpack.c.b16 %v2862, %v2860
    %v4761 = vpack.c.b16 %v2865, %v2863
    %v4762 = vpack.c.b16 %v2866, %v2864
    %v4763 = vpack.c.b16 %v2869, %v2867
    %v4764 = vpack.c.b16 %v2870, %v2868
    %v4765 = vpack.c.b16 %v2873, %v2871
    %v4766 = vpack.c.b16 %v2874, %v2872
    %v4767 = vpack.c.b16 %v2877, %v2875
    %v4768 = vpack.c.b16 %v2878, %v2876
    %v4769 = vpack.c.b16 %v2881, %v2879
    %v4770 = vpack.c.b16 %v2882, %v2880
    %v4771 = vpack.c.b16 %v2885, %v2883
    %v4772 = vpack.c.b16 %v2886, %v2884
    %v4773 = vpack.c.b16 %v2889, %v2887
    %v4774 = vpack.c.b16 %v2890, %v2888
    %v4775 = vpack.c.b16 %v2893, %v2891
    %v4776 = vpack.c.b16 %v2894, %v2892
    %v4777 = vpack.c.b16 %v2897, %v2895
    %v4778 = vpack.c.b16 %v2898, %v2896
    %v4779 = vpack.c.b16 %v2901, %v2899
    %v4780 = vpack.c.b16 %v2902, %v2900
    %v4781 = vpack.c.b16 %v2905, %v2903
    %v4782 = vpack.c.b16 %v2906, %v2904
    %v4783 = vpack.c.b16 %v2909, %v2907
    %v4784 = vpack.c.b16 %v2910, %v2908
    %v4785 = vpack.c.b16 %v2913, %v2911
    %v4786 = vpack.c.b16 %v2914, %v2912
    %v4787 = vpack.c.b16 %v2917, %v2915
    %v4788 = vpack.c.b16 %v2918, %v2916
    %v4789 = vpack.c.b16 %v2921, %v2919
    %v4790 = vpack.c.b16 %v2922, %v2920
    %v4791 = vpack.c.b16 %v2925, %v2923
    %v4792 = vpack.c.b16 %v2926, %v2924
    %v4793 = vpack.c.b16 %v2929, %v2927
    %v4794 = vpack.c.b16 %v2930, %v2928
    %v4795 = vpack.c.b16 %v2933, %v2931
    %v4796 = vpack.c.b16 %v2934, %v2932
    %v4797 = vpack.c.b16 %v2937, %v2935
    %v4798 = vpack.c.b16 %v2938, %v2936
    %v4799 = vpack.c.b16 %v2941, %v2939
    %v4800 = vpack.c.b16 %v2942, %v2940
    %v4801 = vpack.c.b16 %v2945, %v2943
    %v4802 = vpack.c.b16 %v2946, %v2944
    %v4803 = vpack.c.b16 %v2949, %v2947
    %v4804 = vpack.c.b16 %v2950, %v2948
    %v4805 = vpack.c.b16 %v2953, %v2951
    %v4806 = vpack.c.b16 %v2954, %v2952
    %v4807 = vpack.c.b16 %v2957, %v2955
    %v4808 = vpack.c.b16 %v2958, %v2956
    %v4809 = vpack.c.b16 %v2961, %v2959
    %v4810 = vpack.c.b16 %v2962, %v2960
    %v4811 = vpack.c.b16 %v2965, %v2963
    %v4812 = vpack.c.b16 %v2966, %v2964
    %v4813 = vpack.c.b16 %v2969, %v2967
    %v4814 = vpack.c.b16 %v2970, %v2968
    %v4815 = vpack.c.b16 %v2973, %v2971
    %v4816 = vpack.c.b16 %v2974, %v2972
    %v4817 = vpack.c.b16 %v2977, %v2975
    %v4818 = vpack.c.b16 %v2978, %v2976
    %v4819 = vpack.c.b16 %v2981, %v2979
    %v4820 = vpack.c.b16 %v2982, %v2980
    %v4821 = vpack.c.b16 %v2985, %v2983
    %v4822 = vpack.c.b16 %v2986, %v2984
    %v4823 = vpack.c.b16 %v2989, %v2987
    %v4824 = vpack.c.b16 %v2990, %v2988
    %v4825 = vpack.c.b16 %v2993, %v2991
    %v4826 = vpack.c.b16 %v2994, %v2992
    %v4827 = vpack.c.b16 %v2997, %v2995
    %v4828 = vpack.c.b16 %v2998, %v2996
    %v4829 = vpack.c.b16 %v3001, %v2999
    %v4830 = vpack.c.b16 %v3002, %v3000
    %v4831 = vpack.c.b16 %v3005, %v3003
    %v4832 = vpack.c.b16 %v3006, %v3004
    %v4833 = vpack.c.b16 %v3009, %v3007
    %v4834 = vpack.c.b16 %v3010, %v3008
    %v4835 = vpack.c.b16 %v3013, %v3011
    %v4836 = vpack.c.b16 %v3014, %v3012
    %v4837 = vpack.c.b16 %v3017, %v3015
    %v4838 = vpack.c.b16 %v3018, %v3016
    %v4839 = vpack.c.b16 %v3021, %v3019
    %v4840 = vpack.c.b16 %v3022, %v3020
    %v4841 = vpack.c.b16 %v3025, %v3023
    %v4842 = vpack.c.b16 %v3026, %v3024
    %v4843 = vpack.c.b16 %v3029, %v3027
    %v4844 = vpack.c.b16 %v3030, %v3028
    %v4845 = vpack.c.b16 %v3033, %v3031
    %v4846 = vpack.c.b16 %v3034, %v3032
    %v4847 = vpack.c.b16 %v3037, %v3035
    %v4848 = vpack.c.b16 %v3038, %v3036
    %v4849 = vpack.c.b16 %v3041, %v3039
    %v4850 = vpack.c.b16 %v3042, %v3040
    %v4851 = vpack.c.b16 %v3045, %v3043
    %v4852 = vpack.c.b16 %v3046, %v3044
    %v4853 = vpack.c.b16 %v3049, %v3047
    %v4854 = vpack.c.b16 %v3050, %v3048
    %v4855 = vpack.c.b16 %v3053, %v3051
    %v4856 = vpack.c.b16 %v3054, %v3052
    %v4857 = vpack.c.b16 %v3057, %v3055
    %v4858 = vpack.c.b16 %v3058, %v3056
    %v4859 = vpack.c.b16 %v3061, %v3059
    %v4860 = vpack.c.b16 %v3062, %v3060
    %v4861 = vpack.c.b16 %v3065, %v3063
    %v4862 = vpack.c.b16 %v3066, %v3064
    %v4863 = vpack.c.b16 %v3069, %v3067
    %v4864 = vpack.c.b16 %v3070, %v3068
    %v4865 = vpack.c.b16 %v3073, %v3071
    %v4866 = vpack.c.b16 %v3074, %v3072
    %v4867 = vpack.c.b16 %v3077, %v3075
    %v4868 = vpack.c.b16 %v3078, %v3076
    %v4869 = vpack.c.b16 %v3081, %v3079
    %v4870 = vpack.c.b16 %v3082, %v3080
    %v4871 = vpack.c.b16 %v3085, %v3083
    %v4872 = vpack.c.b16 %v3086, %v3084
    %v4873 = vpack.c.b16 %v3089, %v3087
    %v4874 = vpack.c.b16 %v3090, %v3088
    %v4875 = vpack.c.b16 %v3093, %v3091
    %v4876 = vpack.c.b16 %v3094, %v3092
    %v4877 = vpack.c.b16 %v3097, %v3095
    %v4878 = vpack.c.b16 %v3098, %v3096
    %v4879 = vpack.c.b16 %v3101, %v3099
    %v4880 = vpack.c.b16 %v3102, %v3100
    %v4881 = vpack.c.b16 %v3105, %v3103
    %v4882 = vpack.c.b16 %v3106, %v3104
    %v4883 = vpack.c.b16 %v3109, %v3107
    %v4884 = vpack.c.b16 %v3110, %v3108
    %v4885 = vpack.c.b16 %v3113, %v3111
    %v4886 = vpack.c.b16 %v3114, %v3112
    %v4887 = vpack.c.b16 %v3117, %v3115
    %v4888 = vpack.c.b16 %v3118, %v3116
    %v4889 = vpack.c.b16 %v3121, %v3119
    %v4890 = vpack.c.b16 %v3122, %v3120
    %v4891 = vpack.c.b16 %v3125, %v3123
    %v4892 = vpack.c.b16 %v3126, %v3124
    %v4893 = vpack.c.b16 %v3129, %v3127
    %v4894 = vpack.c.b16 %v3130, %v3128
    %v4895 = vpack.c.b16 %v3133, %v3131
    %v4896 = vpack.c.b16 %v3134, %v3132
    %v4897 = vpack.c.b16 %v3137, %v3135
    %v4898 = vpack.c.b16 %v3138, %v3136
    %v4899 = vpack.c.b16 %v3141, %v3139
    %v4900 = vpack.c.b16 %v3142, %v3140
    %v4901 = vpack.c.b16 %v3145, %v3143
    %v4902 = vpack.c.b16 %v3146, %v3144
    %v4903 = vpack.c.b16 %v3149, %v3147
    %v4904 = vpack.c.b16 %v3150, %v3148
    %v4905 = vpack.c.b16 %v3153, %v3151
    %v4906 = vpack.c.b16 %v3154, %v3152
    %v4907 = vpack.c.b16 %v3157, %v3155
    %v4908 = vpack.c.b16 %v3158, %v3156
    %v4909 = vpack.c.b16 %v3161, %v3159
    %v4910 = vpack.c.b16 %v3162, %v3160
    %v4911 = vpack.c.b16 %v3165, %v3163
    %v4912 = vpack.c.b16 %v3166, %v3164
    %v4913 = vpack.c.b16 %v3169, %v3167
    %v4914 = vpack.c.b16 %v3170, %v3168
    %v4915 = vpack.c.b16 %v3173, %v3171
    %v4916 = vpack.c.b16 %v3174, %v3172
    %v4917 = vpack.c.b16 %v3177, %v3175
    %v4918 = vpack.c.b16 %v3178, %v3176
    %v4919 = vpack.c.b16 %v3181, %v3179
    %v4920 = vpack.c.b16 %v3182, %v3180
    %v4921 = vpack.c.b16 %v3185, %v3183
    %v4922 = vpack.c.b16 %v3186, %v3184
    %v4923 = vpack.c.b16 %v3189, %v3187
    %v4924 = vpack.c.b16 %v3190, %v3188
    %v4925 = vpack.c.b16 %v3193, %v3191
    %v4926 = vpack.c.b16 %v3194, %v3192
    %v4927 = vpack.c.b16 %v3197, %v3195
    %v4928 = vpack.c.b16 %v3198, %v3196
    %v4929 = vpack.c.b16 %v3201, %v3199
    %v4930 = vpack.c.b16 %v3202, %v3200
    %v4931 = vpack.c.b16 %v3205, %v3203
    %v4932 = vpack.c.b16 %v3206, %v3204
    %v4933 = vpack.c.b16 %v3209, %v3207
    %v4934 = vpack.c.b16 %v3210, %v3208
    %v4935 = vpack.c.b16 %v3213, %v3211
    %v4936 = vpack.c.b16 %v3214, %v3212
    %v4937 = vpack.c.b16 %v3217, %v3215
    %v4938 = vpack.c.b16 %v3218, %v3216
    %v4939 = vpack.c.b16 %v3221, %v3219
    %v4940 = vpack.c.b16 %v3222, %v3220
    %v4941 = vpack.c.b16 %v3225, %v3223
    %v4942 = vpack.c.b16 %v3226, %v3224
    %v4943 = vpack.c.b16 %v3229, %v3227
    %v4944 = vpack.c.b16 %v3230, %v3228
    %v4945 = vpack.c.b16 %v3233, %v3231
    %v4946 = vpack.c.b16 %v3234, %v3232
    %v4947 = vpack.c.b16 %v3237, %v3235
    %v4948 = vpack.c.b16 %v3238, %v3236
    %v4949 = vpack.c.b16 %v3241, %v3239
    %v4950 = vpack.c.b16 %v3242, %v3240
    %v4951 = vpack.c.b16 %v3245, %v3243
    %v4952 = vpack.c.b16 %v3246, %v3244
    %v4953 = vpack.c.b16 %v3249, %v3247
    %v4954 = vpack.c.b16 %v3250, %v3248
    %v4955 = vpack.c.b16 %v3253, %v3251
    %v4956 = vpack.c.b16 %v3254, %v3252
    %v4957 = vpack.c.b16 %v3257, %v3255
    %v4958 = vpack.c.b16 %v3258, %v3256
    %v4959 = vpack.c.b16 %v3261, %v3259
    %v4960 = vpack.c.b16 %v3262, %v3260
    %v4961 = vpack.c.b16 %v3265, %v3263
    %v4962 = vpack.c.b16 %v3266, %v3264
    %v4963 = vpack.c.b16 %v3269, %v3267
    %v4964 = vpack.c.b16 %v3270, %v3268
    %v4965 = vpack.c.b16 %v3273, %v3271
    %v4966 = vpack.c.b16 %v3274, %v3272
    %v4967 = vpack.c.b16 %v3277, %v3275
    %v4968 = vpack.c.b16 %v3278, %v3276
    %v4969 = vpack.c.b16 %v3281, %v3279
    %v4970 = vpack.c.b16 %v3282, %v3280
    %v4971 = vpack.c.b16 %v3285, %v3283
    %v4972 = vpack.c.b16 %v3286, %v3284
    %v4973 = vpack.c.b16 %v3289, %v3287
    %v4974 = vpack.c.b16 %v3290, %v3288
    %v4975 = vpack.c.b16 %v3293, %v3291
    %v4976 = vpack.c.b16 %v3294, %v3292
    %v4977 = vpack.c.b16 %v3297, %v3295
    %v4978 = vpack.c.b16 %v3298, %v3296
    %v4979 = vpack.c.b16 %v3301, %v3299
    %v4980 = vpack.c.b16 %v3302, %v3300
    %v4981 = vpack.c.b16 %v3305, %v3303
    %v4982 = vpack.c.b16 %v3306, %v3304
    %v4983 = vpack.c.b16 %v3309, %v3307
    %v4984 = vpack.c.b16 %v3310, %v3308
    %v4985 = vpack.c.b16 %v3313, %v3311
    %v4986 = vpack.c.b16 %v3314, %v3312
    %v4987 = vpack.c.b16 %v3317, %v3315
    %v4988 = vpack.c.b16 %v3318, %v3316
    %v4989 = vpack.c.b16 %v3321, %v3319
    %v4990 = vpack.c.b16 %v3322, %v3320
    %v4991 = vpack.c.b16 %v3325, %v3323
    %v4992 = vpack.c.b16 %v3326, %v3324
    %v4993 = vpack.c.b16 %v3329, %v3327
    %v4994 = vpack.c.b16 %v3330, %v3328
    %v4995 = vpack.c.b16 %v3333, %v3331
    %v4996 = vpack.c.b16 %v3334, %v3332
    %v4997 = vpack.c.b16 %v3337, %v3335
    %v4998 = vpack.c.b16 %v3338, %v3336
    %v4999 = vpack.c.b16 %v3341, %v3339
    %v5000 = vpack.c.b16 %v3342, %v3340
    %v5001 = vpack.c.b16 %v3345, %v3343
    %v5002 = vpack.c.b16 %v3346, %v3344
    %v5003 = vpack.c.b16 %v3349, %v3347
    %v5004 = vpack.c.b16 %v3350, %v3348
    %v5005 = vpack.c.b16 %v3353, %v3351
    %v5006 = vpack.c.b16 %v3354, %v3352
    %v5007 = vpack.c.b16 %v3357, %v3355
    %v5008 = vpack.c.b16 %v3358, %v3356
    %v5009 = vpack.c.b16 %v3361, %v3359
    %v5010 = vpack.c.b16 %v3362, %v3360
    %v5011 = vpack.c.b16 %v3365, %v3363
    %v5012 = vpack.c.b16 %v3366, %v3364
    %v5013 = vpack.c.b16 %v3369, %v3367
    %v5014 = vpack.c.b16 %v3370, %v3368
    %v5015 = vpack.c.b16 %v3373, %v3371
    %v5016 = vpack.c.b16 %v3374, %v3372
    %v5017 = vpack.c.b16 %v3377, %v3375
    %v5018 = vpack.c.b16 %v3378, %v3376
    %v5019 = vpack.c.b16 %v3381, %v3379
    %v5020 = vpack.c.b16 %v3382, %v3380
    %v5021 = vpack.c.b16 %v3385, %v3383
    %v5022 = vpack.c.b16 %v3386, %v3384
    %v5023 = vpack.c.b16 %v3389, %v3387
    %v5024 = vpack.c.b16 %v3390, %v3388
    %v5025 = vpack.c.b16 %v3393, %v3391
    %v5026 = vpack.c.b16 %v3394, %v3392
    %v5027 = vpack.c.b16 %v3397, %v3395
    %v5028 = vpack.c.b16 %v3398, %v3396
    %v5029 = vpack.c.b16 %v3401, %v3399
    %v5030 = vpack.c.b16 %v3402, %v3400
    %v5031 = vpack.c.b16 %v3405, %v3403
    %v5032 = vpack.c.b16 %v3406, %v3404
    %v5033 = vpack.c.b16 %v3409, %v3407
    %v5034 = vpack.c.b16 %v3410, %v3408
    %v5035 = vpack.c.b16 %v3413, %v3411
    %v5036 = vpack.c.b16 %v3414, %v3412
    %v5037 = vpack.c.b16 %v3417, %v3415
    %v5038 = vpack.c.b16 %v3418, %v3416
    %v5039 = vpack.c.b16 %v3421, %v3419
    %v5040 = vpack.c.b16 %v3422, %v3420
    %v5041 = vpack.c.b16 %v3425, %v3423
    %v5042 = vpack.c.b16 %v3426, %v3424
    %v5043 = vpack.c.b16 %v3429, %v3427
    %v5044 = vpack.c.b16 %v3430, %v3428
    %v5045 = vpack.c.b16 %v3433, %v3431
    %v5046 = vpack.c.b16 %v3434, %v3432
    %v5047 = vpack.c.b16 %v3437, %v3435
    %v5048 = vpack.c.b16 %v3438, %v3436
    %v5049 = vpack.c.b16 %v3441, %v3439
    %v5050 = vpack.c.b16 %v3442, %v3440
    %v5051 = vpack.c.b16 %v3445, %v3443
    %v5052 = vpack.c.b16 %v3446, %v3444
    %v5053 = vpack.c.b16 %v3449, %v3447
    %v5054 = vpack.c.b16 %v3450, %v3448
    %v5055 = vpack.c.b16 %v3453, %v3451
    %v5056 = vpack.c.b16 %v3454, %v3452
    %v5057 = vpack.c.b16 %v3457, %v3455
    %v5058 = vpack.c.b16 %v3458, %v3456
    %v5059 = vpack.c.b16 %v3461, %v3459
    %v5060 = vpack.c.b16 %v3462, %v3460
    %v5061 = vpack.c.b16 %v3465, %v3463
    %v5062 = vpack.c.b16 %v3466, %v3464
    %v5063 = vpack.c.b16 %v3469, %v3467
    %v5064 = vpack.c.b16 %v3470, %v3468
    %v5065 = vpack.c.b16 %v3473, %v3471
    %v5066 = vpack.c.b16 %v3474, %v3472
    %v5067 = vpack.c.b16 %v3477, %v3475
    %v5068 = vpack.c.b16 %v3478, %v3476
    %v5069 = vpack.c.b16 %v3481, %v3479
    %v5070 = vpack.c.b16 %v3482, %v3480
    %v5071 = vpack.c.b16 %v3485, %v3483
    %v5072 = vpack.c.b16 %v3486, %v3484
    %v5073 = vpack.c.b16 %v3489, %v3487
    %v5074 = vpack.c.b16 %v3490, %v3488
    %v5075 = vpack.c.b16 %v3493, %v3491
    %v5076 = vpack.c.b16 %v3494, %v3492
    %v5077 = vpack.c.b16 %v3497, %v3495
    %v5078 = vpack.c.b16 %v3498, %v3496
    %v5079 = vpack.c.b16 %v3501, %v3499
    %v5080 = vpack.c.b16 %v3502, %v3500
    %v5081 = vpack.c.b16 %v3505, %v3503
    %v5082 = vpack.c.b16 %v3506, %v3504
    %v5083 = vpack.c.b16 %v3509, %v3507
    %v5084 = vpack.c.b16 %v3510, %v3508
    %v5085 = vpack.c.b16 %v3513, %v3511
    %v5086 = vpack.c.b16 %v3514, %v3512
    %v5087 = vpack.c.b16 %v3517, %v3515
    %v5088 = vpack.c.b16 %v3518, %v3516
    %v5089 = vpack.c.b16 %v3521, %v3519
    %v5090 = vpack.c.b16 %v3522, %v3520
    %v5091 = vpack.c.b16 %v3525, %v3523
    %v5092 = vpack.c.b16 %v3526, %v3524
    %v5093 = vpack.c.b16 %v3529, %v3527
    %v5094 = vpack.c.b16 %v3530, %v3528
    %v5095 = vpack.c.b16 %v3533, %v3531
    %v5096 = vpack.c.b16 %v3534, %v3532
    %v5097 = vpack.c.b16 %v3537, %v3535
    %v5098 = vpack.c.b16 %v3538, %v3536
    %v5099 = vpack.c.b16 %v3541, %v3539
    %v5100 = vpack.c.b16 %v3542, %v3540
    %v5101 = vpack.c.b16 %v3545, %v3543
    %v5102 = vpack.c.b16 %v3546, %v3544
    %v5103 = vpack.c.b16 %v3549, %v3547
    %v5104 = vpack.c.b16 %v3550, %v3548
    %v5105 = vpack.c.b16 %v3553, %v3551
    %v5106 = vpack.c.b16 %v3554, %v3552
    %v5107 = vpack.c.b16 %v3557, %v3555
    %v5108 = vpack.c.b16 %v3558, %v3556
    %v5109 = vpack.c.b16 %v3561, %v3559
    %v5110 = vpack.c.b16 %v3562, %v3560
    %v5111 = vpack.c.b16 %v3565, %v3563
    %v5112 = vpack.c.b16 %v3566, %v3564
    %v5113 = vpack.c.b16 %v3569, %v3567
    %v5114 = vpack.c.b16 %v3570, %v3568
    %v5115 = vpack.c.b16 %v3573, %v3571
    %v5116 = vpack.c.b16 %v3574, %v3572
    %v5117 = vpack.c.b16 %v3577, %v3575
    %v5118 = vpack.c.b16 %v3578, %v3576
    %v5119 = vpack.c.b16 %v3581, %v3579
    %v5120 = vpack.c.b16 %v3582, %v3580
    %v5121 = vpack.c.b16 %v3585, %v3583
    %v5122 = vpack.c.b16 %v3586, %v3584
    %v5123 = vpack.c.b16 %v3589, %v3587
    %v5124 = vpack.c.b16 %v3590, %v3588
    %v5125 = vpack.c.b16 %v3593, %v3591
    %v5126 = vpack.c.b16 %v3594, %v3592
    %v5127 = vpack.c.b16 %v3597, %v3595
    %v5128 = vpack.c.b16 %v3598, %v3596
    %v5129 = vpack.c.b16 %v3601, %v3599
    %v5130 = vpack.c.b16 %v3602, %v3600
    %v5131 = vpack.c.b16 %v3605, %v3603
    %v5132 = vpack.c.b16 %v3606, %v3604
    %v5133 = vpack.c.b16 %v3609, %v3607
    %v5134 = vpack.c.b16 %v3610, %v3608
    %v5135 = vpack.c.b16 %v3613, %v3611
    %v5136 = vpack.c.b16 %v3614, %v3612
    %v5137 = vpack.c.b16 %v3617, %v3615
    %v5138 = vpack.c.b16 %v3618, %v3616
    %v5139 = vpack.c.b16 %v3621, %v3619
    %v5140 = vpack.c.b16 %v3622, %v3620
    %v5141 = vpack.c.b16 %v3625, %v3623
    %v5142 = vpack.c.b16 %v3626, %v3624
    %v5143 = vpack.c.b16 %v3629, %v3627
    %v5144 = vpack.c.b16 %v3630, %v3628
    %v5145 = vpack.c.b16 %v3633, %v3631
    %v5146 = vpack.c.b16 %v3634, %v3632
    %v5147 = vpack.c.b16 %v3637, %v3635
    %v5148 = vpack.c.b16 %v3638, %v3636
    %v5149 = vpack.c.b16 %v3641, %v3639
    %v5150 = vpack.c.b16 %v3642, %v3640
    %v5151 = vpack.c.b16 %v3645, %v3643
    %v5152 = vpack.c.b16 %v3646, %v3644
    %v5153 = vpack.c.b16 %v3649, %v3647
    %v5154 = vpack.c.b16 %v3650, %v3648
    %v5155 = vpack.c.b16 %v3653, %v3651
    %v5156 = vpack.c.b16 %v3654, %v3652
    %v5157 = vpack.c.b16 %v3657, %v3655
    %v5158 = vpack.c.b16 %v3658, %v3656
    %v5159 = vpack.c.b16 %v3661, %v3659
    %v5160 = vpack.c.b16 %v3662, %v3660
    %v5161 = vpack.c.b16 %v3665, %v3663
    %v5162 = vpack.c.b16 %v3666, %v3664
    %v5163 = vpack.c.b16 %v3669, %v3667
    %v5164 = vpack.c.b16 %v3670, %v3668
    %v5165 = vpack.c.b16 %v3673, %v3671
    %v5166 = vpack.c.b16 %v3674, %v3672
    %v5167 = vpack.c.b16 %v3677, %v3675
    %v5168 = vpack.c.b16 %v3678, %v3676
    %v5169 = vpack.c.b16 %v3681, %v3679
    %v5170 = vpack.c.b16 %v3682, %v3680
    %v5171 = vpack.c.b16 %v3685, %v3683
    %v5172 = vpack.c.b16 %v3686, %v3684
    %v5173 = vpack.c.b16 %v3689, %v3687
    %v5174 = vpack.c.b16 %v3690, %v3688
    %v5175 = vpack.c.b16 %v3693, %v3691
    %v5176 = vpack.c.b16 %v3694, %v3692
    %v5177 = vpack.c.b16 %v3697, %v3695
    %v5178 = vpack.c.b16 %v3698, %v3696
    %v5179 = vpack.c.b16 %v3701, %v3699
    %v5180 = vpack.c.b16 %v3702, %v3700
    %v5181 = vpack.c.b16 %v3705, %v3703
    %v5182 = vpack.c.b16 %v3706, %v3704
    %v5183 = vpack.c.b16 %v3709, %v3707
    %v5184 = vpack.c.b16 %v3710, %v3708
    %v5185 = vpack.c.b16 %v3713, %v3711
    %v5186 = vpack.c.b16 %v3714, %v3712
    %v5187 = vpack.c.b16 %v3717, %v3715
    %v5188 = vpack.c.b16 %v3718, %v3716
    %v5189 = vpack.c.b16 %v3721, %v3719
    %v5190 = vpack.c.b16 %v3722, %v3720
    %v5191 = vpack.c.b16 %v3725, %v3723
    %v5192 = vpack.c.b16 %v3726, %v3724
    %v5193 = vpack.c.b16 %v3729, %v3727
    %v5194 = vpack.c.b16 %v3730, %v3728
    %v5195 = vpack.c.b16 %v3733, %v3731
    %v5196 = vpack.c.b16 %v3734, %v3732
    %v5197 = vpack.c.b16 %v3737, %v3735
    %v5198 = vpack.c.b16 %v3738, %v3736
    %v5199 = vpack.c.b16 %v3741, %v3739
    %v5200 = vpack.c.b16 %v3742, %v3740
    %v5201 = vpack.c.b16 %v3745, %v3743
    %v5202 = vpack.c.b16 %v3746, %v3744
    %v5203 = vpack.c.b16 %v3749, %v3747
    %v5204 = vpack.c.b16 %v3750, %v3748
    %v5205 = vpack.c.b16 %v3753, %v3751
    %v5206 = vpack.c.b16 %v3754, %v3752
    %v5207 = vpack.c.b16 %v3757, %v3755
    %v5208 = vpack.c.b16 %v3758, %v3756
    %v5209 = vpack.c.b16 %v3761, %v3759
    %v5210 = vpack.c.b16 %v3762, %v3760
    %v5211 = vpack.c.b16 %v3765, %v3763
    %v5212 = vpack.c.b16 %v3766, %v3764
    %v5213 = vpack.c.b16 %v3769, %v3767
    %v5214 = vpack.c.b16 %v3770, %v3768
    %v5215 = vpack.c.b16 %v3773, %v3771
    %v5216 = vpack.c.b16 %v3774, %v3772
    %v5217 = vpack.c.b16 %v3777, %v3775
    %v5218 = vpack.c.b16 %v3778, %v3776
    %v5219 = vpack.c.b16 %v3781, %v3779
    %v5220 = vpack.c.b16 %v3782, %v3780
    %v5221 = vpack.c.b16 %v3785, %v3783
    %v5222 = vpack.c.b16 %v3786, %v3784
    %v5223 = vpack.c.b16 %v3789, %v3787
    %v5224 = vpack.c.b16 %v3790, %v3788
    %v5225 = vpack.c.b16 %v3793, %v3791
    %v5226 = vpack.c.b16 %v3794, %v3792
    %v5227 = vpack.c.b16 %v3797, %v3795
    %v5228 = vpack.c.b16 %v3798, %v3796
    %v5229 = vpack.c.b16 %v3801, %v3799
    %v5230 = vpack.c.b16 %v3802, %v3800
    %v5231 = vpack.c.b16 %v3805, %v3803
    %v5232 = vpack.c.b16 %v3806, %v3804
    %v5233 = vpack.c.b16 %v3809, %v3807
    %v5234 = vpack.c.b16 %v3810, %v3808
    %v5235 = vpack.c.b16 %v3813, %v3811
    %v5236 = vpack.c.b16 %v3814, %v3812
    %v5237 = vpack.c.b16 %v3817, %v3815
    %v5238 = vpack.c.b16 %v3818, %v3816
    %v5239 = vpack.c.b16 %v3821, %v3819
    %v5240 = vpack.c.b16 %v3822, %v3820
    %v5241 = vpack.c.b16 %v3825, %v3823
    %v5242 = vpack.c.b16 %v3826, %v3824
    %v5243 = vpack.c.b16 %v3829, %v3827
    %v5244 = vpack.c.b16 %v3830, %v3828
    %v5245 = vpack.c.b16 %v3833, %v3831
    %v5246 = vpack.c.b16 %v3834, %v3832
    %v5247 = vpack.c.b16 %v3837, %v3835
    %v5248 = vpack.c.b16 %v3838, %v3836
    %v5249 = vpack.c.b16 %v3841, %v3839
    %v5250 = vpack.c.b16 %v3842, %v3840
    %v5251 = vpack.c.b16 %v3845, %v3843
    %v5252 = vpack.c.b16 %v3846, %v3844
    %v5253 = vpack.c.b16 %v3849, %v3847
    %v5254 = vpack.c.b16 %v3850, %v3848
    %v5255 = vpack.c.b16 %v3853, %v3851
    %v5256 = vpack.c.b16 %v3854, %v3852
    %v5257 = vpack.c.b16 %v3857, %v3855
    %v5258 = vpack.c.b16 %v3858, %v3856
    %v5259 = vpack.c.b16 %v3861, %v3859
    %v5260 = vpack.c.b16 %v3862, %v3860
    %v5261 = vpack.c.b16 %v3865, %v3863
    %v5262 = vpack.c.b16 %v3866, %v3864
    %v5263 = vpack.c.b16 %v3869, %v3867
    %v5264 = vpack.c.b16 %v3870, %v3868
    %v5265 = vpack.c.b16 %v3873, %v3871
    %v5266 = vpack.c.b16 %v3874, %v3872
    %v5267 = vpack.c.b16 %v3877, %v3875
    %v5268 = vpack.c.b16 %v3878, %v3876
    %v5269 = vpack.c.b16 %v3881, %v3879
    %v5270 = vpack.c.b16 %v3882, %v3880
    %v5271 = vpack.c.b16 %v3885, %v3883
    %v5272 = vpack.c.b16 %v3886, %v3884
    %v5273 = vpack.c.b16 %v3889, %v3887
    %v5274 = vpack.c.b16 %v3890, %v3888
    %v5275 = vpack.c.b16 %v3893, %v3891
    %v5276 = vpack.c.b16 %v3894, %v3892
    %v5277 = vpack.c.b16 %v3897, %v3895
    %v5278 = vpack.c.b16 %v3898, %v3896
    %v5279 = vpack.c.b16 %v3901, %v3899
    %v5280 = vpack.c.b16 %v3902, %v3900
    %v5281 = vpack.c.b16 %v3905, %v3903
    %v5282 = vpack.c.b16 %v3906, %v3904
    %v5283 = vpack.c.b16 %v3909, %v3907
    %v5284 = vpack.c.b16 %v3910, %v3908
    %v5285 = vpack.c.b16 %v3913, %v3911
    %v5286 = vpack.c.b16 %v3914, %v3912
    %v5287 = vpack.c.b16 %v3917, %v3915
    %v5288 = vpack.c.b16 %v3918, %v3916
    %v5289 = vpack.c.b16 %v3921, %v3919
    %v5290 = vpack.c.b16 %v3922, %v3920
    %v5291 = vpack.c.b16 %v3925, %v3923
    %v5292 = vpack.c.b16 %v3926, %v3924
    %v5293 = vpack.c.b16 %v3929, %v3927
    %v5294 = vpack.c.b16 %v3930, %v3928
    %v5295 = vpack.c.b16 %v3933, %v3931
    %v5296 = vpack.c.b16 %v3934, %v3932
    %v5297 = vpack.c.b16 %v3937, %v3935
    %v5298 = vpack.c.b16 %v3938, %v3936
    %v5299 = vpack.c.b16 %v3941, %v3939
    %v5300 = vpack.c.b16 %v3942, %v3940
    %v5301 = vpack.c.b16 %v3945, %v3943
    %v5302 = vpack.c.b16 %v3946, %v3944
    %v5303 = vpack.c.b16 %v3949, %v3947
    %v5304 = vpack.c.b16 %v3950, %v3948
    %v5305 = vpack.c.b16 %v3953, %v3951
    %v5306 = vpack.c.b16 %v3954, %v3952
    %v5307 = vpack.c.b16 %v3957, %v3955
    %v5308 = vpack.c.b16 %v3958, %v3956
    %v5309 = vpack.c.b16 %v3961, %v3959
    %v5310 = vpack.c.b16 %v3962, %v3960
    %v5311 = vpack.c.b16 %v3965, %v3963
    %v5312 = vpack.c.b16 %v3966, %v3964
    %v5313 = vpack.c.b16 %v3969, %v3967
    %v5314 = vpack.c.b16 %v3970, %v3968
    %v5315 = vpack.c.b16 %v3973, %v3971
    %v5316 = vpack.c.b16 %v3974, %v3972
    %v5317 = vpack.c.b16 %v3977, %v3975
    %v5318 = vpack.c.b16 %v3978, %v3976
    %v5319 = vpack.c.b16 %v3981, %v3979
    %v5320 = vpack.c.b16 %v3982, %v3980
    %v5321 = vpack.c.b16 %v3985, %v3983
    %v5322 = vpack.c.b16 %v3986, %v3984
    %v5323 = vpack.c.b16 %v3989, %v3987
    %v5324 = vpack.c.b16 %v3990, %v3988
    %v5325 = vpack.c.b16 %v3993, %v3991
    %v5326 = vpack.c.b16 %v3994, %v3992
    %v5327 = vpack.c.b16 %v3997, %v3995
    %v5328 = vpack.c.b16 %v3998, %v3996
    %v5329 = vpack.c.b16 %v4001, %v3999
    %v5330 = vpack.c.b16 %v4002, %v4000
    %v5331 = vpack.c.b16 %v4005, %v4003
    %v5332 = vpack.c.b16 %v4006, %v4004
    %v5333 = vpack.c.b16 %v4009, %v4007
    %v5334 = vpack.c.b16 %v4010, %v4008
    %v5335 = vpack.c.b16 %v4013, %v4011
    %v5336 = vpack.c.b16 %v4014, %v4012
    %v5337 = vpack.c.b16 %v4017, %v4015
    %v5338 = vpack.c.b16 %v4018, %v4016
    %v5339 = vpack.c.b16 %v4021, %v4019
    %v5340 = vpack.c.b16 %v4022, %v4020
    %v5341 = vpack.c.b16 %v4025, %v4023
    %v5342 = vpack.c.b16 %v4026, %v4024
    %v5343 = vpack.c.b16 %v4029, %v4027
    %v5344 = vpack.c.b16 %v4030, %v4028
    %v5345 = vpack.c.b16 %v4033, %v4031
    %v5346 = vpack.c.b16 %v4034, %v4032
    %v5347 = vpack.c.b16 %v4037, %v4035
    %v5348 = vpack.c.b16 %v4038, %v4036
    %v5349 = vpack.c.b16 %v4041, %v4039
    %v5350 = vpack.c.b16 %v4042, %v4040
    %v5351 = vpack.c.b16 %v4045, %v4043
    %v5352 = vpack.c.b16 %v4046, %v4044
    %v5353 = vpack.c.b16 %v4049, %v4047
    %v5354 = vpack.c.b16 %v4050, %v4048
    %v5355 = vpack.c.b16 %v4053, %v4051
    %v5356 = vpack.c.b16 %v4054, %v4052
    %v5357 = vpack.c.b16 %v4057, %v4055
    %v5358 = vpack.c.b16 %v4058, %v4056
    %v5359 = vpack.c.b16 %v4061, %v4059
    %v5360 = vpack.c.b16 %v4062, %v4060
    %v5361 = vpack.c.b16 %v4065, %v4063
    %v5362 = vpack.c.b16 %v4066, %v4064
    %v5363 = vpack.c.b16 %v4069, %v4067
    %v5364 = vpack.c.b16 %v4070, %v4068
    %v5365 = vpack.c.b16 %v4073, %v4071
    %v5366 = vpack.c.b16 %v4074, %v4072
    %v5367 = vpack.c.b16 %v4077, %v4075
    %v5368 = vpack.c.b16 %v4078, %v4076
    %v5369 = vpack.c.b16 %v4081, %v4079
    %v5370 = vpack.c.b16 %v4082, %v4080
    %v5371 = vpack.c.b16 %v4085, %v4083
    %v5372 = vpack.c.b16 %v4086, %v4084
    %v5373 = vpack.c.b16 %v4089, %v4087
    %v5374 = vpack.c.b16 %v4090, %v4088
    %v5375 = vpack.c.b16 %v4093, %v4091
    %v5376 = vpack.c.b16 %v4094, %v4092
    %v5377 = vpack.c.b16 %v4097, %v4095
    %v5378 = vpack.c.b16 %v4098, %v4096
    %v5379 = vpack.c.b16 %v4101, %v4099
    %v5380 = vpack.c.b16 %v4102, %v4100
    %v5381 = vpack.c.b16 %v4105, %v4103
    %v5382 = vpack.c.b16 %v4106, %v4104
    %v5383 = vpack.c.b16 %v4109, %v4107
    %v5384 = vpack.c.b16 %v4110, %v4108
    %v5385 = vpack.c.b16 %v4113, %v4111
    %v5386 = vpack.c.b16 %v4114, %v4112
    %v5387 = vpack.c.b16 %v4117, %v4115
    %v5388 = vpack.c.b16 %v4118, %v4116
    %v5389 = vpack.c.b16 %v4121, %v4119
    %v5390 = vpack.c.b16 %v4122, %v4120
    %v5391 = vpack.c.b16 %v4125, %v4123
    %v5392 = vpack.c.b16 %v4126, %v4124
    %v5393 = vpack.c.b16 %v4129, %v4127
    %v5394 = vpack.c.b16 %v4130, %v4128
    %v5395 = vpack.c.b16 %v4133, %v4131
    %v5396 = vpack.c.b16 %v4134, %v4132
    %v5397 = vpack.c.b16 %v4137, %v4135
    %v5398 = vpack.c.b16 %v4138, %v4136
    %v5399 = vpack.c.b16 %v4141, %v4139
    %v5400 = vpack.c.b16 %v4142, %v4140
    %v5401 = vpack.c.b16 %v4145, %v4143
    %v5402 = vpack.c.b16 %v4146, %v4144
    %v5403 = vpack.c.b16 %v4149, %v4147
    %v5404 = vpack.c.b16 %v4150, %v4148
    %v5405 = vpack.c.b16 %v4153, %v4151
    %v5406 = vpack.c.b16 %v4154, %v4152
    %v5407 = vpack.c.b16 %v4157, %v4155
    %v5408 = vpack.c.b16 %v4158, %v4156
    %v5409 = vpack.c.b16 %v4161, %v4159
    %v5410 = vpack.c.b16 %v4162, %v4160
    %v5411 = vpack.c.b16 %v4165, %v4163
    %v5412 = vpack.c.b16 %v4166, %v4164
    %v5413 = vpack.c.b16 %v4169, %v4167
    %v5414 = vpack.c.b16 %v4170, %v4168
    %v5415 = vpack.c.b16 %v4173, %v4171
    %v5416 = vpack.c.b16 %v4174, %v4172
    %v5417 = vpack.c.b16 %v4177, %v4175
    %v5418 = vpack.c.b16 %v4178, %v4176
    %v5419 = vpack.c.b16 %v4181, %v4179
    %v5420 = vpack.c.b16 %v4182, %v4180
    %v5421 = vpack.c.b16 %v4185, %v4183
    %v5422 = vpack.c.b16 %v4186, %v4184
    %v5423 = vpack.c.b16 %v4189, %v4187
    %v5424 = vpack.c.b16 %v4190, %v4188
    %v5425 = vpack.c.b16 %v4193, %v4191
    %v5426 = vpack.c.b16 %v4194, %v4192
    %v5427 = vpack.c.b16 %v4197, %v4195
    %v5428 = vpack.c.b16 %v4198, %v4196
    %v5429 = vpack.c.b16 %v4201, %v4199
    %v5430 = vpack.c.b16 %v4202, %v4200
    %v5431 = vpack.c.b16 %v4205, %v4203
    %v5432 = vpack.c.b16 %v4206, %v4204
    %v5433 = vpack.c.b16 %v4209, %v4207
    %v5434 = vpack.c.b16 %v4210, %v4208
    %v5435 = vpack.c.b16 %v4213, %v4211
    %v5436 = vpack.c.b16 %v4214, %v4212
    %v5437 = vpack.c.b16 %v4217, %v4215
    %v5438 = vpack.c.b16 %v4218, %v4216
    %v5439 = vpack.c.b16 %v4221, %v4219
    %v5440 = vpack.c.b16 %v4222, %v4220
    %v5441 = vpack.c.b16 %v4225, %v4223
    %v5442 = vpack.c.b16 %v4226, %v4224
    %v5443 = vpack.c.b16 %v4229, %v4227
    %v5444 = vpack.c.b16 %v4230, %v4228
    %v5445 = vpack.c.b16 %v4233, %v4231
    %v5446 = vpack.c.b16 %v4234, %v4232
    %v5447 = vpack.c.b16 %v4237, %v4235
    %v5448 = vpack.c.b16 %v4238, %v4236
    %v5449 = vpack.c.b16 %v4241, %v4239
    %v5450 = vpack.c.b16 %v4242, %v4240
    %v5451 = vpack.c.b16 %v4245, %v4243
    %v5452 = vpack.c.b16 %v4246, %v4244
    %v5453 = vpack.c.b16 %v4249, %v4247
    %v5454 = vpack.c.b16 %v4250, %v4248
    %v5455 = vpack.c.b16 %v4253, %v4251
    %v5456 = vpack.c.b16 %v4254, %v4252
    %v5457 = vpack.c.b16 %v4257, %v4255
    %v5458 = vpack.c.b16 %v4258, %v4256
    %v5459 = vpack.c.b16 %v4261, %v4259
    %v5460 = vpack.c.b16 %v4262, %v4260
    %v5461 = vpack.c.b16 %v4265, %v4263
    %v5462 = vpack.c.b16 %v4266, %v4264
    %v5463 = vpack.c.b16 %v4269, %v4267
    %v5464 = vpack.c.b16 %v4270, %v4268
    %v5465 = vpack.c.b16 %v4273, %v4271
    %v5466 = vpack.c.b16 %v4274, %v4272
    %v5467 = vpack.c.b16 %v4277, %v4275
    %v5468 = vpack.c.b16 %v4278, %v4276
    %v5469 = vpack.c.b16 %v4281, %v4279
    %v5470 = vpack.c.b16 %v4282, %v4280
    %v5471 = vpack.c.b16 %v4285, %v4283
    %v5472 = vpack.c.b16 %v4286, %v4284
    %v5473 = vpack.c.b16 %v4289, %v4287
    %v5474 = vpack.c.b16 %v4290, %v4288
    %v5475 = vpack.c.b16 %v4293, %v4291
    %v5476 = vpack.c.b16 %v4294, %v4292
    %v5477 = vpack.c.b16 %v4297, %v4295
    %v5478 = vpack.c.b16 %v4298, %v4296
    %v5479 = vpack.c.b16 %v4301, %v4299
    %v5480 = vpack.c.b16 %v4302, %v4300
    %v5481 = vpack.c.b16 %v4305, %v4303
    %v5482 = vpack.c.b16 %v4306, %v4304
    %v5483 = vpack.c.b16 %v4309, %v4307
    %v5484 = vpack.c.b16 %v4310, %v4308
    %v5485 = vpack.c.b16 %v4313, %v4311
    %v5486 = vpack.c.b16 %v4314, %v4312
    %v5487 = vpack.c.b16 %v4317, %v4315
    %v5488 = vpack.c.b16 %v4318, %v4316
    %v5489 = vpack.c.b16 %v4321, %v4319
    %v5490 = vpack.c.b16 %v4322, %v4320
    %v5491 = vpack.c.b16 %v4325, %v4323
    %v5492 = vpack.c.b16 %v4326, %v4324
    %v5493 = vpack.c.b16 %v4329, %v4327
    %v5494 = vpack.c.b16 %v4330, %v4328
    %v5495 = vpack.c.b16 %v4333, %v4331
    %v5496 = vpack.c.b16 %v4334, %v4332
    %v5497 = vpack.c.b16 %v4337, %v4335
    %v5498 = vpack.c.b16 %v4338, %v4336
    %v5499 = vpack.c.b16 %v4341, %v4339
    %v5500 = vpack.c.b16 %v4342, %v4340
    %v5501 = vpack.c.b16 %v4345, %v4343
    %v5502 = vpack.c.b16 %v4346, %v4344
    %v5503 = vpack.c.b16 %v4349, %v4347
    %v5504 = vpack.c.b16 %v4350, %v4348
    %v5505 = vpack.c.b16 %v4353, %v4351
    %v5506 = vpack.c.b16 %v4354, %v4352
    %v5507 = vpack.c.b16 %v4357, %v4355
    %v5508 = vpack.c.b16 %v4358, %v4356
    %v5509 = vpack.c.b16 %v4361, %v4359
    %v5510 = vpack.c.b16 %v4362, %v4360
    %v5511 = vpack.c.b16 %v4365, %v4363
    %v5512 = vpack.c.b16 %v4366, %v4364
    %v5513 = vpack.c.b16 %v4369, %v4367
    %v5514 = vpack.c.b16 %v4370, %v4368
    %v5515 = vpack.c.b16 %v4373, %v4371
    %v5516 = vpack.c.b16 %v4374, %v4372
    %v5517 = vpack.c.b16 %v4377, %v4375
    %v5518 = vpack.c.b16 %v4378, %v4376
    %v5519 = vpack.c.b16 %v4381, %v4379
    %v5520 = vpack.c.b16 %v4382, %v4380
    %v5521 = vpack.c.b16 %v4385, %v4383
    %v5522 = vpack.c.b16 %v4386, %v4384
    %v5523 = vpack.c.b16 %v4389, %v4387
    %v5524 = vpack.c.b16 %v4390, %v4388
    %v5525 = vpack.c.b16 %v4393, %v4391
    %v5526 = vpack.c.b16 %v4394, %v4392
    %v5527 = vpack.c.b16 %v4397, %v4395
    %v5528 = vpack.c.b16 %v4398, %v4396
    %v5529 = vpack.c.b16 %v4401, %v4399
    %v5530 = vpack.c.b16 %v4402, %v4400
    %v5531 = vpack.c.b16 %v4405, %v4403
    %v5532 = vpack.c.b16 %v4406, %v4404
    %v5533 = vpack.c.b16 %v4409, %v4407
    %v5534 = vpack.c.b16 %v4410, %v4408
    %v5535 = vpack.c.b16 %v4413, %v4411
    %v5536 = vpack.c.b16 %v4414, %v4412
    %v5537 = vpack.c.b16 %v4417, %v4415
    %v5538 = vpack.c.b16 %v4418, %v4416
    %v5539 = vpack.c.b16 %v4421, %v4419
    %v5540 = vpack.c.b16 %v4422, %v4420
    %v5541 = vpack.c.b16 %v4425, %v4423
    %v5542 = vpack.c.b16 %v4426, %v4424
    %v5543 = vpack.c.b16 %v4429, %v4427
    %v5544 = vpack.c.b16 %v4430, %v4428
    %v5545 = vpack.c.b16 %v4433, %v4431
    %v5546 = vpack.c.b16 %v4434, %v4432
    %v5547 = vpack.c.b16 %v4437, %v4435
    %v5548 = vpack.c.b16 %v4438, %v4436
    %v5549 = vpack.c.b16 %v4441, %v4439
    %v5550 = vpack.c.b16 %v4442, %v4440
    %v5551 = vpack.c.b16 %v4445, %v4443
    %v5552 = vpack.c.b16 %v4446, %v4444
    %v5553 = vpack.c.b16 %v4449, %v4447
    %v5554 = vpack.c.b16 %v4450, %v4448
    %v5555 = vpack.c.b16 %v4453, %v4451
    %v5556 = vpack.c.b16 %v4454, %v4452
    %v5557 = vpack.c.b16 %v4457, %v4455
    %v5558 = vpack.c.b16 %v4458, %v4456
    %v5559 = vpack.c.b16 %v4461, %v4459
    %v5560 = vpack.c.b16 %v4462, %v4460
    %v5561 = vpack.c.b16 %v4465, %v4463
    %v5562 = vpack.c.b16 %v4466, %v4464
    %v5563 = vpack.c.b16 %v4469, %v4467
    %v5564 = vpack.c.b16 %v4470, %v4468
    %v5565 = vpack.c.b16 %v4473, %v4471
    %v5566 = vpack.c.b16 %v4474, %v4472
    %v5567 = vpack.c.b16 %v4477, %v4475
    %v5568 = vpack.c.b16 %v4478, %v4476
    %v5569 = vpack.c.b16 %v4481, %v4479
    %v5570 = vpack.c.b16 %v4482, %v4480
    %v5571 = vpack.c.b16 %v4485, %v4483
    %v5572 = vpack.c.b16 %v4486, %v4484
    %v5573 = vpack.c.b16 %v4489, %v4487
    %v5574 = vpack.c.b16 %v4490, %v4488
    %v5575 = vpack.c.b16 %v4493, %v4491
    %v5576 = vpack.c.b16 %v4494, %v4492
    %v5577 = vpack.c.b16 %v4497, %v4495
    %v5578 = vpack.c.b16 %v4498, %v4496
    %v5579 = vpack.c.b16 %v4501, %v4499
    %v5580 = vpack.c.b16 %v4502, %v4500
    %v5581 = vpack.c.b16 %v4505, %v4503
    %v5582 = vpack.c.b16 %v4506, %v4504
    %v5583 = vpack.c.b16 %v4509, %v4507
    %v5584 = vpack.c.b16 %v4510, %v4508
    %v5585 = vpack.c.b16 %v4513, %v4511
    %v5586 = vpack.c.b16 %v4514, %v4512
    %v5587 = vpack.c.b16 %v4517, %v4515
    %v5588 = vpack.c.b16 %v4518, %v4516
    %v5589 = vpack.c.b16 %v4521, %v4519
    %v5590 = vpack.c.b16 %v4522, %v4520
    %v5591 = vpack.c.b16 %v4525, %v4523
    %v5592 = vpack.c.b16 %v4526, %v4524
    %v5593 = vpack.c.b16 %v4529, %v4527
    %v5594 = vpack.c.b16 %v4530, %v4528
    %v5595 = vpack.c.b16 %v4533, %v4531
    %v5596 = vpack.c.b16 %v4534, %v4532
    %v5597 = vpack.c.b16 %v4537, %v4535
    %v5598 = vpack.c.b16 %v4538, %v4536
    %v5599 = vpack.c.b16 %v4541, %v4539
    %v5600 = vpack.c.b16 %v4542, %v4540
    %v5601 = vpack.c.b16 %v4545, %v4543
    %v5602 = vpack.c.b16 %v4546, %v4544
    %v5603 = vpack.c.b16 %v4549, %v4547
    %v5604 = vpack.c.b16 %v4550, %v4548
    %v5605 = vpack.c.b16 %v4553, %v4551
    %v5606 = vpack.c.b16 %v4554, %v4552
    %v5607 = vpack.c.b16 %v4557, %v4555
    %v5608 = vpack.c.b16 %v4558, %v4556
    %v5609 = vpack.c.b16 %v4561, %v4559
    %v5610 = vpack.c.b16 %v4562, %v4560
    %v5611 = vpack.c.b16 %v4565, %v4563
    %v5612 = vpack.c.b16 %v4566, %v4564
    %v5613 = vpack.c.b16 %v4569, %v4567
    %v5614 = vpack.c.b16 %v4570, %v4568
    %v5615 = vpack.c.b16 %v4573, %v4571
    %v5616 = vpack.c.b16 %v4574, %v4572
    %v5617 = vpack.c.b16 %v4577, %v4575
    %v5618 = vpack.c.b16 %v4578, %v4576
    %v5619 = vpack.c.b16 %v4581, %v4579
    %v5620 = vpack.c.b16 %v4582, %v4580
    %v5621 = vpack.c.b16 %v4585, %v4583
    %v5622 = vpack.c.b16 %v4586, %v4584
    %v5623 = vpack.c.b16 %v4589, %v4587
    %v5624 = vpack.c.b16 %v4590, %v4588
    %v5625 = vpack.c.b16 %v4593, %v4591
    %v5626 = vpack.c.b16 %v4594, %v4592
    %v5627 = vpack.c.b16 %v4597, %v4595
    %v5628 = vpack.c.b16 %v4598, %v4596
    %v5629 = vpack.c.b16 %v4601, %v4599
    %v5630 = vpack.c.b16 %v4602, %v4600
    %v5631 = vpack.c.b16 %v4605, %v4603
    %v5632 = vpack.c.b16 %v4606, %v4604
    %v5633 = vpack.c.b16 %v4609, %v4607
    %v5634 = vpack.c.b16 %v4610, %v4608
    %6659 = vmatprep.subr.bf16.mxu0 %v4612
    %6660 = vmatpush1.bf16.msra.mxu0 %v4611
    %6661 = vmatprep.subr.bf16.mxu0 %v4614
    %6662 = vmatpush1.bf16.msra.mxu0 %v4613
    %6663 = vmatprep.subr.bf16.mxu0 %v4616
    %6664 = vmatpush1.bf16.msra.mxu0 %v4615
    %6665 = vmatprep.subr.bf16.mxu0 %v4618
    %6666 = vmatpush1.bf16.msra.mxu0 %v4617
    %6667 = vmatprep.subr.bf16.mxu0 %v4620
    %6668 = vmatpush1.bf16.msra.mxu0 %v4619
    %6669 = vmatprep.subr.bf16.mxu0 %v4622
    %6670 = vmatpush1.bf16.msra.mxu0 %v4621
    %6671 = vmatprep.subr.bf16.mxu0 %v4624
    %6672 = vmatpush1.bf16.msra.mxu0 %v4623
    %6673 = vmatprep.subr.bf16.mxu0 %v4626
    %6674 = vmatpush1.bf16.msra.mxu0 %v4625
    %6675 = vmatprep.subr.bf16.mxu0 %v4628
    %6676 = vmatpush1.bf16.msra.mxu0 %v4627
    %6677 = vmatprep.subr.bf16.mxu0 %v4630
    %6678 = vmatpush1.bf16.msra.mxu0 %v4629
    %6679 = vmatprep.subr.bf16.mxu0 %v4632
    %6680 = vmatpush1.bf16.msra.mxu0 %v4631
    %6681 = vmatprep.subr.bf16.mxu0 %v4634
    %6682 = vmatpush1.bf16.msra.mxu0 %v4633
    %6683 = vmatprep.subr.bf16.mxu0 %v4636
    %6684 = vmatpush1.bf16.msra.mxu0 %v4635
    %6685 = vmatprep.subr.bf16.mxu0 %v4638
    %6686 = vmatpush1.bf16.msra.mxu0 %v4637
    %6687 = vmatprep.subr.bf16.mxu0 %v4640
    %6688 = vmatpush1.bf16.msra.mxu0 %v4639
    %6689 = vmatprep.subr.bf16.mxu0 %v4642
    %6690 = vmatpush1.bf16.msra.mxu0 %v4641
    %6691 = vmatprep.mubr.bf16.mxu0 %v440
    %6692 = vmatmul.mubr.bf16.gmra.mrb[0].mxu0 %v439
    %v6693 = vpop.f32.mrb[0].mxu0
    %v6694 = vadd.f32 %v1532, %v6693
    %v6695 = vpop.f32.mrb[0].mxu0
    %v6696 = vadd.f32 %v1536, %v6695
    %v6697 = vpop.f32.mrb[0].mxu0
    %v6698 = vpop.f32.mrb[0].mxu0
    %6699 = vdwg.mxu0
    %6700 = vmatprep.subr.bf16.mxu0 %v4644
    %6701 = vmatpush1.bf16.msra.mxu0 %v4643
    %6702 = vmatprep.subr.bf16.mxu0 %v4646
    %6703 = vmatpush1.bf16.msra.mxu0 %v4645
    %6704 = vmatprep.subr.bf16.mxu0 %v4648
    %6705 = vmatpush1.bf16.msra.mxu0 %v4647
    %6706 = vmatprep.subr.bf16.mxu0 %v4650
    %6707 = vmatpush1.bf16.msra.mxu0 %v4649
    %6708 = vmatprep.subr.bf16.mxu0 %v4652
    %6709 = vmatpush1.bf16.msra.mxu0 %v4651
    %6710 = vmatprep.subr.bf16.mxu0 %v4654
    %6711 = vmatpush1.bf16.msra.mxu0 %v4653
    %6712 = vmatprep.subr.bf16.mxu0 %v4656
    %6713 = vmatpush1.bf16.msra.mxu0 %v4655
    %6714 = vmatprep.subr.bf16.mxu0 %v4658
    %6715 = vmatpush1.bf16.msra.mxu0 %v4657
    %6716 = vmatprep.subr.bf16.mxu0 %v4660
    %6717 = vmatpush1.bf16.msra.mxu0 %v4659
    %6718 = vmatprep.subr.bf16.mxu0 %v4662
    %6719 = vmatpush1.bf16.msra.mxu0 %v4661
    %6720 = vmatprep.subr.bf16.mxu0 %v4664
    %6721 = vmatpush1.bf16.msra.mxu0 %v4663
    %6722 = vmatprep.subr.bf16.mxu0 %v4666
    %6723 = vmatpush1.bf16.msra.mxu0 %v4665
    %6724 = vmatprep.subr.bf16.mxu0 %v4668
    %6725 = vmatpush1.bf16.msra.mxu0 %v4667
    %6726 = vmatprep.subr.bf16.mxu0 %v4670
    %6727 = vmatpush1.bf16.msra.mxu0 %v4669
    %6728 = vmatprep.subr.bf16.mxu0 %v4672
    %6729 = vmatpush1.bf16.msra.mxu0 %v4671
    %6730 = vmatprep.subr.bf16.mxu0 %v4674
    %6731 = vmatpush1.bf16.msra.mxu0 %v4673
    %6732 = vmatprep.mubr.bf16.mxu0 %v442
    %6733 = vmatmul.mubr.bf16.gmra.mrb[0].mxu0 %v441
    %v6734 = vpop.f32.mrb[0].mxu0
    %v6735 = vadd.f32 %v6694, %v6734
    %v6736 = vpop.f32.mrb[0].mxu0
    %v6737 = vadd.f32 %v6696, %v6736
    %v6738 = vpop.f32.mrb[0].mxu0
    %v6739 = vpop.f32.mrb[0].mxu0
    %6740 = vdwg.mxu0
    %6741 = vmatprep.subr.bf16.mxu0 %v4676
    %6742 = vmatpush1.bf16.msra.mxu0 %v4675
    %6743 = vmatprep.subr.bf16.mxu0 %v4678
    %6744 = vmatpush1.bf16.msra.mxu0 %v4677
    %6745 = vmatprep.subr.bf16.mxu0 %v4680
    %6746 = vmatpush1.bf16.msra.mxu0 %v4679
    %6747 = vmatprep.subr.bf16.mxu0 %v4682
    %6748 = vmatpush1.bf16.msra.mxu0 %v4681
    %6749 = vmatprep.subr.bf16.mxu0 %v4684
    %6750 = vmatpush1.bf16.msra.mxu0 %v4683
    %6751 = vmatprep.subr.bf16.mxu0 %v4686
    %6752 = vmatpush1.bf16.msra.mxu0 %v4685
    %6753 = vmatprep.subr.bf16.mxu0 %v4688
    %6754 = vmatpush1.bf16.msra.mxu0 %v4687
    %6755 = vmatprep.subr.bf16.mxu0 %v4690
    %6756 = vmatpush1.bf16.msra.mxu0 %v4689
    %6757 = vmatprep.subr.bf16.mxu0 %v4692
    %6758 = vmatpush1.bf16.msra.mxu0 %v4691
    %6759 = vmatprep.subr.bf16.mxu0 %v4694
    %6760 = vmatpush1.bf16.msra.mxu0 %v4693
    %6761 = vmatprep.subr.bf16.mxu0 %v4696
    %6762 = vmatpush1.bf16.msra.mxu0 %v4695
    %6763 = vmatprep.subr.bf16.mxu0 %v4698
    %6764 = vmatpush1.bf16.msra.mxu0 %v4697
    %6765 = vmatprep.subr.bf16.mxu0 %v4700
    %6766 = vmatpush1.bf16.msra.mxu0 %v4699
    %6767 = vmatprep.subr.bf16.mxu0 %v4702
    %6768 = vmatpush1.bf16.msra.mxu0 %v4701
    %6769 = vmatprep.subr.bf16.mxu0 %v4704
    %6770 = vmatpush1.bf16.msra.mxu0 %v4703
    %6771 = vmatprep.subr.bf16.mxu0 %v4706
    %6772 = vmatpush1.bf16.msra.mxu0 %v4705
    %6773 = vmatprep.mubr.bf16.mxu0 %v444
    %6774 = vmatmul.mubr.bf16.gmra.mrb[0].mxu0 %v443
    %v6775 = vpop.f32.mrb[0].mxu0
    %v6776 = vadd.f32 %v6735, %v6775
    %v6777 = vpop.f32.mrb[0].mxu0
    %v6778 = vadd.f32 %v6737, %v6777
    %v6779 = vpop.f32.mrb[0].mxu0
    %v6780 = vpop.f32.mrb[0].mxu0
    %6781 = vdwg.mxu0
    %6782 = vmatprep.subr.bf16.mxu0 %v4708
    %6783 = vmatpush1.bf16.msra.mxu0 %v4707
    %6784 = vmatprep.subr.bf16.mxu0 %v4710
    %6785 = vmatpush1.bf16.msra.mxu0 %v4709
    %6786 = vmatprep.subr.bf16.mxu0 %v4712
    %6787 = vmatpush1.bf16.msra.mxu0 %v4711
    %6788 = vmatprep.subr.bf16.mxu0 %v4714
    %6789 = vmatpush1.bf16.msra.mxu0 %v4713
    %6790 = vmatprep.subr.bf16.mxu0 %v4716
    %6791 = vmatpush1.bf16.msra.mxu0 %v4715
    %6792 = vmatprep.subr.bf16.mxu0 %v4718
    %6793 = vmatpush1.bf16.msra.mxu0 %v4717
    %6794 = vmatprep.subr.bf16.mxu0 %v4720
    %6795 = vmatpush1.bf16.msra.mxu0 %v4719
    %6796 = vmatprep.subr.bf16.mxu0 %v4722
    %6797 = vmatpush1.bf16.msra.mxu0 %v4721
    %6798 = vmatprep.subr.bf16.mxu0 %v4724
    %6799 = vmatpush1.bf16.msra.mxu0 %v4723
    %6800 = vmatprep.subr.bf16.mxu0 %v4726
    %6801 = vmatpush1.bf16.msra.mxu0 %v4725
    %6802 = vmatprep.subr.bf16.mxu0 %v4728
    %6803 = vmatpush1.bf16.msra.mxu0 %v4727
    %6804 = vmatprep.subr.bf16.mxu0 %v4730
    %6805 = vmatpush1.bf16.msra.mxu0 %v4729
    %6806 = vmatprep.subr.bf16.mxu0 %v4732
    %6807 = vmatpush1.bf16.msra.mxu0 %v4731
    %6808 = vmatprep.subr.bf16.mxu0 %v4734
    %6809 = vmatpush1.bf16.msra.mxu0 %v4733
    %6810 = vmatprep.subr.bf16.mxu0 %v4736
    %6811 = vmatpush1.bf16.msra.mxu0 %v4735
    %6812 = vmatprep.subr.bf16.mxu0 %v4738
    %6813 = vmatpush1.bf16.msra.mxu0 %v4737
    %6814 = vmatprep.mubr.bf16.mxu0 %v446
    %6815 = vmatmul.mubr.bf16.gmra.mrb[0].mxu0 %v445
    %v6816 = vpop.f32.mrb[0].mxu0
    %v6817 = vadd.f32 %v6776, %v6816
    %v6818 = vpop.f32.mrb[0].mxu0
    %v6819 = vadd.f32 %v6778, %v6818
    %v6820 = vpop.f32.mrb[0].mxu0
    %v6821 = vpop.f32.mrb[0].mxu0
    %6822 = vdwg.mxu0
    %6823 = vmatprep.subr.bf16.mxu0 %v4740
    %6824 = vmatpush1.bf16.msra.mxu0 %v4739
    %6825 = vmatprep.subr.bf16.mxu0 %v4742
    %6826 = vmatpush1.bf16.msra.mxu0 %v4741
    %6827 = vmatprep.subr.bf16.mxu0 %v4744
    %6828 = vmatpush1.bf16.msra.mxu0 %v4743
    %6829 = vmatprep.subr.bf16.mxu0 %v4746
    %6830 = vmatpush1.bf16.msra.mxu0 %v4745
    %6831 = vmatprep.subr.bf16.mxu0 %v4748
    %6832 = vmatpush1.bf16.msra.mxu0 %v4747
    %6833 = vmatprep.subr.bf16.mxu0 %v4750
    %6834 = vmatpush1.bf16.msra.mxu0 %v4749
    %6835 = vmatprep.subr.bf16.mxu0 %v4752
    %6836 = vmatpush1.bf16.msra.mxu0 %v4751
    %6837 = vmatprep.subr.bf16.mxu0 %v4754
    %6838 = vmatpush1.bf16.msra.mxu0 %v4753
    %6839 = vmatprep.subr.bf16.mxu0 %v4756
    %6840 = vmatpush1.bf16.msra.mxu0 %v4755
    %6841 = vmatprep.subr.bf16.mxu0 %v4758
    %6842 = vmatpush1.bf16.msra.mxu0 %v4757
    %6843 = vmatprep.subr.bf16.mxu0 %v4760
    %6844 = vmatpush1.bf16.msra.mxu0 %v4759
    %6845 = vmatprep.subr.bf16.mxu0 %v4762
    %6846 = vmatpush1.bf16.msra.mxu0 %v4761
    %6847 = vmatprep.subr.bf16.mxu0 %v4764
    %6848 = vmatpush1.bf16.msra.mxu0 %v4763
    %6849 = vmatprep.subr.bf16.mxu0 %v4766
    %6850 = vmatpush1.bf16.msra.mxu0 %v4765
    %6851 = vmatprep.subr.bf16.mxu0 %v4768
    %6852 = vmatpush1.bf16.msra.mxu0 %v4767
    %6853 = vmatprep.subr.bf16.mxu0 %v4770
    %6854 = vmatpush1.bf16.msra.mxu0 %v4769
    %6855 = vmatprep.mubr.bf16.mxu0 %v448
    %6856 = vmatmul.mubr.bf16.gmra.mrb[0].mxu0 %v447
    %v6857 = vpop.f32.mrb[0].mxu0
    %v6858 = vadd.f32 %v6817, %v6857
    %v6859 = vpop.f32.mrb[0].mxu0
    %v6860 = vadd.f32 %v6819, %v6859
    %v6861 = vpop.f32.mrb[0].mxu0
    %v6862 = vpop.f32.mrb[0].mxu0
    %6863 = vdwg.mxu0
    %6864 = vmatprep.subr.bf16.mxu0 %v4772
    %6865 = vmatpush1.bf16.msra.mxu0 %v4771
    %6866 = vmatprep.subr.bf16.mxu0 %v4774
    %6867 = vmatpush1.bf16.msra.mxu0 %v4773
    %6868 = vmatprep.subr.bf16.mxu0 %v4776
    %6869 = vmatpush1.bf16.msra.mxu0 %v4775
    %6870 = vmatprep.subr.bf16.mxu0 %v4778
    %6871 = vmatpush1.bf16.msra.mxu0 %v4777
    %6872 = vmatprep.subr.bf16.mxu0 %v4780
    %6873 = vmatpush1.bf16.msra.mxu0 %v4779
    %6874 = vmatprep.subr.bf16.mxu0 %v4782
    %6875 = vmatpush1.bf16.msra.mxu0 %v4781
    %6876 = vmatprep.subr.bf16.mxu0 %v4784
    %6877 = vmatpush1.bf16.msra.mxu0 %v4783
    %6878 = vmatprep.subr.bf16.mxu0 %v4786
    %6879 = vmatpush1.bf16.msra.mxu0 %v4785
    %6880 = vmatprep.subr.bf16.mxu0 %v4788
    %6881 = vmatpush1.bf16.msra.mxu0 %v4787
    %6882 = vmatprep.subr.bf16.mxu0 %v4790
    %6883 = vmatpush1.bf16.msra.mxu0 %v4789
    %6884 = vmatprep.subr.bf16.mxu0 %v4792
    %6885 = vmatpush1.bf16.msra.mxu0 %v4791
    %6886 = vmatprep.subr.bf16.mxu0 %v4794
    %6887 = vmatpush1.bf16.msra.mxu0 %v4793
    %6888 = vmatprep.subr.bf16.mxu0 %v4796
    %6889 = vmatpush1.bf16.msra.mxu0 %v4795
    %6890 = vmatprep.subr.bf16.mxu0 %v4798
    %6891 = vmatpush1.bf16.msra.mxu0 %v4797
    %6892 = vmatprep.subr.bf16.mxu0 %v4800
    %6893 = vmatpush1.bf16.msra.mxu0 %v4799
    %6894 = vmatprep.subr.bf16.mxu0 %v4802
    %6895 = vmatpush1.bf16.msra.mxu0 %v4801
    %6896 = vmatprep.mubr.bf16.mxu0 %v450
    %6897 = vmatmul.mubr.bf16.gmra.mrb[0].mxu0 %v449
    %v6898 = vpop.f32.mrb[0].mxu0
    %v6899 = vadd.f32 %v6858, %v6898
    %v6900 = vpop.f32.mrb[0].mxu0
    %v6901 = vadd.f32 %v6860, %v6900
    %v6902 = vpop.f32.mrb[0].mxu0
    %v6903 = vpop.f32.mrb[0].mxu0
    %6904 = vdwg.mxu0
    %6905 = vmatprep.subr.bf16.mxu0 %v4804
    %6906 = vmatpush1.bf16.msra.mxu0 %v4803
    %6907 = vmatprep.subr.bf16.mxu0 %v4806
    %6908 = vmatpush1.bf16.msra.mxu0 %v4805
    %6909 = vmatprep.subr.bf16.mxu0 %v4808
    %6910 = vmatpush1.bf16.msra.mxu0 %v4807
    %6911 = vmatprep.subr.bf16.mxu0 %v4810
    %6912 = vmatpush1.bf16.msra.mxu0 %v4809
    %6913 = vmatprep.subr.bf16.mxu0 %v4812
    %6914 = vmatpush1.bf16.msra.mxu0 %v4811
    %6915 = vmatprep.subr.bf16.mxu0 %v4814
    %6916 = vmatpush1.bf16.msra.mxu0 %v4813
    %6917 = vmatprep.subr.bf16.mxu0 %v4816
    %6918 = vmatpush1.bf16.msra.mxu0 %v4815
    %6919 = vmatprep.subr.bf16.mxu0 %v4818
    %6920 = vmatpush1.bf16.msra.mxu0 %v4817
    %6921 = vmatprep.subr.bf16.mxu0 %v4820
    %6922 = vmatpush1.bf16.msra.mxu0 %v4819
    %6923 = vmatprep.subr.bf16.mxu0 %v4822
    %6924 = vmatpush1.bf16.msra.mxu0 %v4821
    %6925 = vmatprep.subr.bf16.mxu0 %v4824
    %6926 = vmatpush1.bf16.msra.mxu0 %v4823
    %6927 = vmatprep.subr.bf16.mxu0 %v4826
    %6928 = vmatpush1.bf16.msra.mxu0 %v4825
    %6929 = vmatprep.subr.bf16.mxu0 %v4828
    %6930 = vmatpush1.bf16.msra.mxu0 %v4827
    %6931 = vmatprep.subr.bf16.mxu0 %v4830
    %6932 = vmatpush1.bf16.msra.mxu0 %v4829
    %6933 = vmatprep.subr.bf16.mxu0 %v4832
    %6934 = vmatpush1.bf16.msra.mxu0 %v4831
    %6935 = vmatprep.subr.bf16.mxu0 %v4834
    %6936 = vmatpush1.bf16.msra.mxu0 %v4833
    %6937 = vmatprep.mubr.bf16.mxu0 %v452
    %6938 = vmatmul.mubr.bf16.gmra.mrb[0].mxu0 %v451
    %v6939 = vpop.f32.mrb[0].mxu0
    %v6940 = vadd.f32 %v6899, %v6939
    %v6941 = vpop.f32.mrb[0].mxu0
    %v6942 = vadd.f32 %v6901, %v6941
    %v6943 = vpop.f32.mrb[0].mxu0
    %v6944 = vpop.f32.mrb[0].mxu0
    %6945 = vdwg.mxu0
    %6946 = vmatprep.subr.bf16.mxu0 %v4836
    %6947 = vmatpush1.bf16.msra.mxu0 %v4835
    %6948 = vmatprep.subr.bf16.mxu0 %v4838
    %6949 = vmatpush1.bf16.msra.mxu0 %v4837
    %6950 = vmatprep.subr.bf16.mxu0 %v4840
    %6951 = vmatpush1.bf16.msra.mxu0 %v4839
    %6952 = vmatprep.subr.bf16.mxu0 %v4842
    %6953 = vmatpush1.bf16.msra.mxu0 %v4841
    %6954 = vmatprep.subr.bf16.mxu0 %v4844
    %6955 = vmatpush1.bf16.msra.mxu0 %v4843
    %6956 = vmatprep.subr.bf16.mxu0 %v4846
    %6957 = vmatpush1.bf16.msra.mxu0 %v4845
    %6958 = vmatprep.subr.bf16.mxu0 %v4848
    %6959 = vmatpush1.bf16.msra.mxu0 %v4847
    %6960 = vmatprep.subr.bf16.mxu0 %v4850
    %6961 = vmatpush1.bf16.msra.mxu0 %v4849
    %6962 = vmatprep.subr.bf16.mxu0 %v4852
    %6963 = vmatpush1.bf16.msra.mxu0 %v4851
    %6964 = vmatprep.subr.bf16.mxu0 %v4854
    %6965 = vmatpush1.bf16.msra.mxu0 %v4853
    %6966 = vmatprep.subr.bf16.mxu0 %v4856
    %6967 = vmatpush1.bf16.msra.mxu0 %v4855
    %6968 = vmatprep.subr.bf16.mxu0 %v4858
    %6969 = vmatpush1.bf16.msra.mxu0 %v4857
    %6970 = vmatprep.subr.bf16.mxu0 %v4860
    %6971 = vmatpush1.bf16.msra.mxu0 %v4859
    %6972 = vmatprep.subr.bf16.mxu0 %v4862
    %6973 = vmatpush1.bf16.msra.mxu0 %v4861
    %6974 = vmatprep.subr.bf16.mxu0 %v4864
    %6975 = vmatpush1.bf16.msra.mxu0 %v4863
    %6976 = vmatprep.subr.bf16.mxu0 %v4866
    %6977 = vmatpush1.bf16.msra.mxu0 %v4865
    %6978 = vmatprep.mubr.bf16.mxu0 %v454
    %6979 = vmatmul.mubr.bf16.gmra.mrb[0].mxu0 %v453
    %v6980 = vpop.f32.mrb[0].mxu0
    %v6981 = vadd.f32 %v6940, %v6980
    %v6982 = vpop.f32.mrb[0].mxu0
    %v6983 = vadd.f32 %v6942, %v6982
    %v6984 = vpop.f32.mrb[0].mxu0
    %v6985 = vpop.f32.mrb[0].mxu0
    %6986 = vdwg.mxu0
    %6987 = vmatprep.subr.bf16.mxu0 %v4868
    %6988 = vmatpush1.bf16.msra.mxu0 %v4867
    %6989 = vmatprep.subr.bf16.mxu0 %v4870
    %6990 = vmatpush1.bf16.msra.mxu0 %v4869
    %6991 = vmatprep.subr.bf16.mxu0 %v4872
    %6992 = vmatpush1.bf16.msra.mxu0 %v4871
    %6993 = vmatprep.subr.bf16.mxu0 %v4874
    %6994 = vmatpush1.bf16.msra.mxu0 %v4873
    %6995 = vmatprep.subr.bf16.mxu0 %v4876
    %6996 = vmatpush1.bf16.msra.mxu0 %v4875
    %6997 = vmatprep.subr.bf16.mxu0 %v4878
    %6998 = vmatpush1.bf16.msra.mxu0 %v4877
    %6999 = vmatprep.subr.bf16.mxu0 %v4880
    %7000 = vmatpush1.bf16.msra.mxu0 %v4879
    %7001 = vmatprep.subr.bf16.mxu0 %v4882
    %7002 = vmatpush1.bf16.msra.mxu0 %v4881
    %7003 = vmatprep.subr.bf16.mxu0 %v4884
    %7004 = vmatpush1.bf16.msra.mxu0 %v4883
    %7005 = vmatprep.subr.bf16.mxu0 %v4886
    %7006 = vmatpush1.bf16.msra.mxu0 %v4885
    %7007 = vmatprep.subr.bf16.mxu0 %v4888
    %7008 = vmatpush1.bf16.msra.mxu0 %v4887
    %7009 = vmatprep.subr.bf16.mxu0 %v4890
    %7010 = vmatpush1.bf16.msra.mxu0 %v4889
    %7011 = vmatprep.subr.bf16.mxu0 %v4892
    %7012 = vmatpush1.bf16.msra.mxu0 %v4891
    %7013 = vmatprep.subr.bf16.mxu0 %v4894
    %7014 = vmatpush1.bf16.msra.mxu0 %v4893
    %7015 = vmatprep.subr.bf16.mxu0 %v4896
    %7016 = vmatpush1.bf16.msra.mxu0 %v4895
    %7017 = vmatprep.subr.bf16.mxu0 %v4898
    %7018 = vmatpush1.bf16.msra.mxu0 %v4897
    %7019 = vmatprep.mubr.bf16.mxu0 %v456
    %7020 = vmatmul.mubr.bf16.gmra.mrb[0].mxu0 %v455
    %v7021 = vpop.f32.mrb[0].mxu0
    %v7022 = vadd.f32 %v6981, %v7021
    %v7023 = vpop.f32.mrb[0].mxu0
    %v7024 = vadd.f32 %v6983, %v7023
    %v7025 = vpop.f32.mrb[0].mxu0
    %v7026 = vpop.f32.mrb[0].mxu0
    %7027 = vdwg.mxu0
    %7028 = vmatprep.subr.bf16.mxu0 %v4900
    %7029 = vmatpush1.bf16.msra.mxu0 %v4899
    %7030 = vmatprep.subr.bf16.mxu0 %v4902
    %7031 = vmatpush1.bf16.msra.mxu0 %v4901
    %7032 = vmatprep.subr.bf16.mxu0 %v4904
    %7033 = vmatpush1.bf16.msra.mxu0 %v4903
    %7034 = vmatprep.subr.bf16.mxu0 %v4906
    %7035 = vmatpush1.bf16.msra.mxu0 %v4905
    %7036 = vmatprep.subr.bf16.mxu0 %v4908
    %7037 = vmatpush1.bf16.msra.mxu0 %v4907
    %7038 = vmatprep.subr.bf16.mxu0 %v4910
    %7039 = vmatpush1.bf16.msra.mxu0 %v4909
    %7040 = vmatprep.subr.bf16.mxu0 %v4912
    %7041 = vmatpush1.bf16.msra.mxu0 %v4911
    %7042 = vmatprep.subr.bf16.mxu0 %v4914
    %7043 = vmatpush1.bf16.msra.mxu0 %v4913
    %7044 = vmatprep.subr.bf16.mxu0 %v4916
    %7045 = vmatpush1.bf16.msra.mxu0 %v4915
    %7046 = vmatprep.subr.bf16.mxu0 %v4918
    %7047 = vmatpush1.bf16.msra.mxu0 %v4917
    %7048 = vmatprep.subr.bf16.mxu0 %v4920
    %7049 = vmatpush1.bf16.msra.mxu0 %v4919
    %7050 = vmatprep.subr.bf16.mxu0 %v4922
    %7051 = vmatpush1.bf16.msra.mxu0 %v4921
    %7052 = vmatprep.subr.bf16.mxu0 %v4924
    %7053 = vmatpush1.bf16.msra.mxu0 %v4923
    %7054 = vmatprep.subr.bf16.mxu0 %v4926
    %7055 = vmatpush1.bf16.msra.mxu0 %v4925
    %7056 = vmatprep.subr.bf16.mxu0 %v4928
    %7057 = vmatpush1.bf16.msra.mxu0 %v4927
    %7058 = vmatprep.subr.bf16.mxu0 %v4930
    %7059 = vmatpush1.bf16.msra.mxu0 %v4929
    %7060 = vmatprep.mubr.bf16.mxu0 %v458
    %7061 = vmatmul.mubr.bf16.gmra.mrb[0].mxu0 %v457
    %v7062 = vpop.f32.mrb[0].mxu0
    %v7063 = vadd.f32 %v7022, %v7062
    %v7064 = vpop.f32.mrb[0].mxu0
    %v7065 = vadd.f32 %v7024, %v7064
    %v7066 = vpop.f32.mrb[0].mxu0
    %v7067 = vpop.f32.mrb[0].mxu0
    %7068 = vdwg.mxu0
    %7069 = vmatprep.subr.bf16.mxu0 %v4932
    %7070 = vmatpush1.bf16.msra.mxu0 %v4931
    %7071 = vmatprep.subr.bf16.mxu0 %v4934
    %7072 = vmatpush1.bf16.msra.mxu0 %v4933
    %7073 = vmatprep.subr.bf16.mxu0 %v4936
    %7074 = vmatpush1.bf16.msra.mxu0 %v4935
    %7075 = vmatprep.subr.bf16.mxu0 %v4938
    %7076 = vmatpush1.bf16.msra.mxu0 %v4937
    %7077 = vmatprep.subr.bf16.mxu0 %v4940
    %7078 = vmatpush1.bf16.msra.mxu0 %v4939
    %7079 = vmatprep.subr.bf16.mxu0 %v4942
    %7080 = vmatpush1.bf16.msra.mxu0 %v4941
    %7081 = vmatprep.subr.bf16.mxu0 %v4944
    %7082 = vmatpush1.bf16.msra.mxu0 %v4943
    %7083 = vmatprep.subr.bf16.mxu0 %v4946
    %7084 = vmatpush1.bf16.msra.mxu0 %v4945
    %7085 = vmatprep.subr.bf16.mxu0 %v4948
    %7086 = vmatpush1.bf16.msra.mxu0 %v4947
    %7087 = vmatprep.subr.bf16.mxu0 %v4950
    %7088 = vmatpush1.bf16.msra.mxu0 %v4949
    %7089 = vmatprep.subr.bf16.mxu0 %v4952
    %7090 = vmatpush1.bf16.msra.mxu0 %v4951
    %7091 = vmatprep.subr.bf16.mxu0 %v4954
    %7092 = vmatpush1.bf16.msra.mxu0 %v4953
    %7093 = vmatprep.subr.bf16.mxu0 %v4956
    %7094 = vmatpush1.bf16.msra.mxu0 %v4955
    %7095 = vmatprep.subr.bf16.mxu0 %v4958
    %7096 = vmatpush1.bf16.msra.mxu0 %v4957
    %7097 = vmatprep.subr.bf16.mxu0 %v4960
    %7098 = vmatpush1.bf16.msra.mxu0 %v4959
    %7099 = vmatprep.subr.bf16.mxu0 %v4962
    %7100 = vmatpush1.bf16.msra.mxu0 %v4961
    %7101 = vmatprep.mubr.bf16.mxu0 %v460
    %7102 = vmatmul.mubr.bf16.gmra.mrb[0].mxu0 %v459
    %v7103 = vpop.f32.mrb[0].mxu0
    %v7104 = vadd.f32 %v7063, %v7103
    %v7105 = vpop.f32.mrb[0].mxu0
    %v7106 = vadd.f32 %v7065, %v7105
    %v7107 = vpop.f32.mrb[0].mxu0
    %v7108 = vpop.f32.mrb[0].mxu0
    %7109 = vdwg.mxu0
    %7110 = vmatprep.subr.bf16.mxu0 %v4964
    %7111 = vmatpush1.bf16.msra.mxu0 %v4963
    %7112 = vmatprep.subr.bf16.mxu0 %v4966
    %7113 = vmatpush1.bf16.msra.mxu0 %v4965
    %7114 = vmatprep.subr.bf16.mxu0 %v4968
    %7115 = vmatpush1.bf16.msra.mxu0 %v4967
    %7116 = vmatprep.subr.bf16.mxu0 %v4970
    %7117 = vmatpush1.bf16.msra.mxu0 %v4969
    %7118 = vmatprep.subr.bf16.mxu0 %v4972
    %7119 = vmatpush1.bf16.msra.mxu0 %v4971
    %7120 = vmatprep.subr.bf16.mxu0 %v4974
    %7121 = vmatpush1.bf16.msra.mxu0 %v4973
    %7122 = vmatprep.subr.bf16.mxu0 %v4976
    %7123 = vmatpush1.bf16.msra.mxu0 %v4975
    %7124 = vmatprep.subr.bf16.mxu0 %v4978
    %7125 = vmatpush1.bf16.msra.mxu0 %v4977
    %7126 = vmatprep.subr.bf16.mxu0 %v4980
    %7127 = vmatpush1.bf16.msra.mxu0 %v4979
    %7128 = vmatprep.subr.bf16.mxu0 %v4982
    %7129 = vmatpush1.bf16.msra.mxu0 %v4981
    %7130 = vmatprep.subr.bf16.mxu0 %v4984
    %7131 = vmatpush1.bf16.msra.mxu0 %v4983
    %7132 = vmatprep.subr.bf16.mxu0 %v4986
    %7133 = vmatpush1.bf16.msra.mxu0 %v4985
    %7134 = vmatprep.subr.bf16.mxu0 %v4988
    %7135 = vmatpush1.bf16.msra.mxu0 %v4987
    %7136 = vmatprep.subr.bf16.mxu0 %v4990
    %7137 = vmatpush1.bf16.msra.mxu0 %v4989
    %7138 = vmatprep.subr.bf16.mxu0 %v4992
    %7139 = vmatpush1.bf16.msra.mxu0 %v4991
    %7140 = vmatprep.subr.bf16.mxu0 %v4994
    %7141 = vmatpush1.bf16.msra.mxu0 %v4993
    %7142 = vmatprep.mubr.bf16.mxu0 %v462
    %7143 = vmatmul.mubr.bf16.gmra.mrb[0].mxu0 %v461
    %v7144 = vpop.f32.mrb[0].mxu0
    %v7145 = vadd.f32 %v7104, %v7144
    %v7146 = vpop.f32.mrb[0].mxu0
    %v7147 = vadd.f32 %v7106, %v7146
    %v7148 = vpop.f32.mrb[0].mxu0
    %v7149 = vpop.f32.mrb[0].mxu0
    %7150 = vdwg.mxu0
    %7151 = vmatprep.subr.bf16.mxu0 %v4996
    %7152 = vmatpush1.bf16.msra.mxu0 %v4995
    %7153 = vmatprep.subr.bf16.mxu0 %v4998
    %7154 = vmatpush1.bf16.msra.mxu0 %v4997
    %7155 = vmatprep.subr.bf16.mxu0 %v5000
    %7156 = vmatpush1.bf16.msra.mxu0 %v4999
    %7157 = vmatprep.subr.bf16.mxu0 %v5002
    %7158 = vmatpush1.bf16.msra.mxu0 %v5001
    %7159 = vmatprep.subr.bf16.mxu0 %v5004
    %7160 = vmatpush1.bf16.msra.mxu0 %v5003
    %7161 = vmatprep.subr.bf16.mxu0 %v5006
    %7162 = vmatpush1.bf16.msra.mxu0 %v5005
    %7163 = vmatprep.subr.bf16.mxu0 %v5008
    %7164 = vmatpush1.bf16.msra.mxu0 %v5007
    %7165 = vmatprep.subr.bf16.mxu0 %v5010
    %7166 = vmatpush1.bf16.msra.mxu0 %v5009
    %7167 = vmatprep.subr.bf16.mxu0 %v5012
    %7168 = vmatpush1.bf16.msra.mxu0 %v5011
    %7169 = vmatprep.subr.bf16.mxu0 %v5014
    %7170 = vmatpush1.bf16.msra.mxu0 %v5013
    %7171 = vmatprep.subr.bf16.mxu0 %v5016
    %7172 = vmatpush1.bf16.msra.mxu0 %v5015
    %7173 = vmatprep.subr.bf16.mxu0 %v5018
    %7174 = vmatpush1.bf16.msra.mxu0 %v5017
    %7175 = vmatprep.subr.bf16.mxu0 %v5020
    %7176 = vmatpush1.bf16.msra.mxu0 %v5019
    %7177 = vmatprep.subr.bf16.mxu0 %v5022
    %7178 = vmatpush1.bf16.msra.mxu0 %v5021
    %7179 = vmatprep.subr.bf16.mxu0 %v5024
    %7180 = vmatpush1.bf16.msra.mxu0 %v5023
    %7181 = vmatprep.subr.bf16.mxu0 %v5026
    %7182 = vmatpush1.bf16.msra.mxu0 %v5025
    %7183 = vmatprep.mubr.bf16.mxu0 %v464
    %7184 = vmatmul.mubr.bf16.gmra.mrb[0].mxu0 %v463
    %v7185 = vpop.f32.mrb[0].mxu0
    %v7186 = vadd.f32 %v7145, %v7185
    %v7187 = vpop.f32.mrb[0].mxu0
    %v7188 = vadd.f32 %v7147, %v7187
    %v7189 = vpop.f32.mrb[0].mxu0
    %v7190 = vpop.f32.mrb[0].mxu0
    %7191 = vdwg.mxu0
    %7192 = vmatprep.subr.bf16.mxu0 %v5028
    %7193 = vmatpush1.bf16.msra.mxu0 %v5027
    %7194 = vmatprep.subr.bf16.mxu0 %v5030
    %7195 = vmatpush1.bf16.msra.mxu0 %v5029
    %7196 = vmatprep.subr.bf16.mxu0 %v5032
    %7197 = vmatpush1.bf16.msra.mxu0 %v5031
    %7198 = vmatprep.subr.bf16.mxu0 %v5034
    %7199 = vmatpush1.bf16.msra.mxu0 %v5033
    %7200 = vmatprep.subr.bf16.mxu0 %v5036
    %7201 = vmatpush1.bf16.msra.mxu0 %v5035
    %7202 = vmatprep.subr.bf16.mxu0 %v5038
    %7203 = vmatpush1.bf16.msra.mxu0 %v5037
    %7204 = vmatprep.subr.bf16.mxu0 %v5040
    %7205 = vmatpush1.bf16.msra.mxu0 %v5039
    %7206 = vmatprep.subr.bf16.mxu0 %v5042
    %7207 = vmatpush1.bf16.msra.mxu0 %v5041
    %7208 = vmatprep.subr.bf16.mxu0 %v5044
    %7209 = vmatpush1.bf16.msra.mxu0 %v5043
    %7210 = vmatprep.subr.bf16.mxu0 %v5046
    %7211 = vmatpush1.bf16.msra.mxu0 %v5045
    %7212 = vmatprep.subr.bf16.mxu0 %v5048
    %7213 = vmatpush1.bf16.msra.mxu0 %v5047
    %7214 = vmatprep.subr.bf16.mxu0 %v5050
    %7215 = vmatpush1.bf16.msra.mxu0 %v5049
    %7216 = vmatprep.subr.bf16.mxu0 %v5052
    %7217 = vmatpush1.bf16.msra.mxu0 %v5051
    %7218 = vmatprep.subr.bf16.mxu0 %v5054
    %7219 = vmatpush1.bf16.msra.mxu0 %v5053
    %7220 = vmatprep.subr.bf16.mxu0 %v5056
    %7221 = vmatpush1.bf16.msra.mxu0 %v5055
    %7222 = vmatprep.subr.bf16.mxu0 %v5058
    %7223 = vmatpush1.bf16.msra.mxu0 %v5057
    %7224 = vmatprep.mubr.bf16.mxu0 %v466
    %7225 = vmatmul.mubr.bf16.gmra.mrb[0].mxu0 %v465
    %v7226 = vpop.f32.mrb[0].mxu0
    %v7227 = vadd.f32 %v7186, %v7226
    %v7228 = vpop.f32.mrb[0].mxu0
    %v7229 = vadd.f32 %v7188, %v7228
    %v7230 = vpop.f32.mrb[0].mxu0
    %v7231 = vpop.f32.mrb[0].mxu0
    %7232 = vdwg.mxu0
    %7233 = vmatprep.subr.bf16.mxu0 %v5060
    %7234 = vmatpush1.bf16.msra.mxu0 %v5059
    %7235 = vmatprep.subr.bf16.mxu0 %v5062
    %7236 = vmatpush1.bf16.msra.mxu0 %v5061
    %7237 = vmatprep.subr.bf16.mxu0 %v5064
    %7238 = vmatpush1.bf16.msra.mxu0 %v5063
    %7239 = vmatprep.subr.bf16.mxu0 %v5066
    %7240 = vmatpush1.bf16.msra.mxu0 %v5065
    %7241 = vmatprep.subr.bf16.mxu0 %v5068
    %7242 = vmatpush1.bf16.msra.mxu0 %v5067
    %7243 = vmatprep.subr.bf16.mxu0 %v5070
    %7244 = vmatpush1.bf16.msra.mxu0 %v5069
    %7245 = vmatprep.subr.bf16.mxu0 %v5072
    %7246 = vmatpush1.bf16.msra.mxu0 %v5071
    %7247 = vmatprep.subr.bf16.mxu0 %v5074
    %7248 = vmatpush1.bf16.msra.mxu0 %v5073
    %7249 = vmatprep.subr.bf16.mxu0 %v5076
    %7250 = vmatpush1.bf16.msra.mxu0 %v5075
    %7251 = vmatprep.subr.bf16.mxu0 %v5078
    %7252 = vmatpush1.bf16.msra.mxu0 %v5077
    %7253 = vmatprep.subr.bf16.mxu0 %v5080
    %7254 = vmatpush1.bf16.msra.mxu0 %v5079
    %7255 = vmatprep.subr.bf16.mxu0 %v5082
    %7256 = vmatpush1.bf16.msra.mxu0 %v5081
    %7257 = vmatprep.subr.bf16.mxu0 %v5084
    %7258 = vmatpush1.bf16.msra.mxu0 %v5083
    %7259 = vmatprep.subr.bf16.mxu0 %v5086
    %7260 = vmatpush1.bf16.msra.mxu0 %v5085
    %7261 = vmatprep.subr.bf16.mxu0 %v5088
    %7262 = vmatpush1.bf16.msra.mxu0 %v5087
    %7263 = vmatprep.subr.bf16.mxu0 %v5090
    %7264 = vmatpush1.bf16.msra.mxu0 %v5089
    %7265 = vmatprep.mubr.bf16.mxu0 %v468
    %7266 = vmatmul.mubr.bf16.gmra.mrb[0].mxu0 %v467
    %v7267 = vpop.f32.mrb[0].mxu0
    %v7268 = vadd.f32 %v7227, %v7267
    %v7269 = vpop.f32.mrb[0].mxu0
    %v7270 = vadd.f32 %v7229, %v7269
    %v7271 = vpop.f32.mrb[0].mxu0
    %v7272 = vpop.f32.mrb[0].mxu0
    %7273 = vdwg.mxu0
    %7274 = vmatprep.subr.bf16.mxu0 %v5092
    %7275 = vmatpush1.bf16.msra.mxu0 %v5091
    %7276 = vmatprep.subr.bf16.mxu0 %v5094
    %7277 = vmatpush1.bf16.msra.mxu0 %v5093
    %7278 = vmatprep.subr.bf16.mxu0 %v5096
    %7279 = vmatpush1.bf16.msra.mxu0 %v5095
    %7280 = vmatprep.subr.bf16.mxu0 %v5098
    %7281 = vmatpush1.bf16.msra.mxu0 %v5097
    %7282 = vmatprep.subr.bf16.mxu0 %v5100
    %7283 = vmatpush1.bf16.msra.mxu0 %v5099
    %7284 = vmatprep.subr.bf16.mxu0 %v5102
    %7285 = vmatpush1.bf16.msra.mxu0 %v5101
    %7286 = vmatprep.subr.bf16.mxu0 %v5104
    %7287 = vmatpush1.bf16.msra.mxu0 %v5103
    %7288 = vmatprep.subr.bf16.mxu0 %v5106
    %7289 = vmatpush1.bf16.msra.mxu0 %v5105
    %7290 = vmatprep.subr.bf16.mxu0 %v5108
    %7291 = vmatpush1.bf16.msra.mxu0 %v5107
    %7292 = vmatprep.subr.bf16.mxu0 %v5110
    %7293 = vmatpush1.bf16.msra.mxu0 %v5109
    %7294 = vmatprep.subr.bf16.mxu0 %v5112
    %7295 = vmatpush1.bf16.msra.mxu0 %v5111
    %7296 = vmatprep.subr.bf16.mxu0 %v5114
    %7297 = vmatpush1.bf16.msra.mxu0 %v5113
    %7298 = vmatprep.subr.bf16.mxu0 %v5116
    %7299 = vmatpush1.bf16.msra.mxu0 %v5115
    %7300 = vmatprep.subr.bf16.mxu0 %v5118
    %7301 = vmatpush1.bf16.msra.mxu0 %v5117
    %7302 = vmatprep.subr.bf16.mxu0 %v5120
    %7303 = vmatpush1.bf16.msra.mxu0 %v5119
    %7304 = vmatprep.subr.bf16.mxu0 %v5122
    %7305 = vmatpush1.bf16.msra.mxu0 %v5121
    %7306 = vmatprep.mubr.bf16.mxu0 %v470
    %7307 = vmatmul.mubr.bf16.gmra.mrb[0].mxu0 %v469
    %v7308 = vpop.f32.mrb[0].mxu0
    %v7309 = vadd.f32 %v7268, %v7308
    %v7310 = vpop.f32.mrb[0].mxu0
    %v7311 = vadd.f32 %v7270, %v7310
    %v7312 = vpop.f32.mrb[0].mxu0
    %v7313 = vpop.f32.mrb[0].mxu0
    %7314 = vdwg.mxu0
    %7315 = vmatprep.subr.bf16.mxu0 %v5124
    %7316 = vmatpush1.bf16.msra.mxu0 %v5123
    %7317 = vmatprep.subr.bf16.mxu0 %v5126
    %7318 = vmatpush1.bf16.msra.mxu0 %v5125
    %7319 = vmatprep.subr.bf16.mxu0 %v5128
    %7320 = vmatpush1.bf16.msra.mxu0 %v5127
    %7321 = vmatprep.subr.bf16.mxu0 %v5130
    %7322 = vmatpush1.bf16.msra.mxu0 %v5129
    %7323 = vmatprep.subr.bf16.mxu0 %v5132
    %7324 = vmatpush1.bf16.msra.mxu0 %v5131
    %7325 = vmatprep.subr.bf16.mxu0 %v5134
    %7326 = vmatpush1.bf16.msra.mxu0 %v5133
    %7327 = vmatprep.subr.bf16.mxu0 %v5136
    %7328 = vmatpush1.bf16.msra.mxu0 %v5135
    %7329 = vmatprep.subr.bf16.mxu0 %v5138
    %7330 = vmatpush1.bf16.msra.mxu0 %v5137
    %7331 = vmatprep.subr.bf16.mxu0 %v5140
    %7332 = vmatpush1.bf16.msra.mxu0 %v5139
    %7333 = vmatprep.subr.bf16.mxu0 %v5142
    %7334 = vmatpush1.bf16.msra.mxu0 %v5141
    %7335 = vmatprep.subr.bf16.mxu0 %v5144
    %7336 = vmatpush1.bf16.msra.mxu0 %v5143
    %7337 = vmatprep.subr.bf16.mxu0 %v5146
    %7338 = vmatpush1.bf16.msra.mxu0 %v5145
    %7339 = vmatprep.subr.bf16.mxu0 %v5148
    %7340 = vmatpush1.bf16.msra.mxu0 %v5147
    %7341 = vmatprep.subr.bf16.mxu0 %v5150
    %7342 = vmatpush1.bf16.msra.mxu0 %v5149
    %7343 = vmatprep.subr.bf16.mxu0 %v5152
    %7344 = vmatpush1.bf16.msra.mxu0 %v5151
    %7345 = vmatprep.subr.bf16.mxu0 %v5154
    %7346 = vmatpush1.bf16.msra.mxu0 %v5153
    %7347 = vmatprep.mubr.bf16.mxu0 %v472
    %7348 = vmatmul.mubr.bf16.gmra.mrb[0].mxu0 %v471
    %v7349 = vpop.f32.mrb[0].mxu0
    %v7350 = vadd.f32 %v7309, %v7349
    %v7351 = vpop.f32.mrb[0].mxu0
    %v7352 = vadd.f32 %v7311, %v7351
    %v7353 = vpop.f32.mrb[0].mxu0
    %v7354 = vpop.f32.mrb[0].mxu0
    %7355 = vdwg.mxu0
    %7356 = vmatprep.subr.bf16.mxu0 %v5156
    %7357 = vmatpush1.bf16.msra.mxu0 %v5155
    %7358 = vmatprep.subr.bf16.mxu0 %v5158
    %7359 = vmatpush1.bf16.msra.mxu0 %v5157
    %7360 = vmatprep.subr.bf16.mxu0 %v5160
    %7361 = vmatpush1.bf16.msra.mxu0 %v5159
    %7362 = vmatprep.subr.bf16.mxu0 %v5162
    %7363 = vmatpush1.bf16.msra.mxu0 %v5161
    %7364 = vmatprep.subr.bf16.mxu0 %v5164
    %7365 = vmatpush1.bf16.msra.mxu0 %v5163
    %7366 = vmatprep.subr.bf16.mxu0 %v5166
    %7367 = vmatpush1.bf16.msra.mxu0 %v5165
    %7368 = vmatprep.subr.bf16.mxu0 %v5168
    %7369 = vmatpush1.bf16.msra.mxu0 %v5167
    %7370 = vmatprep.subr.bf16.mxu0 %v5170
    %7371 = vmatpush1.bf16.msra.mxu0 %v5169
    %7372 = vmatprep.subr.bf16.mxu0 %v5172
    %7373 = vmatpush1.bf16.msra.mxu0 %v5171
    %7374 = vmatprep.subr.bf16.mxu0 %v5174
    %7375 = vmatpush1.bf16.msra.mxu0 %v5173
    %7376 = vmatprep.subr.bf16.mxu0 %v5176
    %7377 = vmatpush1.bf16.msra.mxu0 %v5175
    %7378 = vmatprep.subr.bf16.mxu0 %v5178
    %7379 = vmatpush1.bf16.msra.mxu0 %v5177
    %7380 = vmatprep.subr.bf16.mxu0 %v5180
    %7381 = vmatpush1.bf16.msra.mxu0 %v5179
    %7382 = vmatprep.subr.bf16.mxu0 %v5182
    %7383 = vmatpush1.bf16.msra.mxu0 %v5181
    %7384 = vmatprep.subr.bf16.mxu0 %v5184
    %7385 = vmatpush1.bf16.msra.mxu0 %v5183
    %7386 = vmatprep.subr.bf16.mxu0 %v5186
    %7387 = vmatpush1.bf16.msra.mxu0 %v5185
    %7388 = vmatprep.mubr.bf16.mxu0 %v474
    %7389 = vmatmul.mubr.bf16.gmra.mrb[0].mxu0 %v473
    %v7390 = vpop.f32.mrb[0].mxu0
    %v7391 = vadd.f32 %v7350, %v7390
    %v7392 = vpop.f32.mrb[0].mxu0
    %v7393 = vadd.f32 %v7352, %v7392
    %v7394 = vpop.f32.mrb[0].mxu0
    %v7395 = vpop.f32.mrb[0].mxu0
    %7396 = vdwg.mxu0
    %7397 = vmatprep.subr.bf16.mxu0 %v5188
    %7398 = vmatpush1.bf16.msra.mxu0 %v5187
    %7399 = vmatprep.subr.bf16.mxu0 %v5190
    %7400 = vmatpush1.bf16.msra.mxu0 %v5189
    %7401 = vmatprep.subr.bf16.mxu0 %v5192
    %7402 = vmatpush1.bf16.msra.mxu0 %v5191
    %7403 = vmatprep.subr.bf16.mxu0 %v5194
    %7404 = vmatpush1.bf16.msra.mxu0 %v5193
    %7405 = vmatprep.subr.bf16.mxu0 %v5196
    %7406 = vmatpush1.bf16.msra.mxu0 %v5195
    %7407 = vmatprep.subr.bf16.mxu0 %v5198
    %7408 = vmatpush1.bf16.msra.mxu0 %v5197
    %7409 = vmatprep.subr.bf16.mxu0 %v5200
    %7410 = vmatpush1.bf16.msra.mxu0 %v5199
    %7411 = vmatprep.subr.bf16.mxu0 %v5202
    %7412 = vmatpush1.bf16.msra.mxu0 %v5201
    %7413 = vmatprep.subr.bf16.mxu0 %v5204
    %7414 = vmatpush1.bf16.msra.mxu0 %v5203
    %7415 = vmatprep.subr.bf16.mxu0 %v5206
    %7416 = vmatpush1.bf16.msra.mxu0 %v5205
    %7417 = vmatprep.subr.bf16.mxu0 %v5208
    %7418 = vmatpush1.bf16.msra.mxu0 %v5207
    %7419 = vmatprep.subr.bf16.mxu0 %v5210
    %7420 = vmatpush1.bf16.msra.mxu0 %v5209
    %7421 = vmatprep.subr.bf16.mxu0 %v5212
    %7422 = vmatpush1.bf16.msra.mxu0 %v5211
    %7423 = vmatprep.subr.bf16.mxu0 %v5214
    %7424 = vmatpush1.bf16.msra.mxu0 %v5213
    %7425 = vmatprep.subr.bf16.mxu0 %v5216
    %7426 = vmatpush1.bf16.msra.mxu0 %v5215
    %7427 = vmatprep.subr.bf16.mxu0 %v5218
    %7428 = vmatpush1.bf16.msra.mxu0 %v5217
    %7429 = vmatprep.mubr.bf16.mxu0 %v476
    %7430 = vmatmul.mubr.bf16.gmra.mrb[0].mxu0 %v475
    %v7431 = vpop.f32.mrb[0].mxu0
    %v7432 = vadd.f32 %v7391, %v7431
    %v7433 = vpop.f32.mrb[0].mxu0
    %v7434 = vadd.f32 %v7393, %v7433
    %v7435 = vpop.f32.mrb[0].mxu0
    %v7436 = vpop.f32.mrb[0].mxu0
    %7437 = vdwg.mxu0
    %7438 = vmatprep.subr.bf16.mxu0 %v5220
    %7439 = vmatpush1.bf16.msra.mxu0 %v5219
    %7440 = vmatprep.subr.bf16.mxu0 %v5222
    %7441 = vmatpush1.bf16.msra.mxu0 %v5221
    %7442 = vmatprep.subr.bf16.mxu0 %v5224
    %7443 = vmatpush1.bf16.msra.mxu0 %v5223
    %7444 = vmatprep.subr.bf16.mxu0 %v5226
    %7445 = vmatpush1.bf16.msra.mxu0 %v5225
    %7446 = vmatprep.subr.bf16.mxu0 %v5228
    %7447 = vmatpush1.bf16.msra.mxu0 %v5227
    %7448 = vmatprep.subr.bf16.mxu0 %v5230
    %7449 = vmatpush1.bf16.msra.mxu0 %v5229
    %7450 = vmatprep.subr.bf16.mxu0 %v5232
    %7451 = vmatpush1.bf16.msra.mxu0 %v5231
    %7452 = vmatprep.subr.bf16.mxu0 %v5234
    %7453 = vmatpush1.bf16.msra.mxu0 %v5233
    %7454 = vmatprep.subr.bf16.mxu0 %v5236
    %7455 = vmatpush1.bf16.msra.mxu0 %v5235
    %7456 = vmatprep.subr.bf16.mxu0 %v5238
    %7457 = vmatpush1.bf16.msra.mxu0 %v5237
    %7458 = vmatprep.subr.bf16.mxu0 %v5240
    %7459 = vmatpush1.bf16.msra.mxu0 %v5239
    %7460 = vmatprep.subr.bf16.mxu0 %v5242
    %7461 = vmatpush1.bf16.msra.mxu0 %v5241
    %7462 = vmatprep.subr.bf16.mxu0 %v5244
    %7463 = vmatpush1.bf16.msra.mxu0 %v5243
    %7464 = vmatprep.subr.bf16.mxu0 %v5246
    %7465 = vmatpush1.bf16.msra.mxu0 %v5245
    %7466 = vmatprep.subr.bf16.mxu0 %v5248
    %7467 = vmatpush1.bf16.msra.mxu0 %v5247
    %7468 = vmatprep.subr.bf16.mxu0 %v5250
    %7469 = vmatpush1.bf16.msra.mxu0 %v5249
    %7470 = vmatprep.mubr.bf16.mxu0 %v478
    %7471 = vmatmul.mubr.bf16.gmra.mrb[0].mxu0 %v477
    %v7472 = vpop.f32.mrb[0].mxu0
    %v7473 = vadd.f32 %v7432, %v7472
    %v7474 = vpop.f32.mrb[0].mxu0
    %v7475 = vadd.f32 %v7434, %v7474
    %v7476 = vpop.f32.mrb[0].mxu0
    %v7477 = vpop.f32.mrb[0].mxu0
    %7478 = vdwg.mxu0
    %7479 = vmatprep.subr.bf16.mxu0 %v5252
    %7480 = vmatpush1.bf16.msra.mxu0 %v5251
    %7481 = vmatprep.subr.bf16.mxu0 %v5254
    %7482 = vmatpush1.bf16.msra.mxu0 %v5253
    %7483 = vmatprep.subr.bf16.mxu0 %v5256
    %7484 = vmatpush1.bf16.msra.mxu0 %v5255
    %7485 = vmatprep.subr.bf16.mxu0 %v5258
    %7486 = vmatpush1.bf16.msra.mxu0 %v5257
    %7487 = vmatprep.subr.bf16.mxu0 %v5260
    %7488 = vmatpush1.bf16.msra.mxu0 %v5259
    %7489 = vmatprep.subr.bf16.mxu0 %v5262
    %7490 = vmatpush1.bf16.msra.mxu0 %v5261
    %7491 = vmatprep.subr.bf16.mxu0 %v5264
    %7492 = vmatpush1.bf16.msra.mxu0 %v5263
    %7493 = vmatprep.subr.bf16.mxu0 %v5266
    %7494 = vmatpush1.bf16.msra.mxu0 %v5265
    %7495 = vmatprep.subr.bf16.mxu0 %v5268
    %7496 = vmatpush1.bf16.msra.mxu0 %v5267
    %7497 = vmatprep.subr.bf16.mxu0 %v5270
    %7498 = vmatpush1.bf16.msra.mxu0 %v5269
    %7499 = vmatprep.subr.bf16.mxu0 %v5272
    %7500 = vmatpush1.bf16.msra.mxu0 %v5271
    %7501 = vmatprep.subr.bf16.mxu0 %v5274
    %7502 = vmatpush1.bf16.msra.mxu0 %v5273
    %7503 = vmatprep.subr.bf16.mxu0 %v5276
    %7504 = vmatpush1.bf16.msra.mxu0 %v5275
    %7505 = vmatprep.subr.bf16.mxu0 %v5278
    %7506 = vmatpush1.bf16.msra.mxu0 %v5277
    %7507 = vmatprep.subr.bf16.mxu0 %v5280
    %7508 = vmatpush1.bf16.msra.mxu0 %v5279
    %7509 = vmatprep.subr.bf16.mxu0 %v5282
    %7510 = vmatpush1.bf16.msra.mxu0 %v5281
    %7511 = vmatprep.mubr.bf16.mxu0 %v480
    %7512 = vmatmul.mubr.bf16.gmra.mrb[0].mxu0 %v479
    %v7513 = vpop.f32.mrb[0].mxu0
    %v7514 = vadd.f32 %v7473, %v7513
    %v7515 = vpop.f32.mrb[0].mxu0
    %v7516 = vadd.f32 %v7475, %v7515
    %v7517 = vpop.f32.mrb[0].mxu0
    %v7518 = vpop.f32.mrb[0].mxu0
    %7519 = vdwg.mxu0
    %7520 = vmatprep.subr.bf16.mxu0 %v5284
    %7521 = vmatpush1.bf16.msra.mxu0 %v5283
    %7522 = vmatprep.subr.bf16.mxu0 %v5286
    %7523 = vmatpush1.bf16.msra.mxu0 %v5285
    %7524 = vmatprep.subr.bf16.mxu0 %v5288
    %7525 = vmatpush1.bf16.msra.mxu0 %v5287
    %7526 = vmatprep.subr.bf16.mxu0 %v5290
    %7527 = vmatpush1.bf16.msra.mxu0 %v5289
    %7528 = vmatprep.subr.bf16.mxu0 %v5292
    %7529 = vmatpush1.bf16.msra.mxu0 %v5291
    %7530 = vmatprep.subr.bf16.mxu0 %v5294
    %7531 = vmatpush1.bf16.msra.mxu0 %v5293
    %7532 = vmatprep.subr.bf16.mxu0 %v5296
    %7533 = vmatpush1.bf16.msra.mxu0 %v5295
    %7534 = vmatprep.subr.bf16.mxu0 %v5298
    %7535 = vmatpush1.bf16.msra.mxu0 %v5297
    %7536 = vmatprep.subr.bf16.mxu0 %v5300
    %7537 = vmatpush1.bf16.msra.mxu0 %v5299
    %7538 = vmatprep.subr.bf16.mxu0 %v5302
    %7539 = vmatpush1.bf16.msra.mxu0 %v5301
    %7540 = vmatprep.subr.bf16.mxu0 %v5304
    %7541 = vmatpush1.bf16.msra.mxu0 %v5303
    %7542 = vmatprep.subr.bf16.mxu0 %v5306
    %7543 = vmatpush1.bf16.msra.mxu0 %v5305
    %7544 = vmatprep.subr.bf16.mxu0 %v5308
    %7545 = vmatpush1.bf16.msra.mxu0 %v5307
    %7546 = vmatprep.subr.bf16.mxu0 %v5310
    %7547 = vmatpush1.bf16.msra.mxu0 %v5309
    %7548 = vmatprep.subr.bf16.mxu0 %v5312
    %7549 = vmatpush1.bf16.msra.mxu0 %v5311
    %7550 = vmatprep.subr.bf16.mxu0 %v5314
    %7551 = vmatpush1.bf16.msra.mxu0 %v5313
    %7552 = vmatprep.mubr.bf16.mxu0 %v482
    %7553 = vmatmul.mubr.bf16.gmra.mrb[0].mxu0 %v481
    %v7554 = vpop.f32.mrb[0].mxu0
    %v7555 = vadd.f32 %v7514, %v7554
    %v7556 = vpop.f32.mrb[0].mxu0
    %v7557 = vadd.f32 %v7516, %v7556
    %v7558 = vpop.f32.mrb[0].mxu0
    %v7559 = vpop.f32.mrb[0].mxu0
    %7560 = vdwg.mxu0
    %7561 = vmatprep.subr.bf16.mxu0 %v5316
    %7562 = vmatpush1.bf16.msra.mxu0 %v5315
    %7563 = vmatprep.subr.bf16.mxu0 %v5318
    %7564 = vmatpush1.bf16.msra.mxu0 %v5317
    %7565 = vmatprep.subr.bf16.mxu0 %v5320
    %7566 = vmatpush1.bf16.msra.mxu0 %v5319
    %7567 = vmatprep.subr.bf16.mxu0 %v5322
    %7568 = vmatpush1.bf16.msra.mxu0 %v5321
    %7569 = vmatprep.subr.bf16.mxu0 %v5324
    %7570 = vmatpush1.bf16.msra.mxu0 %v5323
    %7571 = vmatprep.subr.bf16.mxu0 %v5326
    %7572 = vmatpush1.bf16.msra.mxu0 %v5325
    %7573 = vmatprep.subr.bf16.mxu0 %v5328
    %7574 = vmatpush1.bf16.msra.mxu0 %v5327
    %7575 = vmatprep.subr.bf16.mxu0 %v5330
    %7576 = vmatpush1.bf16.msra.mxu0 %v5329
    %7577 = vmatprep.subr.bf16.mxu0 %v5332
    %7578 = vmatpush1.bf16.msra.mxu0 %v5331
    %7579 = vmatprep.subr.bf16.mxu0 %v5334
    %7580 = vmatpush1.bf16.msra.mxu0 %v5333
    %7581 = vmatprep.subr.bf16.mxu0 %v5336
    %7582 = vmatpush1.bf16.msra.mxu0 %v5335
    %7583 = vmatprep.subr.bf16.mxu0 %v5338
    %7584 = vmatpush1.bf16.msra.mxu0 %v5337
    %7585 = vmatprep.subr.bf16.mxu0 %v5340
    %7586 = vmatpush1.bf16.msra.mxu0 %v5339
    %7587 = vmatprep.subr.bf16.mxu0 %v5342
    %7588 = vmatpush1.bf16.msra.mxu0 %v5341
    %7589 = vmatprep.subr.bf16.mxu0 %v5344
    %7590 = vmatpush1.bf16.msra.mxu0 %v5343
    %7591 = vmatprep.subr.bf16.mxu0 %v5346
    %7592 = vmatpush1.bf16.msra.mxu0 %v5345
    %7593 = vmatprep.mubr.bf16.mxu0 %v484
    %7594 = vmatmul.mubr.bf16.gmra.mrb[0].mxu0 %v483
    %v7595 = vpop.f32.mrb[0].mxu0
    %v7596 = vadd.f32 %v7555, %v7595
    %v7597 = vpop.f32.mrb[0].mxu0
    %v7598 = vadd.f32 %v7557, %v7597
    %v7599 = vpop.f32.mrb[0].mxu0
    %v7600 = vpop.f32.mrb[0].mxu0
    %7601 = vdwg.mxu0
    %7602 = vmatprep.subr.bf16.mxu0 %v5348
    %7603 = vmatpush1.bf16.msra.mxu0 %v5347
    %7604 = vmatprep.subr.bf16.mxu0 %v5350
    %7605 = vmatpush1.bf16.msra.mxu0 %v5349
    %7606 = vmatprep.subr.bf16.mxu0 %v5352
    %7607 = vmatpush1.bf16.msra.mxu0 %v5351
    %7608 = vmatprep.subr.bf16.mxu0 %v5354
    %7609 = vmatpush1.bf16.msra.mxu0 %v5353
    %7610 = vmatprep.subr.bf16.mxu0 %v5356
    %7611 = vmatpush1.bf16.msra.mxu0 %v5355
    %7612 = vmatprep.subr.bf16.mxu0 %v5358
    %7613 = vmatpush1.bf16.msra.mxu0 %v5357
    %7614 = vmatprep.subr.bf16.mxu0 %v5360
    %7615 = vmatpush1.bf16.msra.mxu0 %v5359
    %7616 = vmatprep.subr.bf16.mxu0 %v5362
    %7617 = vmatpush1.bf16.msra.mxu0 %v5361
    %7618 = vmatprep.subr.bf16.mxu0 %v5364
    %7619 = vmatpush1.bf16.msra.mxu0 %v5363
    %7620 = vmatprep.subr.bf16.mxu0 %v5366
    %7621 = vmatpush1.bf16.msra.mxu0 %v5365
    %7622 = vmatprep.subr.bf16.mxu0 %v5368
    %7623 = vmatpush1.bf16.msra.mxu0 %v5367
    %7624 = vmatprep.subr.bf16.mxu0 %v5370
    %7625 = vmatpush1.bf16.msra.mxu0 %v5369
    %7626 = vmatprep.subr.bf16.mxu0 %v5372
    %7627 = vmatpush1.bf16.msra.mxu0 %v5371
    %7628 = vmatprep.subr.bf16.mxu0 %v5374
    %7629 = vmatpush1.bf16.msra.mxu0 %v5373
    %7630 = vmatprep.subr.bf16.mxu0 %v5376
    %7631 = vmatpush1.bf16.msra.mxu0 %v5375
    %7632 = vmatprep.subr.bf16.mxu0 %v5378
    %7633 = vmatpush1.bf16.msra.mxu0 %v5377
    %7634 = vmatprep.mubr.bf16.mxu0 %v486
    %7635 = vmatmul.mubr.bf16.gmra.mrb[0].mxu0 %v485
    %v7636 = vpop.f32.mrb[0].mxu0
    %v7637 = vadd.f32 %v7596, %v7636
    %v7638 = vpop.f32.mrb[0].mxu0
    %v7639 = vadd.f32 %v7598, %v7638
    %v7640 = vpop.f32.mrb[0].mxu0
    %v7641 = vpop.f32.mrb[0].mxu0
    %7642 = vdwg.mxu0
    %7643 = vmatprep.subr.bf16.mxu0 %v5380
    %7644 = vmatpush1.bf16.msra.mxu0 %v5379
    %7645 = vmatprep.subr.bf16.mxu0 %v5382
    %7646 = vmatpush1.bf16.msra.mxu0 %v5381
    %7647 = vmatprep.subr.bf16.mxu0 %v5384
    %7648 = vmatpush1.bf16.msra.mxu0 %v5383
    %7649 = vmatprep.subr.bf16.mxu0 %v5386
    %7650 = vmatpush1.bf16.msra.mxu0 %v5385
    %7651 = vmatprep.subr.bf16.mxu0 %v5388
    %7652 = vmatpush1.bf16.msra.mxu0 %v5387
    %7653 = vmatprep.subr.bf16.mxu0 %v5390
    %7654 = vmatpush1.bf16.msra.mxu0 %v5389
    %7655 = vmatprep.subr.bf16.mxu0 %v5392
    %7656 = vmatpush1.bf16.msra.mxu0 %v5391
    %7657 = vmatprep.subr.bf16.mxu0 %v5394
    %7658 = vmatpush1.bf16.msra.mxu0 %v5393
    %7659 = vmatprep.subr.bf16.mxu0 %v5396
    %7660 = vmatpush1.bf16.msra.mxu0 %v5395
    %7661 = vmatprep.subr.bf16.mxu0 %v5398
    %7662 = vmatpush1.bf16.msra.mxu0 %v5397
    %7663 = vmatprep.subr.bf16.mxu0 %v5400
    %7664 = vmatpush1.bf16.msra.mxu0 %v5399
    %7665 = vmatprep.subr.bf16.mxu0 %v5402
    %7666 = vmatpush1.bf16.msra.mxu0 %v5401
    %7667 = vmatprep.subr.bf16.mxu0 %v5404
    %7668 = vmatpush1.bf16.msra.mxu0 %v5403
    %7669 = vmatprep.subr.bf16.mxu0 %v5406
    %7670 = vmatpush1.bf16.msra.mxu0 %v5405
    %7671 = vmatprep.subr.bf16.mxu0 %v5408
    %7672 = vmatpush1.bf16.msra.mxu0 %v5407
    %7673 = vmatprep.subr.bf16.mxu0 %v5410
    %7674 = vmatpush1.bf16.msra.mxu0 %v5409
    %7675 = vmatprep.mubr.bf16.mxu0 %v488
    %7676 = vmatmul.mubr.bf16.gmra.mrb[0].mxu0 %v487
    %v7677 = vpop.f32.mrb[0].mxu0
    %v7678 = vadd.f32 %v7637, %v7677
    %v7679 = vpop.f32.mrb[0].mxu0
    %v7680 = vadd.f32 %v7639, %v7679
    %v7681 = vpop.f32.mrb[0].mxu0
    %v7682 = vpop.f32.mrb[0].mxu0
    %7683 = vdwg.mxu0
    %7684 = vmatprep.subr.bf16.mxu0 %v5412
    %7685 = vmatpush1.bf16.msra.mxu0 %v5411
    %7686 = vmatprep.subr.bf16.mxu0 %v5414
    %7687 = vmatpush1.bf16.msra.mxu0 %v5413
    %7688 = vmatprep.subr.bf16.mxu0 %v5416
    %7689 = vmatpush1.bf16.msra.mxu0 %v5415
    %7690 = vmatprep.subr.bf16.mxu0 %v5418
    %7691 = vmatpush1.bf16.msra.mxu0 %v5417
    %7692 = vmatprep.subr.bf16.mxu0 %v5420
    %7693 = vmatpush1.bf16.msra.mxu0 %v5419
    %7694 = vmatprep.subr.bf16.mxu0 %v5422
    %7695 = vmatpush1.bf16.msra.mxu0 %v5421
    %7696 = vmatprep.subr.bf16.mxu0 %v5424
    %7697 = vmatpush1.bf16.msra.mxu0 %v5423
    %7698 = vmatprep.subr.bf16.mxu0 %v5426
    %7699 = vmatpush1.bf16.msra.mxu0 %v5425
    %7700 = vmatprep.subr.bf16.mxu0 %v5428
    %7701 = vmatpush1.bf16.msra.mxu0 %v5427
    %7702 = vmatprep.subr.bf16.mxu0 %v5430
    %7703 = vmatpush1.bf16.msra.mxu0 %v5429
    %7704 = vmatprep.subr.bf16.mxu0 %v5432
    %7705 = vmatpush1.bf16.msra.mxu0 %v5431
    %7706 = vmatprep.subr.bf16.mxu0 %v5434
    %7707 = vmatpush1.bf16.msra.mxu0 %v5433
    %7708 = vmatprep.subr.bf16.mxu0 %v5436
    %7709 = vmatpush1.bf16.msra.mxu0 %v5435
    %7710 = vmatprep.subr.bf16.mxu0 %v5438
    %7711 = vmatpush1.bf16.msra.mxu0 %v5437
    %7712 = vmatprep.subr.bf16.mxu0 %v5440
    %7713 = vmatpush1.bf16.msra.mxu0 %v5439
    %7714 = vmatprep.subr.bf16.mxu0 %v5442
    %7715 = vmatpush1.bf16.msra.mxu0 %v5441
    %7716 = vmatprep.mubr.bf16.mxu0 %v490
    %7717 = vmatmul.mubr.bf16.gmra.mrb[0].mxu0 %v489
    %v7718 = vpop.f32.mrb[0].mxu0
    %v7719 = vadd.f32 %v7678, %v7718
    %v7720 = vpop.f32.mrb[0].mxu0
    %v7721 = vadd.f32 %v7680, %v7720
    %v7722 = vpop.f32.mrb[0].mxu0
    %v7723 = vpop.f32.mrb[0].mxu0
    %7724 = vdwg.mxu0
    %7725 = vmatprep.subr.bf16.mxu0 %v5444
    %7726 = vmatpush1.bf16.msra.mxu0 %v5443
    %7727 = vmatprep.subr.bf16.mxu0 %v5446
    %7728 = vmatpush1.bf16.msra.mxu0 %v5445
    %7729 = vmatprep.subr.bf16.mxu0 %v5448
    %7730 = vmatpush1.bf16.msra.mxu0 %v5447
    %7731 = vmatprep.subr.bf16.mxu0 %v5450
    %7732 = vmatpush1.bf16.msra.mxu0 %v5449
    %7733 = vmatprep.subr.bf16.mxu0 %v5452
    %7734 = vmatpush1.bf16.msra.mxu0 %v5451
    %7735 = vmatprep.subr.bf16.mxu0 %v5454
    %7736 = vmatpush1.bf16.msra.mxu0 %v5453
    %7737 = vmatprep.subr.bf16.mxu0 %v5456
    %7738 = vmatpush1.bf16.msra.mxu0 %v5455
    %7739 = vmatprep.subr.bf16.mxu0 %v5458
    %7740 = vmatpush1.bf16.msra.mxu0 %v5457
    %7741 = vmatprep.subr.bf16.mxu0 %v5460
    %7742 = vmatpush1.bf16.msra.mxu0 %v5459
    %7743 = vmatprep.subr.bf16.mxu0 %v5462
    %7744 = vmatpush1.bf16.msra.mxu0 %v5461
    %7745 = vmatprep.subr.bf16.mxu0 %v5464
    %7746 = vmatpush1.bf16.msra.mxu0 %v5463
    %7747 = vmatprep.subr.bf16.mxu0 %v5466
    %7748 = vmatpush1.bf16.msra.mxu0 %v5465
    %7749 = vmatprep.subr.bf16.mxu0 %v5468
    %7750 = vmatpush1.bf16.msra.mxu0 %v5467
    %7751 = vmatprep.subr.bf16.mxu0 %v5470
    %7752 = vmatpush1.bf16.msra.mxu0 %v5469
    %7753 = vmatprep.subr.bf16.mxu0 %v5472
    %7754 = vmatpush1.bf16.msra.mxu0 %v5471
    %7755 = vmatprep.subr.bf16.mxu0 %v5474
    %7756 = vmatpush1.bf16.msra.mxu0 %v5473
    %7757 = vmatprep.mubr.bf16.mxu0 %v492
    %7758 = vmatmul.mubr.bf16.gmra.mrb[0].mxu0 %v491
    %v7759 = vpop.f32.mrb[0].mxu0
    %v7760 = vadd.f32 %v7719, %v7759
    %v7761 = vpop.f32.mrb[0].mxu0
    %v7762 = vadd.f32 %v7721, %v7761
    %v7763 = vpop.f32.mrb[0].mxu0
    %v7764 = vpop.f32.mrb[0].mxu0
    %7765 = vdwg.mxu0
    %7766 = vmatprep.subr.bf16.mxu0 %v5476
    %7767 = vmatpush1.bf16.msra.mxu0 %v5475
    %7768 = vmatprep.subr.bf16.mxu0 %v5478
    %7769 = vmatpush1.bf16.msra.mxu0 %v5477
    %7770 = vmatprep.subr.bf16.mxu0 %v5480
    %7771 = vmatpush1.bf16.msra.mxu0 %v5479
    %7772 = vmatprep.subr.bf16.mxu0 %v5482
    %7773 = vmatpush1.bf16.msra.mxu0 %v5481
    %7774 = vmatprep.subr.bf16.mxu0 %v5484
    %7775 = vmatpush1.bf16.msra.mxu0 %v5483
    %7776 = vmatprep.subr.bf16.mxu0 %v5486
    %7777 = vmatpush1.bf16.msra.mxu0 %v5485
    %7778 = vmatprep.subr.bf16.mxu0 %v5488
    %7779 = vmatpush1.bf16.msra.mxu0 %v5487
    %7780 = vmatprep.subr.bf16.mxu0 %v5490
    %7781 = vmatpush1.bf16.msra.mxu0 %v5489
    %7782 = vmatprep.subr.bf16.mxu0 %v5492
    %7783 = vmatpush1.bf16.msra.mxu0 %v5491
    %7784 = vmatprep.subr.bf16.mxu0 %v5494
    %7785 = vmatpush1.bf16.msra.mxu0 %v5493
    %7786 = vmatprep.subr.bf16.mxu0 %v5496
    %7787 = vmatpush1.bf16.msra.mxu0 %v5495
    %7788 = vmatprep.subr.bf16.mxu0 %v5498
    %7789 = vmatpush1.bf16.msra.mxu0 %v5497
    %7790 = vmatprep.subr.bf16.mxu0 %v5500
    %7791 = vmatpush1.bf16.msra.mxu0 %v5499
    %7792 = vmatprep.subr.bf16.mxu0 %v5502
    %7793 = vmatpush1.bf16.msra.mxu0 %v5501
    %7794 = vmatprep.subr.bf16.mxu0 %v5504
    %7795 = vmatpush1.bf16.msra.mxu0 %v5503
    %7796 = vmatprep.subr.bf16.mxu0 %v5506
    %7797 = vmatpush1.bf16.msra.mxu0 %v5505
    %7798 = vmatprep.mubr.bf16.mxu0 %v494
    %7799 = vmatmul.mubr.bf16.gmra.mrb[0].mxu0 %v493
    %v7800 = vpop.f32.mrb[0].mxu0
    %v7801 = vadd.f32 %v7760, %v7800
    %v7802 = vpop.f32.mrb[0].mxu0
    %v7803 = vadd.f32 %v7762, %v7802
    %v7804 = vpop.f32.mrb[0].mxu0
    %v7805 = vpop.f32.mrb[0].mxu0
    %7806 = vdwg.mxu0
    %7807 = vmatprep.subr.bf16.mxu0 %v5508
    %7808 = vmatpush1.bf16.msra.mxu0 %v5507
    %7809 = vmatprep.subr.bf16.mxu0 %v5510
    %7810 = vmatpush1.bf16.msra.mxu0 %v5509
    %7811 = vmatprep.subr.bf16.mxu0 %v5512
    %7812 = vmatpush1.bf16.msra.mxu0 %v5511
    %7813 = vmatprep.subr.bf16.mxu0 %v5514
    %7814 = vmatpush1.bf16.msra.mxu0 %v5513
    %7815 = vmatprep.subr.bf16.mxu0 %v5516
    %7816 = vmatpush1.bf16.msra.mxu0 %v5515
    %7817 = vmatprep.subr.bf16.mxu0 %v5518
    %7818 = vmatpush1.bf16.msra.mxu0 %v5517
    %7819 = vmatprep.subr.bf16.mxu0 %v5520
    %7820 = vmatpush1.bf16.msra.mxu0 %v5519
    %7821 = vmatprep.subr.bf16.mxu0 %v5522
    %7822 = vmatpush1.bf16.msra.mxu0 %v5521
    %7823 = vmatprep.subr.bf16.mxu0 %v5524
    %7824 = vmatpush1.bf16.msra.mxu0 %v5523
    %7825 = vmatprep.subr.bf16.mxu0 %v5526
    %7826 = vmatpush1.bf16.msra.mxu0 %v5525
    %7827 = vmatprep.subr.bf16.mxu0 %v5528
    %7828 = vmatpush1.bf16.msra.mxu0 %v5527
    %7829 = vmatprep.subr.bf16.mxu0 %v5530
    %7830 = vmatpush1.bf16.msra.mxu0 %v5529
    %7831 = vmatprep.subr.bf16.mxu0 %v5532
    %7832 = vmatpush1.bf16.msra.mxu0 %v5531
    %7833 = vmatprep.subr.bf16.mxu0 %v5534
    %7834 = vmatpush1.bf16.msra.mxu0 %v5533
    %7835 = vmatprep.subr.bf16.mxu0 %v5536
    %7836 = vmatpush1.bf16.msra.mxu0 %v5535
    %7837 = vmatprep.subr.bf16.mxu0 %v5538
    %7838 = vmatpush1.bf16.msra.mxu0 %v5537
    %7839 = vmatprep.mubr.bf16.mxu0 %v496
    %7840 = vmatmul.mubr.bf16.gmra.mrb[0].mxu0 %v495
    %v7841 = vpop.f32.mrb[0].mxu0
    %v7842 = vadd.f32 %v7801, %v7841
    %v7843 = vpop.f32.mrb[0].mxu0
    %v7844 = vadd.f32 %v7803, %v7843
    %v7845 = vpop.f32.mrb[0].mxu0
    %v7846 = vpop.f32.mrb[0].mxu0
    %7847 = vdwg.mxu0
    %7848 = vmatprep.subr.bf16.mxu0 %v5540
    %7849 = vmatpush1.bf16.msra.mxu0 %v5539
    %7850 = vmatprep.subr.bf16.mxu0 %v5542
    %7851 = vmatpush1.bf16.msra.mxu0 %v5541
    %7852 = vmatprep.subr.bf16.mxu0 %v5544
    %7853 = vmatpush1.bf16.msra.mxu0 %v5543
    %7854 = vmatprep.subr.bf16.mxu0 %v5546
    %7855 = vmatpush1.bf16.msra.mxu0 %v5545
    %7856 = vmatprep.subr.bf16.mxu0 %v5548
    %7857 = vmatpush1.bf16.msra.mxu0 %v5547
    %7858 = vmatprep.subr.bf16.mxu0 %v5550
    %7859 = vmatpush1.bf16.msra.mxu0 %v5549
    %7860 = vmatprep.subr.bf16.mxu0 %v5552
    %7861 = vmatpush1.bf16.msra.mxu0 %v5551
    %7862 = vmatprep.subr.bf16.mxu0 %v5554
    %7863 = vmatpush1.bf16.msra.mxu0 %v5553
    %7864 = vmatprep.subr.bf16.mxu0 %v5556
    %7865 = vmatpush1.bf16.msra.mxu0 %v5555
    %7866 = vmatprep.subr.bf16.mxu0 %v5558
    %7867 = vmatpush1.bf16.msra.mxu0 %v5557
    %7868 = vmatprep.subr.bf16.mxu0 %v5560
    %7869 = vmatpush1.bf16.msra.mxu0 %v5559
    %7870 = vmatprep.subr.bf16.mxu0 %v5562
    %7871 = vmatpush1.bf16.msra.mxu0 %v5561
    %7872 = vmatprep.subr.bf16.mxu0 %v5564
    %7873 = vmatpush1.bf16.msra.mxu0 %v5563
    %7874 = vmatprep.subr.bf16.mxu0 %v5566
    %7875 = vmatpush1.bf16.msra.mxu0 %v5565
    %7876 = vmatprep.subr.bf16.mxu0 %v5568
    %7877 = vmatpush1.bf16.msra.mxu0 %v5567
    %7878 = vmatprep.subr.bf16.mxu0 %v5570
    %7879 = vmatpush1.bf16.msra.mxu0 %v5569
    %7880 = vmatprep.mubr.bf16.mxu0 %v498
    %7881 = vmatmul.mubr.bf16.gmra.mrb[0].mxu0 %v497
    %v7882 = vpop.f32.mrb[0].mxu0
    %v7883 = vadd.f32 %v7842, %v7882
    %v7884 = vpop.f32.mrb[0].mxu0
    %v7885 = vadd.f32 %v7844, %v7884
    %v7886 = vpop.f32.mrb[0].mxu0
    %v7887 = vpop.f32.mrb[0].mxu0
    %7888 = vdwg.mxu0
    %7889 = vmatprep.subr.bf16.mxu0 %v5572
    %7890 = vmatpush1.bf16.msra.mxu0 %v5571
    %7891 = vmatprep.subr.bf16.mxu0 %v5574
    %7892 = vmatpush1.bf16.msra.mxu0 %v5573
    %7893 = vmatprep.subr.bf16.mxu0 %v5576
    %7894 = vmatpush1.bf16.msra.mxu0 %v5575
    %7895 = vmatprep.subr.bf16.mxu0 %v5578
    %7896 = vmatpush1.bf16.msra.mxu0 %v5577
    %7897 = vmatprep.subr.bf16.mxu0 %v5580
    %7898 = vmatpush1.bf16.msra.mxu0 %v5579
    %7899 = vmatprep.subr.bf16.mxu0 %v5582
    %7900 = vmatpush1.bf16.msra.mxu0 %v5581
    %7901 = vmatprep.subr.bf16.mxu0 %v5584
    %7902 = vmatpush1.bf16.msra.mxu0 %v5583
    %7903 = vmatprep.subr.bf16.mxu0 %v5586
    %7904 = vmatpush1.bf16.msra.mxu0 %v5585
    %7905 = vmatprep.subr.bf16.mxu0 %v5588
    %7906 = vmatpush1.bf16.msra.mxu0 %v5587
    %7907 = vmatprep.subr.bf16.mxu0 %v5590
    %7908 = vmatpush1.bf16.msra.mxu0 %v5589
    %7909 = vmatprep.subr.bf16.mxu0 %v5592
    %7910 = vmatpush1.bf16.msra.mxu0 %v5591
    %7911 = vmatprep.subr.bf16.mxu0 %v5594
    %7912 = vmatpush1.bf16.msra.mxu0 %v5593
    %7913 = vmatprep.subr.bf16.mxu0 %v5596
    %7914 = vmatpush1.bf16.msra.mxu0 %v5595
    %7915 = vmatprep.subr.bf16.mxu0 %v5598
    %7916 = vmatpush1.bf16.msra.mxu0 %v5597
    %7917 = vmatprep.subr.bf16.mxu0 %v5600
    %7918 = vmatpush1.bf16.msra.mxu0 %v5599
    %7919 = vmatprep.subr.bf16.mxu0 %v5602
    %7920 = vmatpush1.bf16.msra.mxu0 %v5601
    %7921 = vmatprep.mubr.bf16.mxu0 %v500
    %7922 = vmatmul.mubr.bf16.gmra.mrb[0].mxu0 %v499
    %v7923 = vpop.f32.mrb[0].mxu0
    %v7924 = vadd.f32 %v7883, %v7923
    %v7925 = vpop.f32.mrb[0].mxu0
    %v7926 = vadd.f32 %v7885, %v7925
    %v7927 = vpop.f32.mrb[0].mxu0
    %v7928 = vpop.f32.mrb[0].mxu0
    %7929 = vdwg.mxu0
    %7930 = vmatprep.subr.bf16.mxu0 %v5604
    %7931 = vmatpush1.bf16.msra.mxu0 %v5603
    %7932 = vmatprep.subr.bf16.mxu0 %v5606
    %7933 = vmatpush1.bf16.msra.mxu0 %v5605
    %7934 = vmatprep.subr.bf16.mxu0 %v5608
    %7935 = vmatpush1.bf16.msra.mxu0 %v5607
    %7936 = vmatprep.subr.bf16.mxu0 %v5610
    %7937 = vmatpush1.bf16.msra.mxu0 %v5609
    %7938 = vmatprep.subr.bf16.mxu0 %v5612
    %7939 = vmatpush1.bf16.msra.mxu0 %v5611
    %7940 = vmatprep.subr.bf16.mxu0 %v5614
    %7941 = vmatpush1.bf16.msra.mxu0 %v5613
    %7942 = vmatprep.subr.bf16.mxu0 %v5616
    %7943 = vmatpush1.bf16.msra.mxu0 %v5615
    %7944 = vmatprep.subr.bf16.mxu0 %v5618
    %7945 = vmatpush1.bf16.msra.mxu0 %v5617
    %7946 = vmatprep.subr.bf16.mxu0 %v5620
    %7947 = vmatpush1.bf16.msra.mxu0 %v5619
    %7948 = vmatprep.subr.bf16.mxu0 %v5622
    %7949 = vmatpush1.bf16.msra.mxu0 %v5621
    %7950 = vmatprep.subr.bf16.mxu0 %v5624
    %7951 = vmatpush1.bf16.msra.mxu0 %v5623
    %7952 = vmatprep.subr.bf16.mxu0 %v5626
    %7953 = vmatpush1.bf16.msra.mxu0 %v5625
    %7954 = vmatprep.subr.bf16.mxu0 %v5628
    %7955 = vmatpush1.bf16.msra.mxu0 %v5627
    %7956 = vmatprep.subr.bf16.mxu0 %v5630
    %7957 = vmatpush1.bf16.msra.mxu0 %v5629
    %7958 = vmatprep.subr.bf16.mxu0 %v5632
    %7959 = vmatpush1.bf16.msra.mxu0 %v5631
    %7960 = vmatprep.subr.bf16.mxu0 %v5634
    %7961 = vmatpush1.bf16.msra.mxu0 %v5633
    %7962 = vmatprep.mubr.bf16.mxu0 %v502
    %7963 = vmatmul.mubr.bf16.gmra.mrb[0].mxu0 %v501
    %v7964 = vpop.f32.mrb[0].mxu0
    %v7965 = vadd.f32 %v7924, %v7964
    %v7966 = vpop.f32.mrb[0].mxu0
    %v7967 = vadd.f32 %v7926, %v7966
    %v7968 = vpop.f32.mrb[0].mxu0
    %v7969 = vpop.f32.mrb[0].mxu0
    %7970 = vdwg.mxu0
    %v7971 = vmax.f32 %v7965, 0.0
    %v7972 = vmax.f32 %v7967, 0.0
    %v7973 = vld [vmem:[#allocation8] sm:$0x3]
    %v7975 = vlaneseq
    %v7976 = vshrl.u32 %v7975, 7
    %v7977 = vsub.s32 0, %v7976
    %v7978 = vrot.slane %v7973, %v7977
    %v7979 = vlaneseq
    %v7980 = vshrl.u32 %v7979, 7
    %v7981 = vsub.s32 1, %v7980
    %v7982 = vrot.slane %v7973, %v7981
    %v7985 = vmul.f32 %v7971, %v7978
    %v7986 = vmul.f32 %v7972, %v7982
    %vm7987 = vcmask 1041408
    %v7988 = vsel %vm7987, %v7985, 0.0
    %v7989 = vsel %vm7987, %v7986, 0.0
    %v7990 = vadd.f32 %v7988, %v7989
    %7991 = vadd.xlane.f32.xlu0 %v7990
    %v7992 = vpop.xlane.xlu0 %7991
    %v7993 = vld [vmem:[#allocation2] sm:$0x1]
    %v7995 = vlaneseq
    %v7996 = vshrl.u32 %v7995, 7
    %v7997 = vsub.s32 0, %v7996
    %v7998 = vrot.slane %v7993, %v7997
    %v8000 = vadd.f32 %v7992, %v7998
    %v8001 = vsub.f32 0.0, %v8000
    %v8002 = vmul.f32 %v8001, 1.442695
    %v8003 = vpow.pop %v8002
    %v8004 = vadd.f32 %v8003, 1.0
    %v8005 = vrcp.pop %v8004
    %v8006 = vmul.f32 1.0, %v8005
    %vm8007 = vcmask 1024
    %8008 = vst.msk [vmem:[%s5] sm:$0x3] %vm8007, %v8006
    // Predicated region
    $region38: #{tpu_custom_call.1} parent=1 // pred_check
      _
    $region39: #{tpu_custom_call.1} parent=1 // pred_check_branch
      %8010 = sbr.rel (0) target = $region41
    $region40: #{tpu_custom_call.1} parent=1 // pred_region
      _
    $region41: #{tpu_custom_call.1} parent=1 // pred_fallthru
      _
    // Predicated region
    $region42: #{tpu_custom_call.1} parent=1 // pred_check
      _
    $region43: #{tpu_custom_call.1} parent=1 // pred_check_branch
      %8012 = sbr.rel (0) target = $region45
    $region44: #{tpu_custom_call.1} parent=1 // pred_region
      _
    $region45: #{tpu_custom_call.1} parent=1 // pred_fallthru
      _
    %8013 = vsyncpa [#allocation4], 1
    %8014 = vsyncpa [#allocation6], 1
    %8015 = vsyncpa [#allocation9], 1

</llo_original>
